<compile_context>
chip_gen: v7x
topology: tpu7x:2x2x1
jax: 0.10.0
libtpu: 0.0.40
codegen_flags: <defaults>
</compile_context>

<pallas_src>
import functools

import numpy as np
import jax
import jax.numpy as jnp
from jax.experimental import pallas as pl
from jax.experimental.pallas import tpu as pltpu


_CHANNELS = (3, 8, 16, 32, 64)                 # backbone channel progression
_NUM_BOXES, _BOX_DIM, _NUM_CLASSES = 5, 4, 10
_HEAD_RAW = _NUM_BOXES * _BOX_DIM + _NUM_BOXES * _NUM_CLASSES   # 20 + 50 = 70
_HEAD_PAD = 128                                # lane-dense padded head width


def _layer_dims(height, width):
    """[(hin, win, cin, cout, ho, wo)] for the 4 stride-2 conv layers."""
    dims = []
    h, w = height, width
    for i in range(4):
        ho, wo = h // 2, w // 2
        dims.append((h, w, _CHANNELS[i], _CHANNELS[i + 1], ho, wo))
        h, w = ho, wo
    return dims


def _pick_frames_per_step(bsl, target=16):
    """Largest divisor of bsl <= target; keep grid length >= 2 when possible."""
    f = 1
    for d in range(1, min(bsl, target) + 1):
        if bsl % d == 0:
            f = d
    if f == bsl and bsl > 1:
        for d in range(min(bsl // 2, target), 0, -1):
            if bsl % d == 0:
                return d
    return f


# ----------------------------------------------------------------------------
# Host-side weight folding (done once at init, not per forward)
# ----------------------------------------------------------------------------
def _banded_conv_matrix(w, win, wo):
    """Fold a 3x3 stride-2 pad-1 conv into 3 banded matrices.

    w: (3, 3, cin, cout).  Returns (3, win*cin, wo*cout) float32 such that
      out_row[o] = relu(sum_dy in_row[2*o + dy - 1] @ M[dy] + bias_row)
    with in_row[-1] = 0 (top pad).  Left/right spatial padding is encoded by
    the band structure (out-of-range taps are simply omitted).
    """
    cin, cout = int(w.shape[2]), int(w.shape[3])
    m = np.zeros((3, win * cin, wo * cout), np.float32)
    for dy in range(3):
        for ow in range(wo):
            for dx in range(3):
                src = 2 * ow + dx - 1                      # pad = 1
                if 0 <= src < win:
                    m[dy, src * cin:(src + 1) * cin,
                      ow * cout:(ow + 1) * cout] = w[dy, dx]
    return m


def _pooled_head_matrices(w_head, dims):
    """Fold global-average-pool + concat + linear heads into per-level GEMMs.

    w_head: (112, 70) = [bbox_w | cls_w].  Returns (3, 4*W, 128) float32 with
      head_row = sum_level rowsum(level_activation) @ M[level] + bias_row.
    """
    mats, row_off = [], 0
    for li in (1, 2, 3):                                   # p3, p4, p5
        _, _, _, cout, ho, wo = dims[li]
        n = wo * cout
        block = w_head[row_off:row_off + cout, :] / float(ho * wo)
        m = np.zeros((n, _HEAD_PAD), np.float32)
        for ow in range(wo):
            m[ow * cout:(ow + 1) * cout, :w_head.shape[1]] = block
        mats.append(m)
        row_off += cout
    return np.stack(mats, axis=0)


def init_params(height=32, width=32, seed=42):
    assert height % 16 == 0 and width % 16 == 0, "4x stride-2 convs need /16"
    dims = _layer_dims(height, width)
    rng = np.random.default_rng(seed)

    raw = {}                                   # plain weights for the reference
    wmats, brows = [], []
    for i, (hin, win, cin, cout, ho, wo) in enumerate(dims):
        w = rng.standard_normal((3, 3, cin, cout)).astype(np.float32)
        w *= np.sqrt(2.0 / (9.0 * cin))
        b = (0.05 * rng.standard_normal((cout,))).astype(np.float32)
        raw[f"conv{i}"] = jnp.asarray(w)
        raw[f"bias{i}"] = jnp.asarray(b)
        if i == 0:
            # Pad input channels 3 -> 4 so the layer-0 contraction is 4*W lanes.
            w = np.concatenate([w, np.zeros((3, 3, 1, cout), np.float32)], axis=2)
        wmats.append(_banded_conv_matrix(w, win, wo))          # (3, 4W, 4W)
        brows.append(np.tile(b, wo))                           # (4W,)

    params = {
        "wconv": jnp.asarray(np.concatenate(wmats, axis=0), dtype=jnp.bfloat16),
        "bconv": jnp.asarray(np.stack(brows, axis=0), dtype=jnp.float32),
    }

    feat = _CHANNELS[2] + _CHANNELS[3] + _CHANNELS[4]          # 112
    w_head = (rng.standard_normal((feat, _HEAD_RAW)) / np.sqrt(feat)).astype(np.float32)
    b_head = (0.05 * rng.standard_normal((_HEAD_RAW,))).astype(np.float32)
    raw["w_head"] = jnp.asarray(w_head)
    raw["b_head"] = jnp.asarray(b_head)

    params["whead"] = jnp.asarray(_pooled_head_matrices(w_head, dims),
                                  dtype=jnp.bfloat16)          # (3, 4W, 128)
    bh = np.zeros((1, _HEAD_PAD), np.float32)
    bh[0, :_HEAD_RAW] = b_head
    params["bhead"] = jnp.asarray(bh)
    return params, raw


# ----------------------------------------------------------------------------
# Fused per-step kernel: F frames -> 4 convs + pyramid pooling + bbox/cls heads
# ----------------------------------------------------------------------------
def _fused_forward_kernel(xe_ref, xo_ref, wconv_ref, bconv_ref, whead_ref,
                          bhead_ref, o_ref, ev1, od1, ev2, od2, ev3, od3,
                          *, hos, n, F):
    f32, bf16 = jnp.float32, jnp.bfloat16
    stage = ((ev1, od1), (ev2, od2), (ev3, od3), (None, None))

    # Input and staging buffers hold rows frame-minor: row index = q*F + f.
    # even buf row q*F+f = layer input row 2q; odd buf row k*F+f = input row
    # 2k-1 (k=0 is the zero top-pad row block).
    cur_even, cur_odd = xe_ref, xo_ref
    head = bhead_ref[...]                                      # (1, 128) f32

    for i, ho in enumerate(hos):
        m = ho * F
        # Three banded GEMMs; every operand is a contiguous, aligned bf16 slab.
        acc = jnp.dot(cur_odd[pl.ds(0, m), :], wconv_ref[3 * i + 0],
                      preferred_element_type=f32)              # dy=0: rows 2o-1
        acc += jnp.dot(cur_even[...], wconv_ref[3 * i + 1],
                       preferred_element_type=f32)             # dy=1: rows 2o
        acc += jnp.dot(cur_odd[pl.ds(F, m), :], wconv_ref[3 * i + 2],
                       preferred_element_type=f32)             # dy=2: rows 2o+1
        act = jnp.maximum(acc + bconv_ref[i:i + 1, :], 0.0)    # (ho*F, n) f32

        if i >= 1:
            # GAP folded into whead: per-frame row-sum, then one (F,128) GEMM,
            # accumulated immediately (no pyramid activation kept alive).
            rs = act[0:F]
            for q in range(1, ho):
                rs = rs + act[q * F:(q + 1) * F]
            head = head + jnp.dot(rs.astype(bf16), whead_ref[i - 1],
                                  preferred_element_type=f32)

        nxt_even, nxt_odd = stage[i]
        if nxt_even is not None:
            # Deinterleave at store time (bf16): even output rows -> even buf,
            # odd output rows -> odd buf shifted by one row block; row block 0
            # of the odd buf is the zero top pad for the next layer.
            act_bf = act.astype(bf16)
            nxt_odd[0:F, :] = jnp.zeros((F, n), bf16)
            for q in range(ho // 2):
                nxt_even[q * F:(q + 1) * F, :] = \
                    act_bf[(2 * q) * F:(2 * q + 1) * F]
                nxt_odd[(q + 1) * F:(q + 2) * F, :] = \
                    act_bf[(2 * q + 1) * F:(2 * q + 2) * F]
            cur_even, cur_odd = nxt_even, nxt_odd

    o_ref[...] = head.astype(o_ref.dtype)                      # (F, 128)


# ----------------------------------------------------------------------------
# Forward wrapper (mirrors Model.forward)
# ----------------------------------------------------------------------------
def model_forward(params, x):
    B, SL, C, H, W = x.shape
    assert C == 3
    bsl = B * SL
    F = _pick_frames_per_step(bsl)
    nsteps = bsl // F
    dims = _layer_dims(H, W)
    hos = tuple(d[4] for d in dims)                            # (H/2,H/4,H/8,H/16)
    n = 4 * W                                                  # K = N of every GEMM
    assert params["wconv"].shape[-1] == n

    # ---- wrapper-side layout plumbing (single XLA pass over the input) -----
    # NCHW -> NHWC, pad channels 3->4, flatten rows as (W,4)=4W lanes, cast to
    # bf16, and reorder rows frame-minor with an even/odd row split so every
    # conv tap in the kernel reads a contiguous slab (no in-kernel relayout).
    xr = x.reshape(bsl, C, H, W).transpose(0, 2, 3, 1)         # (bsl, H, W, 3)
    xr = jnp.pad(xr, ((0, 0), (0, 0), (0, 0), (0, 4 - C)))     # (bsl, H, W, 4)
    xr = xr.reshape(nsteps, F, H, n).astype(jnp.bfloat16)
    x_even = (xr[:, :, 0::2, :].transpose(0, 2, 1, 3)
              .reshape(nsteps, (H // 2) * F, n))
    x_odd = (xr[:, :, 1::2, :].transpose(0, 2, 1, 3)
             .reshape(nsteps, (H // 2) * F, n))
    x_odd = jnp.concatenate(                                   # top-pad row block
        [jnp.zeros((nsteps, F, n), jnp.bfloat16), x_odd], axis=1)

    kernel = functools.partial(_fused_forward_kernel, hos=hos, n=n, F=F)
    scratch = []
    for i in (1, 2, 3):                                        # staging for layers 2..4
        scratch.append(pltpu.VMEM((hos[i] * F, n), jnp.bfloat16))        # even
        scratch.append(pltpu.VMEM(((hos[i] + 1) * F, n), jnp.bfloat16))  # pad+odd

    grid_spec = pltpu.PrefetchScalarGridSpec(
        num_scalar_prefetch=0,
        grid=(nsteps,),
        in_specs=[
            pl.BlockSpec((None, (H // 2) * F, n), lambda b: (b, 0, 0)),      # even rows
            pl.BlockSpec((None, (H // 2 + 1) * F, n), lambda b: (b, 0, 0)),  # pad+odd rows
            pl.BlockSpec(params["wconv"].shape, lambda b: (0, 0, 0)),
            pl.BlockSpec(params["bconv"].shape, lambda b: (0, 0)),
            pl.BlockSpec(params["whead"].shape, lambda b: (0, 0, 0)),
            pl.BlockSpec(params["bhead"].shape, lambda b: (0, 0)),
        ],
        out_specs=pl.BlockSpec((None, F, _HEAD_PAD), lambda b: (b, 0, 0)),
        scratch_shapes=scratch,
    )
    out = pl.pallas_call(
        kernel,
        out_shape=jax.ShapeDtypeStruct((nsteps, F, _HEAD_PAD), jnp.float32),
        grid_spec=grid_spec,
        compiler_params=pltpu.CompilerParams(
            dimension_semantics=("parallel",)),
    )(x_even, x_odd, params["wconv"], params["bconv"],
      params["whead"], params["bhead"])

    out = out.reshape(bsl, _HEAD_PAD)
    nb, bd, nc = _NUM_BOXES, _BOX_DIM, _NUM_CLASSES
    x_bbox = out[:, :nb * bd].reshape(bsl, nb, bd)
    x_cls = out[:, nb * bd:nb * (bd + nc)].reshape(bsl, nb, nc)
    y = jnp.concatenate([x_bbox, x_cls], axis=-1)              # (bsl, 5, 14)
    return y.reshape(B, SL, nb, bd + nc)


# ----------------------------------------------------------------------------
# Pure-JAX reference (plain convs, f32) for a tolerance check
# ----------------------------------------------------------------------------
def _reference_forward(raw, x):
    B, SL, C, H, W = x.shape
    h = x.reshape(B * SL, C, H, W).transpose(0, 2, 3, 1)       # NHWC f32
    feats = []
    for i in range(4):
        h = jax.lax.conv_general_dilated(
            h, raw[f"conv{i}"], window_strides=(2, 2),
            padding=((1, 1), (1, 1)),
            dimension_numbers=("NHWC", "HWIO", "NHWC"),
            precision=jax.lax.Precision.HIGHEST)
        h = jnp.maximum(h + raw[f"bias{i}"], 0.0)
        feats.append(h)
    pooled = jnp.concatenate([f.mean(axis=(1, 2)) for f in feats[1:]], axis=-1)
    head = pooled @ raw["w_head"] + raw["b_head"]              # (bsl, 70)
    nb, bd, nc = _NUM_BOXES, _BOX_DIM, _NUM_CLASSES
    xb = head[:, :nb * bd].reshape(-1, nb, bd)
    xc = head[:, nb * bd:].reshape(-1, nb, nc)
    return jnp.concatenate([xb, xc], axis=-1).reshape(B, SL, nb, bd + nc)


if __name__ == "__main__":
    B, SL, C, H, W = 2, 16, 3, 32, 32       # bsl=32 -> F=16, grid=2
    x = jax.random.normal(jax.random.PRNGKey(0), (B, SL, C, H, W), jnp.float32)
    params, raw = init_params(H, W)

    fwd = jax.jit(model_forward)
    out = fwd(params, x)
    jax.block_until_ready(out)

    assert out.shape == (B, SL, _NUM_BOXES, _BOX_DIM + _NUM_CLASSES), out.shape
    assert out.dtype == jnp.float32
    assert bool(jnp.all(jnp.isfinite(out)))

    # bf16 MXU vs f32 reference: expect ~1e-2 error; loose tolerance check.
    ref = _reference_forward(raw, x)
    np.testing.assert_allclose(np.asarray(out), np.asarray(ref),
                               rtol=0.1, atol=0.1)
    print("KERNEL_OK")
</pallas_src>

<mosaic_0001>
module attributes {stable_mosaic.version = 11 : i64} {
  func.func @_fused_forward_kernel(%arg0: i32, %arg1: memref<1x256x128xbf16, #tpu.memory_space<vmem>>, %arg2: memref<1x272x128xbf16, #tpu.memory_space<vmem>>, %arg3: memref<12x128x128xbf16, #tpu.memory_space<vmem>>, %arg4: memref<4x128xf32, #tpu.memory_space<vmem>>, %arg5: memref<3x128x128xbf16, #tpu.memory_space<vmem>>, %arg6: memref<1x128xf32, #tpu.memory_space<vmem>>, %arg7: memref<1x16x128xf32, #tpu.memory_space<vmem>>, %arg8: memref<128x128xbf16, #tpu.memory_space<vmem>>, %arg9: memref<144x128xbf16, #tpu.memory_space<vmem>>, %arg10: memref<64x128xbf16, #tpu.memory_space<vmem>>, %arg11: memref<80x128xbf16, #tpu.memory_space<vmem>>, %arg12: memref<32x128xbf16, #tpu.memory_space<vmem>>, %arg13: memref<48x128xbf16, #tpu.memory_space<vmem>>) attributes {dimension_semantics = [#tpu.dimension_semantics<parallel>], iteration_bounds = array<i64: 2>, scalar_prefetch = 0 : i64, scratch_operands = 6 : i64, tpu.core_type = #tpu.core_type<tc>, window_params = [{transform_indices = @transform_0, window_bounds = array<i64: 1, 256, 128>}, {transform_indices = @transform_1, window_bounds = array<i64: 1, 272, 128>}, {pipeline_mode = #tpu.pipeline_mode<synchronous>, transform_indices = @transform_2, window_bounds = array<i64: 12, 128, 128>}, {pipeline_mode = #tpu.pipeline_mode<synchronous>, transform_indices = @transform_3, window_bounds = array<i64: 4, 128>}, {pipeline_mode = #tpu.pipeline_mode<synchronous>, transform_indices = @transform_4, window_bounds = array<i64: 3, 128, 128>}, {pipeline_mode = #tpu.pipeline_mode<synchronous>, transform_indices = @transform_5, window_bounds = array<i64: 1, 128>}, {transform_indices = @transform_6, window_bounds = array<i64: 1, 16, 128>}]} {
    %c0 = arith.constant 0 : index
    %c0_0 = arith.constant 0 : index
    %0 = vector.load %arg6[%c0, %c0_0] : memref<1x128xf32, #tpu.memory_space<vmem>>, vector<1x128xf32>
    %c0_1 = arith.constant 0 : index
    %c0_2 = arith.constant 0 : index
    %c0_3 = arith.constant 0 : index
    %1 = vector.load %arg2[%c0_1, %c0_2, %c0_3] : memref<1x272x128xbf16, #tpu.memory_space<vmem>>, vector<1x256x128xbf16>
    %2 = vector.shape_cast %1 : vector<1x256x128xbf16> to vector<256x128xbf16>
    %c0_4 = arith.constant 0 : index
    %c0_5 = arith.constant 0 : index
    %c0_6 = arith.constant 0 : index
    %3 = vector.load %arg3[%c0_4, %c0_5, %c0_6] : memref<12x128x128xbf16, #tpu.memory_space<vmem>>, vector<1x128x128xbf16>
    %4 = vector.shape_cast %3 : vector<1x128x128xbf16> to vector<128x128xbf16>
    %cst = arith.constant dense<0.000000e+00> : vector<256x128xf32>
    %5 = tpu.matmul %2, %4, %cst {dimension_numbers = #tpu.dot_dimension_numbers<[1], [0], [0], [1], [0, 0, 1, 1], [], []>} : vector<256x128xbf16>, vector<128x128xbf16>, vector<256x128xf32> -> vector<256x128xf32>
    %c0_7 = arith.constant 0 : index
    %c0_8 = arith.constant 0 : index
    %c0_9 = arith.constant 0 : index
    %6 = vector.load %arg1[%c0_7, %c0_8, %c0_9] : memref<1x256x128xbf16, #tpu.memory_space<vmem>>, vector<1x256x128xbf16>
    %7 = vector.shape_cast %6 : vector<1x256x128xbf16> to vector<256x128xbf16>
    %c1 = arith.constant 1 : index
    %c0_10 = arith.constant 0 : index
    %c0_11 = arith.constant 0 : index
    %8 = vector.load %arg3[%c1, %c0_10, %c0_11] : memref<12x128x128xbf16, #tpu.memory_space<vmem>>, vector<1x128x128xbf16>
    %9 = vector.shape_cast %8 : vector<1x128x128xbf16> to vector<128x128xbf16>
    %cst_12 = arith.constant dense<0.000000e+00> : vector<256x128xf32>
    %10 = tpu.matmul %7, %9, %cst_12 {dimension_numbers = #tpu.dot_dimension_numbers<[1], [0], [0], [1], [0, 0, 1, 1], [], []>} : vector<256x128xbf16>, vector<128x128xbf16>, vector<256x128xf32> -> vector<256x128xf32>
    %11 = arith.addf %5, %10 : vector<256x128xf32>
    %c0_13 = arith.constant 0 : index
    %c16 = arith.constant 16 : index
    %c0_14 = arith.constant 0 : index
    %12 = vector.load %arg2[%c0_13, %c16, %c0_14] : memref<1x272x128xbf16, #tpu.memory_space<vmem>>, vector<1x256x128xbf16>
    %13 = vector.shape_cast %12 : vector<1x256x128xbf16> to vector<256x128xbf16>
    %c2 = arith.constant 2 : index
    %c0_15 = arith.constant 0 : index
    %c0_16 = arith.constant 0 : index
    %14 = vector.load %arg3[%c2, %c0_15, %c0_16] : memref<12x128x128xbf16, #tpu.memory_space<vmem>>, vector<1x128x128xbf16>
    %15 = vector.shape_cast %14 : vector<1x128x128xbf16> to vector<128x128xbf16>
    %cst_17 = arith.constant dense<0.000000e+00> : vector<256x128xf32>
    %16 = tpu.matmul %13, %15, %cst_17 {dimension_numbers = #tpu.dot_dimension_numbers<[1], [0], [0], [1], [0, 0, 1, 1], [], []>} : vector<256x128xbf16>, vector<128x128xbf16>, vector<256x128xf32> -> vector<256x128xf32>
    %17 = arith.addf %11, %16 : vector<256x128xf32>
    %c0_18 = arith.constant 0 : index
    %c0_19 = arith.constant 0 : index
    %18 = vector.load %arg4[%c0_18, %c0_19] : memref<4x128xf32, #tpu.memory_space<vmem>>, vector<1x128xf32>
    %19 = vector.broadcast %18 : vector<1x128xf32> to vector<256x128xf32>
    %20 = arith.addf %17, %19 : vector<256x128xf32>
    %cst_20 = arith.constant 0.000000e+00 : f32
    %21 = vector.broadcast %cst_20 : f32 to vector<256x128xf32>
    %22 = arith.maximumf %20, %21 : vector<256x128xf32>
    %23 = arith.truncf %22 : vector<256x128xf32> to vector<256x128xbf16>
    %cst_21 = arith.constant 0.000000e+00 : bf16
    %24 = vector.broadcast %cst_21 : bf16 to vector<16x128xbf16>
    %c0_22 = arith.constant 0 : index
    %c0_23 = arith.constant 0 : index
    %25 = vector.load %arg9[%c0_22, %c0_23] : memref<144x128xbf16, #tpu.memory_space<vmem>>, vector<16x128xbf16>
    tpu.vector_store %arg9[%c0_22, %c0_23], %24 {strides = array<i32>} : memref<144x128xbf16, #tpu.memory_space<vmem>>, vector<16x128xbf16>,
    %26 = vector.extract_strided_slice %23 {offsets = [0, 0], sizes = [16, 128], strides = [1, 1]} : vector<256x128xbf16> to vector<16x128xbf16>
    %c0_24 = arith.constant 0 : index
    %c0_25 = arith.constant 0 : index
    %27 = vector.load %arg8[%c0_24, %c0_25] : memref<128x128xbf16, #tpu.memory_space<vmem>>, vector<16x128xbf16>
    tpu.vector_store %arg8[%c0_24, %c0_25], %26 {strides = array<i32>} : memref<128x128xbf16, #tpu.memory_space<vmem>>, vector<16x128xbf16>,
    %28 = vector.extract_strided_slice %23 {offsets = [16, 0], sizes = [16, 128], strides = [1, 1]} : vector<256x128xbf16> to vector<16x128xbf16>
    %c16_26 = arith.constant 16 : index
    %c0_27 = arith.constant 0 : index
    %29 = vector.load %arg9[%c16_26, %c0_27] : memref<144x128xbf16, #tpu.memory_space<vmem>>, vector<16x128xbf16>
    tpu.vector_store %arg9[%c16_26, %c0_27], %28 {strides = array<i32>} : memref<144x128xbf16, #tpu.memory_space<vmem>>, vector<16x128xbf16>,
    %30 = vector.extract_strided_slice %23 {offsets = [32, 0], sizes = [16, 128], strides = [1, 1]} : vector<256x128xbf16> to vector<16x128xbf16>
    %c16_28 = arith.constant 16 : index
    %c0_29 = arith.constant 0 : index
    %31 = vector.load %arg8[%c16_28, %c0_29] : memref<128x128xbf16, #tpu.memory_space<vmem>>, vector<16x128xbf16>
    tpu.vector_store %arg8[%c16_28, %c0_29], %30 {strides = array<i32>} : memref<128x128xbf16, #tpu.memory_space<vmem>>, vector<16x128xbf16>,
    %32 = vector.extract_strided_slice %23 {offsets = [48, 0], sizes = [16, 128], strides = [1, 1]} : vector<256x128xbf16> to vector<16x128xbf16>
    %c32 = arith.constant 32 : index
    %c0_30 = arith.constant 0 : index
    %33 = vector.load %arg9[%c32, %c0_30] : memref<144x128xbf16, #tpu.memory_space<vmem>>, vector<16x128xbf16>
    tpu.vector_store %arg9[%c32, %c0_30], %32 {strides = array<i32>} : memref<144x128xbf16, #tpu.memory_space<vmem>>, vector<16x128xbf16>,
    %34 = vector.extract_strided_slice %23 {offsets = [64, 0], sizes = [16, 128], strides = [1, 1]} : vector<256x128xbf16> to vector<16x128xbf16>
    %c32_31 = arith.constant 32 : index
    %c0_32 = arith.constant 0 : index
    %35 = vector.load %arg8[%c32_31, %c0_32] : memref<128x128xbf16, #tpu.memory_space<vmem>>, vector<16x128xbf16>
    tpu.vector_store %arg8[%c32_31, %c0_32], %34 {strides = array<i32>} : memref<128x128xbf16, #tpu.memory_space<vmem>>, vector<16x128xbf16>,
    %36 = vector.extract_strided_slice %23 {offsets = [80, 0], sizes = [16, 128], strides = [1, 1]} : vector<256x128xbf16> to vector<16x128xbf16>
    %c48 = arith.constant 48 : index
    %c0_33 = arith.constant 0 : index
    %37 = vector.load %arg9[%c48, %c0_33] : memref<144x128xbf16, #tpu.memory_space<vmem>>, vector<16x128xbf16>
    tpu.vector_store %arg9[%c48, %c0_33], %36 {strides = array<i32>} : memref<144x128xbf16, #tpu.memory_space<vmem>>, vector<16x128xbf16>,
    %38 = vector.extract_strided_slice %23 {offsets = [96, 0], sizes = [16, 128], strides = [1, 1]} : vector<256x128xbf16> to vector<16x128xbf16>
    %c48_34 = arith.constant 48 : index
    %c0_35 = arith.constant 0 : index
    %39 = vector.load %arg8[%c48_34, %c0_35] : memref<128x128xbf16, #tpu.memory_space<vmem>>, vector<16x128xbf16>
    tpu.vector_store %arg8[%c48_34, %c0_35], %38 {strides = array<i32>} : memref<128x128xbf16, #tpu.memory_space<vmem>>, vector<16x128xbf16>,
    %40 = vector.extract_strided_slice %23 {offsets = [112, 0], sizes = [16, 128], strides = [1, 1]} : vector<256x128xbf16> to vector<16x128xbf16>
    %c64 = arith.constant 64 : index
    %c0_36 = arith.constant 0 : index
    %41 = vector.load %arg9[%c64, %c0_36] : memref<144x128xbf16, #tpu.memory_space<vmem>>, vector<16x128xbf16>
    tpu.vector_store %arg9[%c64, %c0_36], %40 {strides = array<i32>} : memref<144x128xbf16, #tpu.memory_space<vmem>>, vector<16x128xbf16>,
    %42 = vector.extract_strided_slice %23 {offsets = [128, 0], sizes = [16, 128], strides = [1, 1]} : vector<256x128xbf16> to vector<16x128xbf16>
    %c64_37 = arith.constant 64 : index
    %c0_38 = arith.constant 0 : index
    %43 = vector.load %arg8[%c64_37, %c0_38] : memref<128x128xbf16, #tpu.memory_space<vmem>>, vector<16x128xbf16>
    tpu.vector_store %arg8[%c64_37, %c0_38], %42 {strides = array<i32>} : memref<128x128xbf16, #tpu.memory_space<vmem>>, vector<16x128xbf16>,
    %44 = vector.extract_strided_slice %23 {offsets = [144, 0], sizes = [16, 128], strides = [1, 1]} : vector<256x128xbf16> to vector<16x128xbf16>
    %c80 = arith.constant 80 : index
    %c0_39 = arith.constant 0 : index
    %45 = vector.load %arg9[%c80, %c0_39] : memref<144x128xbf16, #tpu.memory_space<vmem>>, vector<16x128xbf16>
    tpu.vector_store %arg9[%c80, %c0_39], %44 {strides = array<i32>} : memref<144x128xbf16, #tpu.memory_space<vmem>>, vector<16x128xbf16>,
    %46 = vector.extract_strided_slice %23 {offsets = [160, 0], sizes = [16, 128], strides = [1, 1]} : vector<256x128xbf16> to vector<16x128xbf16>
    %c80_40 = arith.constant 80 : index
    %c0_41 = arith.constant 0 : index
    %47 = vector.load %arg8[%c80_40, %c0_41] : memref<128x128xbf16, #tpu.memory_space<vmem>>, vector<16x128xbf16>
    tpu.vector_store %arg8[%c80_40, %c0_41], %46 {strides = array<i32>} : memref<128x128xbf16, #tpu.memory_space<vmem>>, vector<16x128xbf16>,
    %48 = vector.extract_strided_slice %23 {offsets = [176, 0], sizes = [16, 128], strides = [1, 1]} : vector<256x128xbf16> to vector<16x128xbf16>
    %c96 = arith.constant 96 : index
    %c0_42 = arith.constant 0 : index
    %49 = vector.load %arg9[%c96, %c0_42] : memref<144x128xbf16, #tpu.memory_space<vmem>>, vector<16x128xbf16>
    tpu.vector_store %arg9[%c96, %c0_42], %48 {strides = array<i32>} : memref<144x128xbf16, #tpu.memory_space<vmem>>, vector<16x128xbf16>,
    %50 = vector.extract_strided_slice %23 {offsets = [192, 0], sizes = [16, 128], strides = [1, 1]} : vector<256x128xbf16> to vector<16x128xbf16>
    %c96_43 = arith.constant 96 : index
    %c0_44 = arith.constant 0 : index
    %51 = vector.load %arg8[%c96_43, %c0_44] : memref<128x128xbf16, #tpu.memory_space<vmem>>, vector<16x128xbf16>
    tpu.vector_store %arg8[%c96_43, %c0_44], %50 {strides = array<i32>} : memref<128x128xbf16, #tpu.memory_space<vmem>>, vector<16x128xbf16>,
    %52 = vector.extract_strided_slice %23 {offsets = [208, 0], sizes = [16, 128], strides = [1, 1]} : vector<256x128xbf16> to vector<16x128xbf16>
    %c112 = arith.constant 112 : index
    %c0_45 = arith.constant 0 : index
    %53 = vector.load %arg9[%c112, %c0_45] : memref<144x128xbf16, #tpu.memory_space<vmem>>, vector<16x128xbf16>
    tpu.vector_store %arg9[%c112, %c0_45], %52 {strides = array<i32>} : memref<144x128xbf16, #tpu.memory_space<vmem>>, vector<16x128xbf16>,
    %54 = vector.extract_strided_slice %23 {offsets = [224, 0], sizes = [16, 128], strides = [1, 1]} : vector<256x128xbf16> to vector<16x128xbf16>
    %c112_46 = arith.constant 112 : index
    %c0_47 = arith.constant 0 : index
    %55 = vector.load %arg8[%c112_46, %c0_47] : memref<128x128xbf16, #tpu.memory_space<vmem>>, vector<16x128xbf16>
    tpu.vector_store %arg8[%c112_46, %c0_47], %54 {strides = array<i32>} : memref<128x128xbf16, #tpu.memory_space<vmem>>, vector<16x128xbf16>,
    %56 = vector.extract_strided_slice %23 {offsets = [240, 0], sizes = [16, 128], strides = [1, 1]} : vector<256x128xbf16> to vector<16x128xbf16>
    %c128 = arith.constant 128 : index
    %c0_48 = arith.constant 0 : index
    %57 = vector.load %arg9[%c128, %c0_48] : memref<144x128xbf16, #tpu.memory_space<vmem>>, vector<16x128xbf16>
    tpu.vector_store %arg9[%c128, %c0_48], %56 {strides = array<i32>} : memref<144x128xbf16, #tpu.memory_space<vmem>>, vector<16x128xbf16>,
    %c0_49 = arith.constant 0 : index
    %c0_50 = arith.constant 0 : index
    %58 = vector.load %arg9[%c0_49, %c0_50] : memref<144x128xbf16, #tpu.memory_space<vmem>>, vector<128x128xbf16>
    %c3 = arith.constant 3 : index
    %c0_51 = arith.constant 0 : index
    %c0_52 = arith.constant 0 : index
    %59 = vector.load %arg3[%c3, %c0_51, %c0_52] : memref<12x128x128xbf16, #tpu.memory_space<vmem>>, vector<1x128x128xbf16>
    %60 = vector.shape_cast %59 : vector<1x128x128xbf16> to vector<128x128xbf16>
    %cst_53 = arith.constant dense<0.000000e+00> : vector<128x128xf32>
    %61 = tpu.matmul %58, %60, %cst_53 {dimension_numbers = #tpu.dot_dimension_numbers<[1], [0], [0], [1], [0, 0, 1, 1], [], []>} : vector<128x128xbf16>, vector<128x128xbf16>, vector<128x128xf32> -> vector<128x128xf32>
    %c0_54 = arith.constant 0 : index
    %c0_55 = arith.constant 0 : index
    %62 = vector.load %arg8[%c0_54, %c0_55] : memref<128x128xbf16, #tpu.memory_space<vmem>>, vector<128x128xbf16>
    %c4 = arith.constant 4 : index
    %c0_56 = arith.constant 0 : index
    %c0_57 = arith.constant 0 : index
    %63 = vector.load %arg3[%c4, %c0_56, %c0_57] : memref<12x128x128xbf16, #tpu.memory_space<vmem>>, vector<1x128x128xbf16>
    %64 = vector.shape_cast %63 : vector<1x128x128xbf16> to vector<128x128xbf16>
    %cst_58 = arith.constant dense<0.000000e+00> : vector<128x128xf32>
    %65 = tpu.matmul %62, %64, %cst_58 {dimension_numbers = #tpu.dot_dimension_numbers<[1], [0], [0], [1], [0, 0, 1, 1], [], []>} : vector<128x128xbf16>, vector<128x128xbf16>, vector<128x128xf32> -> vector<128x128xf32>
    %66 = arith.addf %61, %65 : vector<128x128xf32>
    %c16_59 = arith.constant 16 : index
    %c0_60 = arith.constant 0 : index
    %67 = vector.load %arg9[%c16_59, %c0_60] : memref<144x128xbf16, #tpu.memory_space<vmem>>, vector<128x128xbf16>
    %c5 = arith.constant 5 : index
    %c0_61 = arith.constant 0 : index
    %c0_62 = arith.constant 0 : index
    %68 = vector.load %arg3[%c5, %c0_61, %c0_62] : memref<12x128x128xbf16, #tpu.memory_space<vmem>>, vector<1x128x128xbf16>
    %69 = vector.shape_cast %68 : vector<1x128x128xbf16> to vector<128x128xbf16>
    %cst_63 = arith.constant dense<0.000000e+00> : vector<128x128xf32>
    %70 = tpu.matmul %67, %69, %cst_63 {dimension_numbers = #tpu.dot_dimension_numbers<[1], [0], [0], [1], [0, 0, 1, 1], [], []>} : vector<128x128xbf16>, vector<128x128xbf16>, vector<128x128xf32> -> vector<128x128xf32>
    %71 = arith.addf %66, %70 : vector<128x128xf32>
    %c1_64 = arith.constant 1 : index
    %c0_65 = arith.constant 0 : index
    %72 = vector.load %arg4[%c1_64, %c0_65] : memref<4x128xf32, #tpu.memory_space<vmem>>, vector<1x128xf32>
    %73 = vector.broadcast %72 : vector<1x128xf32> to vector<128x128xf32>
    %74 = arith.addf %71, %73 : vector<128x128xf32>
    %cst_66 = arith.constant 0.000000e+00 : f32
    %75 = vector.broadcast %cst_66 : f32 to vector<128x128xf32>
    %76 = arith.maximumf %74, %75 : vector<128x128xf32>
    %77 = vector.extract_strided_slice %76 {offsets = [0, 0], sizes = [16, 128], strides = [1, 1]} : vector<128x128xf32> to vector<16x128xf32>
    %78 = vector.extract_strided_slice %76 {offsets = [16, 0], sizes = [16, 128], strides = [1, 1]} : vector<128x128xf32> to vector<16x128xf32>
    %79 = arith.addf %77, %78 : vector<16x128xf32>
    %80 = vector.extract_strided_slice %76 {offsets = [32, 0], sizes = [16, 128], strides = [1, 1]} : vector<128x128xf32> to vector<16x128xf32>
    %81 = arith.addf %79, %80 : vector<16x128xf32>
    %82 = vector.extract_strided_slice %76 {offsets = [48, 0], sizes = [16, 128], strides = [1, 1]} : vector<128x128xf32> to vector<16x128xf32>
    %83 = arith.addf %81, %82 : vector<16x128xf32>
    %84 = vector.extract_strided_slice %76 {offsets = [64, 0], sizes = [16, 128], strides = [1, 1]} : vector<128x128xf32> to vector<16x128xf32>
    %85 = arith.addf %83, %84 : vector<16x128xf32>
    %86 = vector.extract_strided_slice %76 {offsets = [80, 0], sizes = [16, 128], strides = [1, 1]} : vector<128x128xf32> to vector<16x128xf32>
    %87 = arith.addf %85, %86 : vector<16x128xf32>
    %88 = vector.extract_strided_slice %76 {offsets = [96, 0], sizes = [16, 128], strides = [1, 1]} : vector<128x128xf32> to vector<16x128xf32>
    %89 = arith.addf %87, %88 : vector<16x128xf32>
    %90 = vector.extract_strided_slice %76 {offsets = [112, 0], sizes = [16, 128], strides = [1, 1]} : vector<128x128xf32> to vector<16x128xf32>
    %91 = arith.addf %89, %90 : vector<16x128xf32>
    %92 = arith.truncf %91 : vector<16x128xf32> to vector<16x128xbf16>
    %c0_67 = arith.constant 0 : index
    %c0_68 = arith.constant 0 : index
    %c0_69 = arith.constant 0 : index
    %93 = vector.load %arg5[%c0_67, %c0_68, %c0_69] : memref<3x128x128xbf16, #tpu.memory_space<vmem>>, vector<1x128x128xbf16>
    %94 = vector.shape_cast %93 : vector<1x128x128xbf16> to vector<128x128xbf16>
    %cst_70 = arith.constant dense<0.000000e+00> : vector<16x128xf32>
    %95 = tpu.matmul %92, %94, %cst_70 {dimension_numbers = #tpu.dot_dimension_numbers<[1], [0], [0], [1], [0, 0, 1, 1], [], []>} : vector<16x128xbf16>, vector<128x128xbf16>, vector<16x128xf32> -> vector<16x128xf32>
    %96 = vector.broadcast %0 : vector<1x128xf32> to vector<16x128xf32>
    %97 = arith.addf %96, %95 : vector<16x128xf32>
    %98 = arith.truncf %76 : vector<128x128xf32> to vector<128x128xbf16>
    %cst_71 = arith.constant 0.000000e+00 : bf16
    %99 = vector.broadcast %cst_71 : bf16 to vector<16x128xbf16>
    %c0_72 = arith.constant 0 : index
    %c0_73 = arith.constant 0 : index
    %100 = vector.load %arg11[%c0_72, %c0_73] : memref<80x128xbf16, #tpu.memory_space<vmem>>, vector<16x128xbf16>
    tpu.vector_store %arg11[%c0_72, %c0_73], %99 {strides = array<i32>} : memref<80x128xbf16, #tpu.memory_space<vmem>>, vector<16x128xbf16>,
    %101 = vector.extract_strided_slice %98 {offsets = [0, 0], sizes = [16, 128], strides = [1, 1]} : vector<128x128xbf16> to vector<16x128xbf16>
    %c0_74 = arith.constant 0 : index
    %c0_75 = arith.constant 0 : index
    %102 = vector.load %arg10[%c0_74, %c0_75] : memref<64x128xbf16, #tpu.memory_space<vmem>>, vector<16x128xbf16>
    tpu.vector_store %arg10[%c0_74, %c0_75], %101 {strides = array<i32>} : memref<64x128xbf16, #tpu.memory_space<vmem>>, vector<16x128xbf16>,
    %103 = vector.extract_strided_slice %98 {offsets = [16, 0], sizes = [16, 128], strides = [1, 1]} : vector<128x128xbf16> to vector<16x128xbf16>
    %c16_76 = arith.constant 16 : index
    %c0_77 = arith.constant 0 : index
    %104 = vector.load %arg11[%c16_76, %c0_77] : memref<80x128xbf16, #tpu.memory_space<vmem>>, vector<16x128xbf16>
    tpu.vector_store %arg11[%c16_76, %c0_77], %103 {strides = array<i32>} : memref<80x128xbf16, #tpu.memory_space<vmem>>, vector<16x128xbf16>,
    %105 = vector.extract_strided_slice %98 {offsets = [32, 0], sizes = [16, 128], strides = [1, 1]} : vector<128x128xbf16> to vector<16x128xbf16>
    %c16_78 = arith.constant 16 : index
    %c0_79 = arith.constant 0 : index
    %106 = vector.load %arg10[%c16_78, %c0_79] : memref<64x128xbf16, #tpu.memory_space<vmem>>, vector<16x128xbf16>
    tpu.vector_store %arg10[%c16_78, %c0_79], %105 {strides = array<i32>} : memref<64x128xbf16, #tpu.memory_space<vmem>>, vector<16x128xbf16>,
    %107 = vector.extract_strided_slice %98 {offsets = [48, 0], sizes = [16, 128], strides = [1, 1]} : vector<128x128xbf16> to vector<16x128xbf16>
    %c32_80 = arith.constant 32 : index
    %c0_81 = arith.constant 0 : index
    %108 = vector.load %arg11[%c32_80, %c0_81] : memref<80x128xbf16, #tpu.memory_space<vmem>>, vector<16x128xbf16>
    tpu.vector_store %arg11[%c32_80, %c0_81], %107 {strides = array<i32>} : memref<80x128xbf16, #tpu.memory_space<vmem>>, vector<16x128xbf16>,
    %109 = vector.extract_strided_slice %98 {offsets = [64, 0], sizes = [16, 128], strides = [1, 1]} : vector<128x128xbf16> to vector<16x128xbf16>
    %c32_82 = arith.constant 32 : index
    %c0_83 = arith.constant 0 : index
    %110 = vector.load %arg10[%c32_82, %c0_83] : memref<64x128xbf16, #tpu.memory_space<vmem>>, vector<16x128xbf16>
    tpu.vector_store %arg10[%c32_82, %c0_83], %109 {strides = array<i32>} : memref<64x128xbf16, #tpu.memory_space<vmem>>, vector<16x128xbf16>,
    %111 = vector.extract_strided_slice %98 {offsets = [80, 0], sizes = [16, 128], strides = [1, 1]} : vector<128x128xbf16> to vector<16x128xbf16>
    %c48_84 = arith.constant 48 : index
    %c0_85 = arith.constant 0 : index
    %112 = vector.load %arg11[%c48_84, %c0_85] : memref<80x128xbf16, #tpu.memory_space<vmem>>, vector<16x128xbf16>
    tpu.vector_store %arg11[%c48_84, %c0_85], %111 {strides = array<i32>} : memref<80x128xbf16, #tpu.memory_space<vmem>>, vector<16x128xbf16>,
    %113 = vector.extract_strided_slice %98 {offsets = [96, 0], sizes = [16, 128], strides = [1, 1]} : vector<128x128xbf16> to vector<16x128xbf16>
    %c48_86 = arith.constant 48 : index
    %c0_87 = arith.constant 0 : index
    %114 = vector.load %arg10[%c48_86, %c0_87] : memref<64x128xbf16, #tpu.memory_space<vmem>>, vector<16x128xbf16>
    tpu.vector_store %arg10[%c48_86, %c0_87], %113 {strides = array<i32>} : memref<64x128xbf16, #tpu.memory_space<vmem>>, vector<16x128xbf16>,
    %115 = vector.extract_strided_slice %98 {offsets = [112, 0], sizes = [16, 128], strides = [1, 1]} : vector<128x128xbf16> to vector<16x128xbf16>
    %c64_88 = arith.constant 64 : index
    %c0_89 = arith.constant 0 : index
    %116 = vector.load %arg11[%c64_88, %c0_89] : memref<80x128xbf16, #tpu.memory_space<vmem>>, vector<16x128xbf16>
    tpu.vector_store %arg11[%c64_88, %c0_89], %115 {strides = array<i32>} : memref<80x128xbf16, #tpu.memory_space<vmem>>, vector<16x128xbf16>,
    %c0_90 = arith.constant 0 : index
    %c0_91 = arith.constant 0 : index
    %117 = vector.load %arg11[%c0_90, %c0_91] : memref<80x128xbf16, #tpu.memory_space<vmem>>, vector<64x128xbf16>
    %c6 = arith.constant 6 : index
    %c0_92 = arith.constant 0 : index
    %c0_93 = arith.constant 0 : index
    %118 = vector.load %arg3[%c6, %c0_92, %c0_93] : memref<12x128x128xbf16, #tpu.memory_space<vmem>>, vector<1x128x128xbf16>
    %119 = vector.shape_cast %118 : vector<1x128x128xbf16> to vector<128x128xbf16>
    %cst_94 = arith.constant dense<0.000000e+00> : vector<64x128xf32>
    %120 = tpu.matmul %117, %119, %cst_94 {dimension_numbers = #tpu.dot_dimension_numbers<[1], [0], [0], [1], [0, 0, 1, 1], [], []>} : vector<64x128xbf16>, vector<128x128xbf16>, vector<64x128xf32> -> vector<64x128xf32>
    %c0_95 = arith.constant 0 : index
    %c0_96 = arith.constant 0 : index
    %121 = vector.load %arg10[%c0_95, %c0_96] : memref<64x128xbf16, #tpu.memory_space<vmem>>, vector<64x128xbf16>
    %c7 = arith.constant 7 : index
    %c0_97 = arith.constant 0 : index
    %c0_98 = arith.constant 0 : index
    %122 = vector.load %arg3[%c7, %c0_97, %c0_98] : memref<12x128x128xbf16, #tpu.memory_space<vmem>>, vector<1x128x128xbf16>
    %123 = vector.shape_cast %122 : vector<1x128x128xbf16> to vector<128x128xbf16>
    %cst_99 = arith.constant dense<0.000000e+00> : vector<64x128xf32>
    %124 = tpu.matmul %121, %123, %cst_99 {dimension_numbers = #tpu.dot_dimension_numbers<[1], [0], [0], [1], [0, 0, 1, 1], [], []>} : vector<64x128xbf16>, vector<128x128xbf16>, vector<64x128xf32> -> vector<64x128xf32>
    %125 = arith.addf %120, %124 : vector<64x128xf32>
    %c16_100 = arith.constant 16 : index
    %c0_101 = arith.constant 0 : index
    %126 = vector.load %arg11[%c16_100, %c0_101] : memref<80x128xbf16, #tpu.memory_space<vmem>>, vector<64x128xbf16>
    %c8 = arith.constant 8 : index
    %c0_102 = arith.constant 0 : index
    %c0_103 = arith.constant 0 : index
    %127 = vector.load %arg3[%c8, %c0_102, %c0_103] : memref<12x128x128xbf16, #tpu.memory_space<vmem>>, vector<1x128x128xbf16>
    %128 = vector.shape_cast %127 : vector<1x128x128xbf16> to vector<128x128xbf16>
    %cst_104 = arith.constant dense<0.000000e+00> : vector<64x128xf32>
    %129 = tpu.matmul %126, %128, %cst_104 {dimension_numbers = #tpu.dot_dimension_numbers<[1], [0], [0], [1], [0, 0, 1, 1], [], []>} : vector<64x128xbf16>, vector<128x128xbf16>, vector<64x128xf32> -> vector<64x128xf32>
    %130 = arith.addf %125, %129 : vector<64x128xf32>
    %c2_105 = arith.constant 2 : index
    %c0_106 = arith.constant 0 : index
    %131 = vector.load %arg4[%c2_105, %c0_106] : memref<4x128xf32, #tpu.memory_space<vmem>>, vector<1x128xf32>
    %132 = vector.broadcast %131 : vector<1x128xf32> to vector<64x128xf32>
    %133 = arith.addf %130, %132 : vector<64x128xf32>
    %cst_107 = arith.constant 0.000000e+00 : f32
    %134 = vector.broadcast %cst_107 : f32 to vector<64x128xf32>
    %135 = arith.maximumf %133, %134 : vector<64x128xf32>
    %136 = vector.extract_strided_slice %135 {offsets = [0, 0], sizes = [16, 128], strides = [1, 1]} : vector<64x128xf32> to vector<16x128xf32>
    %137 = vector.extract_strided_slice %135 {offsets = [16, 0], sizes = [16, 128], strides = [1, 1]} : vector<64x128xf32> to vector<16x128xf32>
    %138 = arith.addf %136, %137 : vector<16x128xf32>
    %139 = vector.extract_strided_slice %135 {offsets = [32, 0], sizes = [16, 128], strides = [1, 1]} : vector<64x128xf32> to vector<16x128xf32>
    %140 = arith.addf %138, %139 : vector<16x128xf32>
    %141 = vector.extract_strided_slice %135 {offsets = [48, 0], sizes = [16, 128], strides = [1, 1]} : vector<64x128xf32> to vector<16x128xf32>
    %142 = arith.addf %140, %141 : vector<16x128xf32>
    %143 = arith.truncf %142 : vector<16x128xf32> to vector<16x128xbf16>
    %c1_108 = arith.constant 1 : index
    %c0_109 = arith.constant 0 : index
    %c0_110 = arith.constant 0 : index
    %144 = vector.load %arg5[%c1_108, %c0_109, %c0_110] : memref<3x128x128xbf16, #tpu.memory_space<vmem>>, vector<1x128x128xbf16>
    %145 = vector.shape_cast %144 : vector<1x128x128xbf16> to vector<128x128xbf16>
    %cst_111 = arith.constant dense<0.000000e+00> : vector<16x128xf32>
    %146 = tpu.matmul %143, %145, %cst_111 {dimension_numbers = #tpu.dot_dimension_numbers<[1], [0], [0], [1], [0, 0, 1, 1], [], []>} : vector<16x128xbf16>, vector<128x128xbf16>, vector<16x128xf32> -> vector<16x128xf32>
    %147 = arith.addf %97, %146 : vector<16x128xf32>
    %148 = arith.truncf %135 : vector<64x128xf32> to vector<64x128xbf16>
    %cst_112 = arith.constant 0.000000e+00 : bf16
    %149 = vector.broadcast %cst_112 : bf16 to vector<16x128xbf16>
    %c0_113 = arith.constant 0 : index
    %c0_114 = arith.constant 0 : index
    %150 = vector.load %arg13[%c0_113, %c0_114] : memref<48x128xbf16, #tpu.memory_space<vmem>>, vector<16x128xbf16>
    tpu.vector_store %arg13[%c0_113, %c0_114], %149 {strides = array<i32>} : memref<48x128xbf16, #tpu.memory_space<vmem>>, vector<16x128xbf16>,
    %151 = vector.extract_strided_slice %148 {offsets = [0, 0], sizes = [16, 128], strides = [1, 1]} : vector<64x128xbf16> to vector<16x128xbf16>
    %c0_115 = arith.constant 0 : index
    %c0_116 = arith.constant 0 : index
    %152 = vector.load %arg12[%c0_115, %c0_116] : memref<32x128xbf16, #tpu.memory_space<vmem>>, vector<16x128xbf16>
    tpu.vector_store %arg12[%c0_115, %c0_116], %151 {strides = array<i32>} : memref<32x128xbf16, #tpu.memory_space<vmem>>, vector<16x128xbf16>,
    %153 = vector.extract_strided_slice %148 {offsets = [16, 0], sizes = [16, 128], strides = [1, 1]} : vector<64x128xbf16> to vector<16x128xbf16>
    %c16_117 = arith.constant 16 : index
    %c0_118 = arith.constant 0 : index
    %154 = vector.load %arg13[%c16_117, %c0_118] : memref<48x128xbf16, #tpu.memory_space<vmem>>, vector<16x128xbf16>
    tpu.vector_store %arg13[%c16_117, %c0_118], %153 {strides = array<i32>} : memref<48x128xbf16, #tpu.memory_space<vmem>>, vector<16x128xbf16>,
    %155 = vector.extract_strided_slice %148 {offsets = [32, 0], sizes = [16, 128], strides = [1, 1]} : vector<64x128xbf16> to vector<16x128xbf16>
    %c16_119 = arith.constant 16 : index
    %c0_120 = arith.constant 0 : index
    %156 = vector.load %arg12[%c16_119, %c0_120] : memref<32x128xbf16, #tpu.memory_space<vmem>>, vector<16x128xbf16>
    tpu.vector_store %arg12[%c16_119, %c0_120], %155 {strides = array<i32>} : memref<32x128xbf16, #tpu.memory_space<vmem>>, vector<16x128xbf16>,
    %157 = vector.extract_strided_slice %148 {offsets = [48, 0], sizes = [16, 128], strides = [1, 1]} : vector<64x128xbf16> to vector<16x128xbf16>
    %c32_121 = arith.constant 32 : index
    %c0_122 = arith.constant 0 : index
    %158 = vector.load %arg13[%c32_121, %c0_122] : memref<48x128xbf16, #tpu.memory_space<vmem>>, vector<16x128xbf16>
    tpu.vector_store %arg13[%c32_121, %c0_122], %157 {strides = array<i32>} : memref<48x128xbf16, #tpu.memory_space<vmem>>, vector<16x128xbf16>,
    %c0_123 = arith.constant 0 : index
    %c0_124 = arith.constant 0 : index
    %159 = vector.load %arg13[%c0_123, %c0_124] : memref<48x128xbf16, #tpu.memory_space<vmem>>, vector<32x128xbf16>
    %c9 = arith.constant 9 : index
    %c0_125 = arith.constant 0 : index
    %c0_126 = arith.constant 0 : index
    %160 = vector.load %arg3[%c9, %c0_125, %c0_126] : memref<12x128x128xbf16, #tpu.memory_space<vmem>>, vector<1x128x128xbf16>
    %161 = vector.shape_cast %160 : vector<1x128x128xbf16> to vector<128x128xbf16>
    %cst_127 = arith.constant dense<0.000000e+00> : vector<32x128xf32>
    %162 = tpu.matmul %159, %161, %cst_127 {dimension_numbers = #tpu.dot_dimension_numbers<[1], [0], [0], [1], [0, 0, 1, 1], [], []>} : vector<32x128xbf16>, vector<128x128xbf16>, vector<32x128xf32> -> vector<32x128xf32>
    %c0_128 = arith.constant 0 : index
    %c0_129 = arith.constant 0 : index
    %163 = vector.load %arg12[%c0_128, %c0_129] : memref<32x128xbf16, #tpu.memory_space<vmem>>, vector<32x128xbf16>
    %c10 = arith.constant 10 : index
    %c0_130 = arith.constant 0 : index
    %c0_131 = arith.constant 0 : index
    %164 = vector.load %arg3[%c10, %c0_130, %c0_131] : memref<12x128x128xbf16, #tpu.memory_space<vmem>>, vector<1x128x128xbf16>
    %165 = vector.shape_cast %164 : vector<1x128x128xbf16> to vector<128x128xbf16>
    %cst_132 = arith.constant dense<0.000000e+00> : vector<32x128xf32>
    %166 = tpu.matmul %163, %165, %cst_132 {dimension_numbers = #tpu.dot_dimension_numbers<[1], [0], [0], [1], [0, 0, 1, 1], [], []>} : vector<32x128xbf16>, vector<128x128xbf16>, vector<32x128xf32> -> vector<32x128xf32>
    %167 = arith.addf %162, %166 : vector<32x128xf32>
    %c16_133 = arith.constant 16 : index
    %c0_134 = arith.constant 0 : index
    %168 = vector.load %arg13[%c16_133, %c0_134] : memref<48x128xbf16, #tpu.memory_space<vmem>>, vector<32x128xbf16>
    %c11 = arith.constant 11 : index
    %c0_135 = arith.constant 0 : index
    %c0_136 = arith.constant 0 : index
    %169 = vector.load %arg3[%c11, %c0_135, %c0_136] : memref<12x128x128xbf16, #tpu.memory_space<vmem>>, vector<1x128x128xbf16>
    %170 = vector.shape_cast %169 : vector<1x128x128xbf16> to vector<128x128xbf16>
    %cst_137 = arith.constant dense<0.000000e+00> : vector<32x128xf32>
    %171 = tpu.matmul %168, %170, %cst_137 {dimension_numbers = #tpu.dot_dimension_numbers<[1], [0], [0], [1], [0, 0, 1, 1], [], []>} : vector<32x128xbf16>, vector<128x128xbf16>, vector<32x128xf32> -> vector<32x128xf32>
    %172 = arith.addf %167, %171 : vector<32x128xf32>
    %c3_138 = arith.constant 3 : index
    %c0_139 = arith.constant 0 : index
    %173 = vector.load %arg4[%c3_138, %c0_139] : memref<4x128xf32, #tpu.memory_space<vmem>>, vector<1x128xf32>
    %174 = vector.broadcast %173 : vector<1x128xf32> to vector<32x128xf32>
    %175 = arith.addf %172, %174 : vector<32x128xf32>
    %cst_140 = arith.constant 0.000000e+00 : f32
    %176 = vector.broadcast %cst_140 : f32 to vector<32x128xf32>
    %177 = arith.maximumf %175, %176 : vector<32x128xf32>
    %178 = vector.extract_strided_slice %177 {offsets = [0, 0], sizes = [16, 128], strides = [1, 1]} : vector<32x128xf32> to vector<16x128xf32>
    %179 = vector.extract_strided_slice %177 {offsets = [16, 0], sizes = [16, 128], strides = [1, 1]} : vector<32x128xf32> to vector<16x128xf32>
    %180 = arith.addf %178, %179 : vector<16x128xf32>
    %181 = arith.truncf %180 : vector<16x128xf32> to vector<16x128xbf16>
    %c2_141 = arith.constant 2 : index
    %c0_142 = arith.constant 0 : index
    %c0_143 = arith.constant 0 : index
    %182 = vector.load %arg5[%c2_141, %c0_142, %c0_143] : memref<3x128x128xbf16, #tpu.memory_space<vmem>>, vector<1x128x128xbf16>
    %183 = vector.shape_cast %182 : vector<1x128x128xbf16> to vector<128x128xbf16>
    %cst_144 = arith.constant dense<0.000000e+00> : vector<16x128xf32>
    %184 = tpu.matmul %181, %183, %cst_144 {dimension_numbers = #tpu.dot_dimension_numbers<[1], [0], [0], [1], [0, 0, 1, 1], [], []>} : vector<16x128xbf16>, vector<128x128xbf16>, vector<16x128xf32> -> vector<16x128xf32>
    %185 = arith.addf %147, %184 : vector<16x128xf32>
    %c0_145 = arith.constant 0 : index
    %c0_146 = arith.constant 0 : index
    %c0_147 = arith.constant 0 : index
    %186 = vector.load %arg7[%c0_145, %c0_146, %c0_147] : memref<1x16x128xf32, #tpu.memory_space<vmem>>, vector<1x16x128xf32>
    %187 = vector.shape_cast %186 : vector<1x16x128xf32> to vector<16x128xf32>
    %188 = vector.shape_cast %185 : vector<16x128xf32> to vector<1x16x128xf32>
    tpu.vector_store %arg7[%c0_145, %c0_146, %c0_147], %188 {strides = array<i32>} : memref<1x16x128xf32, #tpu.memory_space<vmem>>, vector<1x16x128xf32>,
    return
  }
  func.func @transform_0(%arg0: i32) -> (i32, i32, i32) {
    %c0_i32 = arith.constant 0 : i32
    %c0_i32_0 = arith.constant 0 : i32
    %c0_i32_1 = arith.constant 0 : i32
    return %arg0, %c0_i32, %c0_i32_0 : i32, i32, i32
  }
  func.func @transform_1(%arg0: i32) -> (i32, i32, i32) {
    %c0_i32 = arith.constant 0 : i32
    %c0_i32_0 = arith.constant 0 : i32
    %c0_i32_1 = arith.constant 0 : i32
    return %arg0, %c0_i32, %c0_i32_0 : i32, i32, i32
  }
  func.func @transform_2(%arg0: i32) -> (i32, i32, i32) {
    %c0_i32 = arith.constant 0 : i32
    %c0_i32_0 = arith.constant 0 : i32
    %c0_i32_1 = arith.constant 0 : i32
    %c0_i32_2 = arith.constant 0 : i32
    return %c0_i32, %c0_i32_0, %c0_i32_1 : i32, i32, i32
  }
  func.func @transform_3(%arg0: i32) -> (i32, i32) {
    %c0_i32 = arith.constant 0 : i32
    %c0_i32_0 = arith.constant 0 : i32
    %c0_i32_1 = arith.constant 0 : i32
    return %c0_i32, %c0_i32_0 : i32, i32
  }
  func.func @transform_4(%arg0: i32) -> (i32, i32, i32) {
    %c0_i32 = arith.constant 0 : i32
    %c0_i32_0 = arith.constant 0 : i32
    %c0_i32_1 = arith.constant 0 : i32
    %c0_i32_2 = arith.constant 0 : i32
    return %c0_i32, %c0_i32_0, %c0_i32_1 : i32, i32, i32
  }
  func.func @transform_5(%arg0: i32) -> (i32, i32) {
    %c0_i32 = arith.constant 0 : i32
    %c0_i32_0 = arith.constant 0 : i32
    %c0_i32_1 = arith.constant 0 : i32
    return %c0_i32, %c0_i32_0 : i32, i32
  }
  func.func @transform_6(%arg0: i32) -> (i32, i32, i32) {
    %c0_i32 = arith.constant 0 : i32
    %c0_i32_0 = arith.constant 0 : i32
    %c0_i32_1 = arith.constant 0 : i32
    return %arg0, %c0_i32, %c0_i32_0 : i32, i32, i32
  }
}

</mosaic_0001>

<llo_original>
// kernel: model_forward.1
$region0: #{model_forward.1}
  #allocation0 [shape = 'u32[]', space=smem, size = 0x4, offset = 0x4, fixed_abs, tag = 'smem constant byte address 0x4 - core index']
  #allocation1 [shape = 'u32[144,128]{1,0:T(1,128)}', space=vmem, size = 0x12000, scoped, tag = 'internal scratch']
  #allocation2 [shape = 'bf16[128,128]{1,0:T(16,128)(2,1)}', space=vmem, size = 0x8000, scoped, tag = 'scratch operand']
  #allocation3 [shape = 'bf16[144,128]{1,0:T(16,128)(2,1)}', space=vmem, size = 0x9000, scoped, tag = 'scratch operand']
  #allocation4 [shape = 'bf16[64,128]{1,0:T(16,128)(2,1)}', space=vmem, size = 0x4000, scoped, tag = 'scratch operand']
  #allocation5 [shape = 'bf16[80,128]{1,0:T(16,128)(2,1)}', space=vmem, size = 0x5000, scoped, tag = 'scratch operand']
  #allocation6 [shape = 'bf16[32,128]{1,0:T(16,128)(2,1)}', space=vmem, size = 0x2000, scoped, tag = 'scratch operand']
  #allocation7 [shape = 'bf16[48,128]{1,0:T(16,128)(2,1)}', space=vmem, size = 0x3000, scoped, tag = 'scratch operand']
  %s0 = inlined_call_operand.vmem [shape: bf16[2,256,128], index: 0, kind: input, shape index: {}]
  %s1 = inlined_call_operand.vmem [shape: bf16[2,272,128], index: 1, kind: input, shape index: {}]
  %s2 = inlined_call_operand.vmem [shape: bf16[12,128,128], index: 2, kind: input, shape index: {}]
  %s3 = inlined_call_operand.vmem [shape: f32[4,128], index: 3, kind: input, shape index: {}]
  %s4 = inlined_call_operand.vmem [shape: bf16[3,128,128], index: 4, kind: input, shape index: {}]
  %s5 = inlined_call_operand.vmem [shape: f32[1,128], index: 5, kind: input, shape index: {}]
  %s6 = inlined_call_operand.vmem [shape: f32[2,16,128], index: 6, kind: output, shape index: {}]
  %s7 = sld [smem:[#allocation0]]
  $region57: #{model_forward.1} parent=0
    _
  %s9 = ssub.s32 1, %s7
  %s10 = scalar_select 0, %s9, %s7
  loop: start=0, step=1, limit=4
  $region2: #{model_forward.1} parent=0 // loop_pre_header
    _
  $region3: #{model_forward.1} parent=0 // loop_header
    %s12 = sphi 0, %s16
    %p13 = scmp.ge.s32.totalorder %s12, 4
    %s22 = sphi 0, %s24
    %s25 = sphi 0, %s22
    %s26 = sphi 0, %s25
    %s42 = sphi 0, %s26
    %s48 = sphi 0, %s50
    %s51 = sphi 0, %s48
    %s52 = sphi 0, %s51
    %s68 = sphi 0, %s52
    %s72 = sphi 0, %s72
    %s74 = sphi 0, %s72
    %s75 = sphi 0, %s74
    %s89 = sphi 0, %s75
    %s93 = sphi 0, %s93
    %s95 = sphi 0, %s93
    %s96 = sphi 0, %s95
    %s110 = sphi 0, %s96
    %s114 = sphi 0, %s114
    %s116 = sphi 0, %s114
    %s117 = sphi 0, %s116
    %s131 = sphi 0, %s117
    %s135 = sphi 0, %s135
    %s137 = sphi 0, %s135
    %s138 = sphi 0, %s137
    %s152 = sphi 0, %s138
    %s158 = sphi 0, %s160
    %s161 = sphi 0, %s158
    %s162 = sphi 0, %s161
    %s178 = sphi 0, %s162
  $region4: #{model_forward.1} parent=0 // loop_header_branch
    %15 = sbr.rel (%p13) target = $region8
  $region5: #{model_forward.1} parent=0 // loop_body
    %s17 = ssub.s32 %s12, 1
    %s18 = ssub.s32 %s12, 2
    %s19 = sadd.s32 %s12, 1
    %s20 = ssub.s32 %s12, %s19
    %p21 = scmp.eq.s32.totalorder %s20, 0
    %s23 = sadd.s32 %s22, 1
    %s24 = scalar_select %p21, %s22, %s23
    %p27 = pneg %p21
    %p28 = scmp.eq.s32.totalorder %s12, 1
    %p29 = por %p27, %p28
    %p30 = scmp.ne.s32.totalorder %s22, %s25
    %p31 = scmp.eq.s32.totalorder %s12, 0
    %p32 = por %p30, %p31
    %p33 = scmp.ne.s32.totalorder %s22, %s25
    %p34 = scmp.eq.s32.totalorder %s17, 1
    %p35 = por %p33, %p34
    %p36 = scmp.ne.s32.totalorder %s25, %s26
    %p37 = scmp.eq.s32.totalorder %s17, 0
    %p38 = por %p36, %p37
    %p39 = scmp.ne.s32.totalorder %s25, %s26
    %p40 = scmp.eq.s32.totalorder %s18, 1
    %p41 = por %p39, %p40
    %p43 = scmp.ne.s32.totalorder %s26, %s42
    %p44 = scmp.eq.s32.totalorder %s18, 0
    %p45 = por %p43, %p44
    %s46 = ssub.s32 %s12, %s19
    %p47 = scmp.eq.s32.totalorder %s46, 0
    %s49 = sadd.s32 %s48, 1
    %s50 = scalar_select %p47, %s48, %s49
    %p53 = pneg %p47
    %p54 = scmp.eq.s32.totalorder %s12, 1
    %p55 = por %p53, %p54
    %p56 = scmp.ne.s32.totalorder %s48, %s51
    %p57 = scmp.eq.s32.totalorder %s12, 0
    %p58 = por %p56, %p57
    %p59 = scmp.ne.s32.totalorder %s48, %s51
    %p60 = scmp.eq.s32.totalorder %s17, 1
    %p61 = por %p59, %p60
    %p62 = scmp.ne.s32.totalorder %s51, %s52
    %p63 = scmp.eq.s32.totalorder %s17, 0
    %p64 = por %p62, %p63
    %p65 = scmp.ne.s32.totalorder %s51, %s52
    %p66 = scmp.eq.s32.totalorder %s18, 1
    %p67 = por %p65, %p66
    %p69 = scmp.ne.s32.totalorder %s52, %s68
    %p70 = scmp.eq.s32.totalorder %s18, 0
    %p71 = por %p69, %p70
    %s73 = sadd.s32 %s72, 1
    %p76 = scmp.eq.s32.totalorder %s12, 1
    %p77 = scmp.ne.s32.totalorder %s72, %s74
    %p78 = scmp.eq.s32.totalorder %s12, 0
    %p79 = por %p77, %p78
    %p80 = scmp.ne.s32.totalorder %s72, %s74
    %p81 = scmp.eq.s32.totalorder %s17, 1
    %p82 = por %p80, %p81
    %p83 = scmp.ne.s32.totalorder %s74, %s75
    %p84 = scmp.eq.s32.totalorder %s17, 0
    %p85 = por %p83, %p84
    %p86 = scmp.ne.s32.totalorder %s74, %s75
    %p87 = scmp.eq.s32.totalorder %s18, 1
    %p88 = por %p86, %p87
    %p90 = scmp.ne.s32.totalorder %s75, %s89
    %p91 = scmp.eq.s32.totalorder %s18, 0
    %p92 = por %p90, %p91
    %s94 = sadd.s32 %s93, 1
    %p97 = scmp.eq.s32.totalorder %s12, 1
    %p98 = scmp.ne.s32.totalorder %s93, %s95
    %p99 = scmp.eq.s32.totalorder %s12, 0
    %p100 = por %p98, %p99
    %p101 = scmp.ne.s32.totalorder %s93, %s95
    %p102 = scmp.eq.s32.totalorder %s17, 1
    %p103 = por %p101, %p102
    %p104 = scmp.ne.s32.totalorder %s95, %s96
    %p105 = scmp.eq.s32.totalorder %s17, 0
    %p106 = por %p104, %p105
    %p107 = scmp.ne.s32.totalorder %s95, %s96
    %p108 = scmp.eq.s32.totalorder %s18, 1
    %p109 = por %p107, %p108
    %p111 = scmp.ne.s32.totalorder %s96, %s110
    %p112 = scmp.eq.s32.totalorder %s18, 0
    %p113 = por %p111, %p112
    %s115 = sadd.s32 %s114, 1
    %p118 = scmp.eq.s32.totalorder %s12, 1
    %p119 = scmp.ne.s32.totalorder %s114, %s116
    %p120 = scmp.eq.s32.totalorder %s12, 0
    %p121 = por %p119, %p120
    %p122 = scmp.ne.s32.totalorder %s114, %s116
    %p123 = scmp.eq.s32.totalorder %s17, 1
    %p124 = por %p122, %p123
    %p125 = scmp.ne.s32.totalorder %s116, %s117
    %p126 = scmp.eq.s32.totalorder %s17, 0
    %p127 = por %p125, %p126
    %p128 = scmp.ne.s32.totalorder %s116, %s117
    %p129 = scmp.eq.s32.totalorder %s18, 1
    %p130 = por %p128, %p129
    %p132 = scmp.ne.s32.totalorder %s117, %s131
    %p133 = scmp.eq.s32.totalorder %s18, 0
    %p134 = por %p132, %p133
    %s136 = sadd.s32 %s135, 1
    %p139 = scmp.eq.s32.totalorder %s12, 1
    %p140 = scmp.ne.s32.totalorder %s135, %s137
    %p141 = scmp.eq.s32.totalorder %s12, 0
    %p142 = por %p140, %p141
    %p143 = scmp.ne.s32.totalorder %s135, %s137
    %p144 = scmp.eq.s32.totalorder %s17, 1
    %p145 = por %p143, %p144
    %p146 = scmp.ne.s32.totalorder %s137, %s138
    %p147 = scmp.eq.s32.totalorder %s17, 0
    %p148 = por %p146, %p147
    %p149 = scmp.ne.s32.totalorder %s137, %s138
    %p150 = scmp.eq.s32.totalorder %s18, 1
    %p151 = por %p149, %p150
    %p153 = scmp.ne.s32.totalorder %s138, %s152
    %p154 = scmp.eq.s32.totalorder %s18, 0
    %p155 = por %p153, %p154
    %s156 = ssub.s32 %s12, %s19
    %p157 = scmp.eq.s32.totalorder %s156, 0
    %s159 = sadd.s32 %s158, 1
    %s160 = scalar_select %p157, %s158, %s159
    %p163 = pneg %p157
    %p164 = scmp.eq.s32.totalorder %s12, 1
    %p165 = por %p163, %p164
    %p166 = scmp.ne.s32.totalorder %s158, %s161
    %p167 = scmp.eq.s32.totalorder %s12, 0
    %p168 = por %p166, %p167
    %p169 = scmp.ne.s32.totalorder %s158, %s161
    %p170 = scmp.eq.s32.totalorder %s17, 1
    %p171 = por %p169, %p170
    %p172 = scmp.ne.s32.totalorder %s161, %s162
    %p173 = scmp.eq.s32.totalorder %s17, 0
    %p174 = por %p172, %p173
    %p175 = scmp.ne.s32.totalorder %s161, %s162
    %p176 = scmp.eq.s32.totalorder %s18, 1
    %p177 = por %p175, %p176
    %p179 = scmp.ne.s32.totalorder %s162, %s178
    %p180 = scmp.eq.s32.totalorder %s18, 0
    %p181 = por %p179, %p180
    %p182 = scmp.le.s32.totalorder 1, %s12
    %p183 = scmp.lt.s32.totalorder %s12, 3
    %p184 = pnand %p182, %p183
    %p185 = pneg %p184
    // Predicated region
    $region9: #{model_forward.1} parent=5 // pred_check
      _
    $region10: #{model_forward.1} parent=5 // pred_check_branch
      %187 = sbr.rel (%p184) target = $region12
    $region11: #{model_forward.1} parent=5 // pred_region
      %s188 = ssub.s32 %s12, 1
      // Predicated region
      $region13: #{model_forward.1} parent=11 // pred_check
        %p189 = pneg %p85
      $region14: #{model_forward.1} parent=11 // pred_check_branch
        %191 = sbr.rel (%p189) target = $region16
      $region15: #{model_forward.1} parent=11 // pred_region
        _
      $region16: #{model_forward.1} parent=11 // pred_fallthru
        _
      // Predicated region
      $region17: #{model_forward.1} parent=11 // pred_check
        %p192 = pneg %p106
      $region18: #{model_forward.1} parent=11 // pred_check_branch
        %194 = sbr.rel (%p192) target = $region20
      $region19: #{model_forward.1} parent=11 // pred_region
        _
      $region20: #{model_forward.1} parent=11 // pred_fallthru
        _
      // Predicated region
      $region21: #{model_forward.1} parent=11 // pred_check
        %p195 = pneg %p127
      $region22: #{model_forward.1} parent=11 // pred_check_branch
        %197 = sbr.rel (%p195) target = $region24
      $region23: #{model_forward.1} parent=11 // pred_region
        _
      $region24: #{model_forward.1} parent=11 // pred_fallthru
        _
      // Predicated region
      $region25: #{model_forward.1} parent=11 // pred_check
        %p198 = pneg %p148
      $region26: #{model_forward.1} parent=11 // pred_check_branch
        %200 = sbr.rel (%p198) target = $region28
      $region27: #{model_forward.1} parent=11 // pred_region
        _
      $region28: #{model_forward.1} parent=11 // pred_fallthru
        _
    $region12: #{model_forward.1} parent=5 // pred_fallthru
      _
    %p201 = scmp.lt.s32.totalorder %s12, 2
    // Predicated region
    $region29: #{model_forward.1} parent=5 // pred_check
      %p202 = pneg %p201
    $region30: #{model_forward.1} parent=5 // pred_check_branch
      %204 = sbr.rel (%p202) target = $region32
    $region31: #{model_forward.1} parent=5 // pred_region
      // Predicated region
      $region33: #{model_forward.1} parent=31 // pred_check
        %p205 = pneg %p32
      $region34: #{model_forward.1} parent=31 // pred_check_branch
        %207 = sbr.rel (%p205) target = $region36
      $region35: #{model_forward.1} parent=31 // pred_region
        %p208 = scmp.lt.s32.totalorder %s12, 1
        %s209 = scalar_select %p208, %s12, 1
        %s210 = smul.addr %s209, 32
        %s211 = smul.addr %s210, 4
        %s212 = scalar_lea.vmem %s0, %s211
      $region36: #{model_forward.1} parent=31 // pred_fallthru
        _
      // Predicated region
      $region37: #{model_forward.1} parent=31 // pred_check
        %p213 = pneg %p58
      $region38: #{model_forward.1} parent=31 // pred_check_branch
        %215 = sbr.rel (%p213) target = $region40
      $region39: #{model_forward.1} parent=31 // pred_region
        %p216 = scmp.lt.s32.totalorder %s12, 1
        %s217 = scalar_select %p216, %s12, 1
        %s218 = smul.addr %s217, 34
        %s219 = smul.addr %s218, 4
        %s220 = scalar_lea.vmem %s1, %s219
      $region40: #{model_forward.1} parent=31 // pred_fallthru
        _
    $region32: #{model_forward.1} parent=5 // pred_fallthru
      _
    %p221 = scmp.le.s32.totalorder 1, %s12
    %p222 = scmp.lt.s32.totalorder %s12, 3
    %p223 = pnand %p221, %p222
    %p224 = pneg %p223
    // Predicated region
    $region41: #{model_forward.1} parent=5 // pred_check
      _
    $region42: #{model_forward.1} parent=5 // pred_check_branch
      %226 = sbr.rel (%p223) target = $region44
    $region43: #{model_forward.1} parent=5 // pred_region
      %s227 = ssub.s32 %s12, 1
      %p228 = scmp.lt.s32.totalorder %s17, 1
      %s229 = scalar_select %p228, %s17, 1
      %s230 = smul.addr %s229, 32
      %s231 = smul.addr %s230, 4
      %s232 = scalar_lea.vmem %s0, %s231
      %p233 = pneg %p38
      %p234 = pneg %p35
      %p235 = scmp.lt.s32.totalorder %s17, 1
      %s236 = scalar_select %p235, %s17, 1
      %s237 = smul.addr %s236, 34
      %s238 = smul.addr %s237, 4
      %s239 = scalar_lea.vmem %s1, %s238
      %p240 = pneg %p64
      %p241 = pneg %p61
      %p242 = pneg %p85
      %p243 = pneg %p82
      %p244 = pneg %p106
      %p245 = pneg %p103
      %p246 = pneg %p127
      %p247 = pneg %p124
      %p248 = pneg %p148
      %p249 = pneg %p145
      %p250 = pneg %p174
      %p251 = pneg %p171
      %p252 = scmp.lt.s32.totalorder %s17, 1
      %s253 = scalar_select %p252, %s17, 1
      %s254 = smul.addr %s253, 2
      %s255 = smul.addr %s254, 8
      %s256 = scalar_lea.vmem %s6, %s255
      %p257 = scmp.lt.s32.totalorder %s17, 1
      %s258 = scalar_select %p257, %s17, 1
      %s259 = smul.addr %s258, 32
      %s260 = smul.addr %s259, 4
      %s261 = scalar_lea.vmem %s0, %s260
      %p262 = scmp.lt.s32.totalorder %s17, 1
      %s263 = scalar_select %p262, %s17, 1
      %s264 = smul.addr %s263, 34
      %s265 = smul.addr %s264, 4
      %s266 = scalar_lea.vmem %s1, %s265
      %p267 = scmp.lt.s32.totalorder %s17, 1
      %s268 = scalar_select %p267, %s17, 1
      %s269 = smul.addr %s268, 2
      %s270 = smul.addr %s269, 8
      %s271 = scalar_lea.vmem %s6, %s270
      %v273 = vld [vmem:[%s5] sm:$0x1]
      %v274 = vld [vmem:[%s266] sm:$0xf]
      %v275 = vld [vmem:[%s266 + $0x4] sm:$0xf]
      %v276 = vld [vmem:[%s266 + $0x8] sm:$0xf]
      %v277 = vld [vmem:[%s266 + $0xc] sm:$0xf]
      %v278 = vld [vmem:[%s266 + $0x10] sm:$0xf]
      %v279 = vld [vmem:[%s266 + $0x14] sm:$0xf]
      %v280 = vld [vmem:[%s266 + $0x18] sm:$0xf]
      %v281 = vld [vmem:[%s266 + $0x1c] sm:$0xf]
      %v282 = vld [vmem:[%s266 + $0x20] sm:$0xf]
      %v283 = vld [vmem:[%s266 + $0x24] sm:$0xf]
      %v284 = vld [vmem:[%s266 + $0x28] sm:$0xf]
      %v285 = vld [vmem:[%s266 + $0x2c] sm:$0xf]
      %v286 = vld [vmem:[%s266 + $0x30] sm:$0xf]
      %v287 = vld [vmem:[%s266 + $0x34] sm:$0xf]
      %v288 = vld [vmem:[%s266 + $0x38] sm:$0xf]
      %v289 = vld [vmem:[%s266 + $0x3c] sm:$0xf]
      %v290 = vld [vmem:[%s266 + $0x40] sm:$0xf]
      %v291 = vld [vmem:[%s266 + $0x44] sm:$0xf]
      %v292 = vld [vmem:[%s266 + $0x48] sm:$0xf]
      %v293 = vld [vmem:[%s266 + $0x4c] sm:$0xf]
      %v294 = vld [vmem:[%s266 + $0x50] sm:$0xf]
      %v295 = vld [vmem:[%s266 + $0x54] sm:$0xf]
      %v296 = vld [vmem:[%s266 + $0x58] sm:$0xf]
      %v297 = vld [vmem:[%s266 + $0x5c] sm:$0xf]
      %v298 = vld [vmem:[%s266 + $0x60] sm:$0xf]
      %v299 = vld [vmem:[%s266 + $0x64] sm:$0xf]
      %v300 = vld [vmem:[%s266 + $0x68] sm:$0xf]
      %v301 = vld [vmem:[%s266 + $0x6c] sm:$0xf]
      %v302 = vld [vmem:[%s266 + $0x70] sm:$0xf]
      %v303 = vld [vmem:[%s266 + $0x74] sm:$0xf]
      %v304 = vld [vmem:[%s266 + $0x78] sm:$0xf]
      %v305 = vld [vmem:[%s266 + $0x7c] sm:$0xf]
      %v306 = vld [vmem:[%s2] sm:$0xf]
      %v307 = vld [vmem:[%s2 + $0x4] sm:$0xf]
      %v308 = vld [vmem:[%s2 + $0x8] sm:$0xf]
      %v309 = vld [vmem:[%s2 + $0xc] sm:$0xf]
      %v310 = vld [vmem:[%s2 + $0x10] sm:$0xf]
      %v311 = vld [vmem:[%s2 + $0x14] sm:$0xf]
      %v312 = vld [vmem:[%s2 + $0x18] sm:$0xf]
      %v313 = vld [vmem:[%s2 + $0x1c] sm:$0xf]
      %v314 = vld [vmem:[%s2 + $0x20] sm:$0xf]
      %v315 = vld [vmem:[%s2 + $0x24] sm:$0xf]
      %v316 = vld [vmem:[%s2 + $0x28] sm:$0xf]
      %v317 = vld [vmem:[%s2 + $0x2c] sm:$0xf]
      %v318 = vld [vmem:[%s2 + $0x30] sm:$0xf]
      %v319 = vld [vmem:[%s2 + $0x34] sm:$0xf]
      %v320 = vld [vmem:[%s2 + $0x38] sm:$0xf]
      %v321 = vld [vmem:[%s2 + $0x3c] sm:$0xf]
      %v322 = vld [vmem:[%s261] sm:$0xf]
      %v323 = vld [vmem:[%s261 + $0x4] sm:$0xf]
      %v324 = vld [vmem:[%s261 + $0x8] sm:$0xf]
      %v325 = vld [vmem:[%s261 + $0xc] sm:$0xf]
      %v326 = vld [vmem:[%s261 + $0x10] sm:$0xf]
      %v327 = vld [vmem:[%s261 + $0x14] sm:$0xf]
      %v328 = vld [vmem:[%s261 + $0x18] sm:$0xf]
      %v329 = vld [vmem:[%s261 + $0x1c] sm:$0xf]
      %v330 = vld [vmem:[%s261 + $0x20] sm:$0xf]
      %v331 = vld [vmem:[%s261 + $0x24] sm:$0xf]
      %v332 = vld [vmem:[%s261 + $0x28] sm:$0xf]
      %v333 = vld [vmem:[%s261 + $0x2c] sm:$0xf]
      %v334 = vld [vmem:[%s261 + $0x30] sm:$0xf]
      %v335 = vld [vmem:[%s261 + $0x34] sm:$0xf]
      %v336 = vld [vmem:[%s261 + $0x38] sm:$0xf]
      %v337 = vld [vmem:[%s261 + $0x3c] sm:$0xf]
      %v338 = vld [vmem:[%s261 + $0x40] sm:$0xf]
      %v339 = vld [vmem:[%s261 + $0x44] sm:$0xf]
      %v340 = vld [vmem:[%s261 + $0x48] sm:$0xf]
      %v341 = vld [vmem:[%s261 + $0x4c] sm:$0xf]
      %v342 = vld [vmem:[%s261 + $0x50] sm:$0xf]
      %v343 = vld [vmem:[%s261 + $0x54] sm:$0xf]
      %v344 = vld [vmem:[%s261 + $0x58] sm:$0xf]
      %v345 = vld [vmem:[%s261 + $0x5c] sm:$0xf]
      %v346 = vld [vmem:[%s261 + $0x60] sm:$0xf]
      %v347 = vld [vmem:[%s261 + $0x64] sm:$0xf]
      %v348 = vld [vmem:[%s261 + $0x68] sm:$0xf]
      %v349 = vld [vmem:[%s261 + $0x6c] sm:$0xf]
      %v350 = vld [vmem:[%s261 + $0x70] sm:$0xf]
      %v351 = vld [vmem:[%s261 + $0x74] sm:$0xf]
      %v352 = vld [vmem:[%s261 + $0x78] sm:$0xf]
      %v353 = vld [vmem:[%s261 + $0x7c] sm:$0xf]
      %s354 = scalar_lea.vmem %s2, 64
      %v355 = vld [vmem:[%s354] sm:$0xf]
      %v356 = vld [vmem:[%s354 + $0x4] sm:$0xf]
      %v357 = vld [vmem:[%s354 + $0x8] sm:$0xf]
      %v358 = vld [vmem:[%s354 + $0xc] sm:$0xf]
      %v359 = vld [vmem:[%s354 + $0x10] sm:$0xf]
      %v360 = vld [vmem:[%s354 + $0x14] sm:$0xf]
      %v361 = vld [vmem:[%s354 + $0x18] sm:$0xf]
      %v362 = vld [vmem:[%s354 + $0x1c] sm:$0xf]
      %v363 = vld [vmem:[%s354 + $0x20] sm:$0xf]
      %v364 = vld [vmem:[%s354 + $0x24] sm:$0xf]
      %v365 = vld [vmem:[%s354 + $0x28] sm:$0xf]
      %v366 = vld [vmem:[%s354 + $0x2c] sm:$0xf]
      %v367 = vld [vmem:[%s354 + $0x30] sm:$0xf]
      %v368 = vld [vmem:[%s354 + $0x34] sm:$0xf]
      %v369 = vld [vmem:[%s354 + $0x38] sm:$0xf]
      %v370 = vld [vmem:[%s354 + $0x3c] sm:$0xf]
      %v403 = vunpack.c.l.b16 %v322
      %v404 = vunpack.c.l.b16 %v323
      %v405 = vunpack.c.l.b16 %v324
      %v406 = vunpack.c.l.b16 %v325
      %v407 = vunpack.c.l.b16 %v326
      %v408 = vunpack.c.l.b16 %v327
      %v409 = vunpack.c.l.b16 %v328
      %v410 = vunpack.c.l.b16 %v329
      %v411 = vunpack.c.l.b16 %v330
      %v412 = vunpack.c.l.b16 %v331
      %v413 = vunpack.c.l.b16 %v332
      %v414 = vunpack.c.l.b16 %v333
      %v415 = vunpack.c.l.b16 %v334
      %v416 = vunpack.c.l.b16 %v335
      %v417 = vunpack.c.l.b16 %v336
      %v418 = vunpack.c.l.b16 %v337
      %v419 = vunpack.c.l.b16 %v338
      %v420 = vunpack.c.l.b16 %v339
      %v421 = vunpack.c.l.b16 %v340
      %v422 = vunpack.c.l.b16 %v341
      %v423 = vunpack.c.l.b16 %v342
      %v424 = vunpack.c.l.b16 %v343
      %v425 = vunpack.c.l.b16 %v344
      %v426 = vunpack.c.l.b16 %v345
      %v427 = vunpack.c.l.b16 %v346
      %v428 = vunpack.c.l.b16 %v347
      %v429 = vunpack.c.l.b16 %v348
      %v430 = vunpack.c.l.b16 %v349
      %v431 = vunpack.c.l.b16 %v350
      %v432 = vunpack.c.l.b16 %v351
      %v433 = vunpack.c.l.b16 %v352
      %v434 = vunpack.c.l.b16 %v353
      %v435 = vpack.c.b16 %v404, %v403
      %v436 = vpack.c.b16 %v406, %v405
      %v437 = vpack.c.b16 %v408, %v407
      %v438 = vpack.c.b16 %v410, %v409
      %v439 = vpack.c.b16 %v412, %v411
      %v440 = vpack.c.b16 %v414, %v413
      %v441 = vpack.c.b16 %v416, %v415
      %v442 = vpack.c.b16 %v418, %v417
      %v443 = vpack.c.b16 %v420, %v419
      %v444 = vpack.c.b16 %v422, %v421
      %v445 = vpack.c.b16 %v424, %v423
      %v446 = vpack.c.b16 %v426, %v425
      %v447 = vpack.c.b16 %v428, %v427
      %v448 = vpack.c.b16 %v430, %v429
      %v449 = vpack.c.b16 %v432, %v431
      %v450 = vpack.c.b16 %v434, %v433
      %v483 = vunpack.c.l.b16 %v355
      %v484 = vunpack.c.l.b16 %v356
      %v485 = vunpack.c.l.b16 %v357
      %v486 = vunpack.c.l.b16 %v358
      %v487 = vunpack.c.l.b16 %v359
      %v488 = vunpack.c.l.b16 %v360
      %v489 = vunpack.c.l.b16 %v361
      %v490 = vunpack.c.l.b16 %v362
      %v491 = vunpack.c.l.b16 %v363
      %v492 = vunpack.c.l.b16 %v364
      %v493 = vunpack.c.l.b16 %v365
      %v494 = vunpack.c.l.b16 %v366
      %v495 = vunpack.c.l.b16 %v367
      %v496 = vunpack.c.l.b16 %v368
      %v497 = vunpack.c.l.b16 %v369
      %v498 = vunpack.c.l.b16 %v370
      %v499 = vpack.c.b16 %v484, %v483
      %v500 = vpack.c.b16 %v486, %v485
      %v501 = vpack.c.b16 %v488, %v487
      %v502 = vpack.c.b16 %v490, %v489
      %v503 = vpack.c.b16 %v492, %v491
      %v504 = vpack.c.b16 %v494, %v493
      %v505 = vpack.c.b16 %v496, %v495
      %v506 = vpack.c.b16 %v498, %v497
      %515 = vmatprep.subr.bf16.mxu0 0
      %516 = vmatpush1.bf16.msra.mxu0 %v499
      %517 = vmatprep.subr.bf16.mxu0 0
      %518 = vmatpush1.bf16.msra.mxu0 %v500
      %519 = vmatprep.subr.bf16.mxu0 0
      %520 = vmatpush1.bf16.msra.mxu0 %v501
      %521 = vmatprep.subr.bf16.mxu0 0
      %522 = vmatpush1.bf16.msra.mxu0 %v502
      %523 = vmatprep.subr.bf16.mxu0 0
      %524 = vmatpush1.bf16.msra.mxu0 %v503
      %525 = vmatprep.subr.bf16.mxu0 0
      %526 = vmatpush1.bf16.msra.mxu0 %v504
      %527 = vmatprep.subr.bf16.mxu0 0
      %528 = vmatpush1.bf16.msra.mxu0 %v505
      %529 = vmatprep.subr.bf16.mxu0 0
      %530 = vmatpush1.bf16.msra.mxu0 %v506
      %531 = vmatprep.subr.bf16.mxu0 0
      %532 = vmatpush1.bf16.msra.mxu0 0
      %533 = vmatprep.subr.bf16.mxu0 0
      %534 = vmatpush1.bf16.msra.mxu0 0
      %535 = vmatprep.subr.bf16.mxu0 0
      %536 = vmatpush1.bf16.msra.mxu0 0
      %537 = vmatprep.subr.bf16.mxu0 0
      %538 = vmatpush1.bf16.msra.mxu0 0
      %539 = vmatprep.subr.bf16.mxu0 0
      %540 = vmatpush1.bf16.msra.mxu0 0
      %541 = vmatprep.subr.bf16.mxu0 0
      %542 = vmatpush1.bf16.msra.mxu0 0
      %543 = vmatprep.subr.bf16.mxu0 0
      %544 = vmatpush1.bf16.msra.mxu0 0
      %545 = vmatprep.subr.bf16.mxu0 0
      %546 = vmatpush1.bf16.msra.mxu0 0
      %547 = vmatprep.mubr.bf16.mxu0 0
      %548 = vmatmul.mubr.bf16.gmra.mrb[0].mxu0 %v435
      %v549 = vpop.f32.mrb[0].mxu0
      %v550 = vadd.f32 0.0, %v549
      %v551 = vpop.f32.mrb[0].mxu0
      %v552 = vpop.f32.mrb[0].mxu0
      %v553 = vadd.f32 0.0, %v552
      %v554 = vpop.f32.mrb[0].mxu0
      %555 = vmatprep.mubr.bf16.mxu0 0
      %556 = vmatmul.mubr.bf16.gmra.mrb[0].mxu0 %v436
      %v557 = vpop.f32.mrb[0].mxu0
      %v558 = vadd.f32 0.0, %v557
      %v559 = vpop.f32.mrb[0].mxu0
      %v560 = vpop.f32.mrb[0].mxu0
      %v561 = vadd.f32 0.0, %v560
      %v562 = vpop.f32.mrb[0].mxu0
      %563 = vmatprep.mubr.bf16.mxu0 0
      %564 = vmatmul.mubr.bf16.gmra.mrb[0].mxu0 %v437
      %v565 = vpop.f32.mrb[0].mxu0
      %v566 = vadd.f32 0.0, %v565
      %v567 = vpop.f32.mrb[0].mxu0
      %v568 = vpop.f32.mrb[0].mxu0
      %v569 = vadd.f32 0.0, %v568
      %v570 = vpop.f32.mrb[0].mxu0
      %571 = vmatprep.mubr.bf16.mxu0 0
      %572 = vmatmul.mubr.bf16.gmra.mrb[0].mxu0 %v438
      %v573 = vpop.f32.mrb[0].mxu0
      %v574 = vadd.f32 0.0, %v573
      %v575 = vpop.f32.mrb[0].mxu0
      %v576 = vpop.f32.mrb[0].mxu0
      %v577 = vadd.f32 0.0, %v576
      %v578 = vpop.f32.mrb[0].mxu0
      %579 = vmatprep.mubr.bf16.mxu0 0
      %580 = vmatmul.mubr.bf16.gmra.mrb[0].mxu0 %v439
      %v581 = vpop.f32.mrb[0].mxu0
      %v582 = vadd.f32 0.0, %v581
      %v583 = vpop.f32.mrb[0].mxu0
      %v584 = vpop.f32.mrb[0].mxu0
      %v585 = vadd.f32 0.0, %v584
      %v586 = vpop.f32.mrb[0].mxu0
      %587 = vmatprep.mubr.bf16.mxu0 0
      %588 = vmatmul.mubr.bf16.gmra.mrb[0].mxu0 %v440
      %v589 = vpop.f32.mrb[0].mxu0
      %v590 = vadd.f32 0.0, %v589
      %v591 = vpop.f32.mrb[0].mxu0
      %v592 = vpop.f32.mrb[0].mxu0
      %v593 = vadd.f32 0.0, %v592
      %v594 = vpop.f32.mrb[0].mxu0
      %595 = vmatprep.mubr.bf16.mxu0 0
      %596 = vmatmul.mubr.bf16.gmra.mrb[0].mxu0 %v441
      %v597 = vpop.f32.mrb[0].mxu0
      %v598 = vadd.f32 0.0, %v597
      %v599 = vpop.f32.mrb[0].mxu0
      %v600 = vpop.f32.mrb[0].mxu0
      %v601 = vadd.f32 0.0, %v600
      %v602 = vpop.f32.mrb[0].mxu0
      %603 = vmatprep.mubr.bf16.mxu0 0
      %604 = vmatmul.mubr.bf16.gmra.mrb[0].mxu0 %v442
      %v605 = vpop.f32.mrb[0].mxu0
      %v606 = vadd.f32 0.0, %v605
      %v607 = vpop.f32.mrb[0].mxu0
      %v608 = vpop.f32.mrb[0].mxu0
      %v609 = vadd.f32 0.0, %v608
      %v610 = vpop.f32.mrb[0].mxu0
      %611 = vmatprep.mubr.bf16.mxu0 0
      %612 = vmatmul.mubr.bf16.gmra.mrb[0].mxu0 %v443
      %v613 = vpop.f32.mrb[0].mxu0
      %v614 = vadd.f32 0.0, %v613
      %v615 = vpop.f32.mrb[0].mxu0
      %v616 = vpop.f32.mrb[0].mxu0
      %v617 = vadd.f32 0.0, %v616
      %v618 = vpop.f32.mrb[0].mxu0
      %619 = vmatprep.mubr.bf16.mxu0 0
      %620 = vmatmul.mubr.bf16.gmra.mrb[0].mxu0 %v444
      %v621 = vpop.f32.mrb[0].mxu0
      %v622 = vadd.f32 0.0, %v621
      %v623 = vpop.f32.mrb[0].mxu0
      %v624 = vpop.f32.mrb[0].mxu0
      %v625 = vadd.f32 0.0, %v624
      %v626 = vpop.f32.mrb[0].mxu0
      %627 = vmatprep.mubr.bf16.mxu0 0
      %628 = vmatmul.mubr.bf16.gmra.mrb[0].mxu0 %v445
      %v629 = vpop.f32.mrb[0].mxu0
      %v630 = vadd.f32 0.0, %v629
      %v631 = vpop.f32.mrb[0].mxu0
      %v632 = vpop.f32.mrb[0].mxu0
      %v633 = vadd.f32 0.0, %v632
      %v634 = vpop.f32.mrb[0].mxu0
      %635 = vmatprep.mubr.bf16.mxu0 0
      %636 = vmatmul.mubr.bf16.gmra.mrb[0].mxu0 %v446
      %v637 = vpop.f32.mrb[0].mxu0
      %v638 = vadd.f32 0.0, %v637
      %v639 = vpop.f32.mrb[0].mxu0
      %v640 = vpop.f32.mrb[0].mxu0
      %v641 = vadd.f32 0.0, %v640
      %v642 = vpop.f32.mrb[0].mxu0
      %643 = vmatprep.mubr.bf16.mxu0 0
      %644 = vmatmul.mubr.bf16.gmra.mrb[0].mxu0 %v447
      %v645 = vpop.f32.mrb[0].mxu0
      %v646 = vadd.f32 0.0, %v645
      %v647 = vpop.f32.mrb[0].mxu0
      %v648 = vpop.f32.mrb[0].mxu0
      %v649 = vadd.f32 0.0, %v648
      %v650 = vpop.f32.mrb[0].mxu0
      %651 = vmatprep.mubr.bf16.mxu0 0
      %652 = vmatmul.mubr.bf16.gmra.mrb[0].mxu0 %v448
      %v653 = vpop.f32.mrb[0].mxu0
      %v654 = vadd.f32 0.0, %v653
      %v655 = vpop.f32.mrb[0].mxu0
      %v656 = vpop.f32.mrb[0].mxu0
      %v657 = vadd.f32 0.0, %v656
      %v658 = vpop.f32.mrb[0].mxu0
      %659 = vmatprep.mubr.bf16.mxu0 0
      %660 = vmatmul.mubr.bf16.gmra.mrb[0].mxu0 %v449
      %v661 = vpop.f32.mrb[0].mxu0
      %v662 = vadd.f32 0.0, %v661
      %v663 = vpop.f32.mrb[0].mxu0
      %v664 = vpop.f32.mrb[0].mxu0
      %v665 = vadd.f32 0.0, %v664
      %v666 = vpop.f32.mrb[0].mxu0
      %667 = vmatprep.mubr.bf16.mxu0 0
      %668 = vmatmul.mubr.bf16.gmra.mrb[0].mxu0 %v450
      %v669 = vpop.f32.mrb[0].mxu0
      %v670 = vadd.f32 0.0, %v669
      %v671 = vpop.f32.mrb[0].mxu0
      %v672 = vpop.f32.mrb[0].mxu0
      %v673 = vadd.f32 0.0, %v672
      %v674 = vpop.f32.mrb[0].mxu0
      %675 = vdwg.mxu0
      %v708 = vunpack.c.l.b16 %v274
      %v709 = vunpack.c.l.b16 %v275
      %v710 = vunpack.c.l.b16 %v276
      %v711 = vunpack.c.l.b16 %v277
      %v712 = vunpack.c.l.b16 %v278
      %v713 = vunpack.c.l.b16 %v279
      %v714 = vunpack.c.l.b16 %v280
      %v715 = vunpack.c.l.b16 %v281
      %v716 = vunpack.c.l.b16 %v282
      %v717 = vunpack.c.l.b16 %v283
      %v718 = vunpack.c.l.b16 %v284
      %v719 = vunpack.c.l.b16 %v285
      %v720 = vunpack.c.l.b16 %v286
      %v721 = vunpack.c.l.b16 %v287
      %v722 = vunpack.c.l.b16 %v288
      %v723 = vunpack.c.l.b16 %v289
      %v724 = vunpack.c.l.b16 %v290
      %v725 = vunpack.c.l.b16 %v291
      %v726 = vunpack.c.l.b16 %v292
      %v727 = vunpack.c.l.b16 %v293
      %v728 = vunpack.c.l.b16 %v294
      %v729 = vunpack.c.l.b16 %v295
      %v730 = vunpack.c.l.b16 %v296
      %v731 = vunpack.c.l.b16 %v297
      %v732 = vunpack.c.l.b16 %v298
      %v733 = vunpack.c.l.b16 %v299
      %v734 = vunpack.c.l.b16 %v300
      %v735 = vunpack.c.l.b16 %v301
      %v736 = vunpack.c.l.b16 %v302
      %v737 = vunpack.c.l.b16 %v303
      %v738 = vunpack.c.l.b16 %v304
      %v739 = vunpack.c.l.b16 %v305
      %v740 = vpack.c.b16 %v709, %v708
      %v741 = vpack.c.b16 %v711, %v710
      %v742 = vpack.c.b16 %v713, %v712
      %v743 = vpack.c.b16 %v715, %v714
      %v744 = vpack.c.b16 %v717, %v716
      %v745 = vpack.c.b16 %v719, %v718
      %v746 = vpack.c.b16 %v721, %v720
      %v747 = vpack.c.b16 %v723, %v722
      %v748 = vpack.c.b16 %v725, %v724
      %v749 = vpack.c.b16 %v727, %v726
      %v750 = vpack.c.b16 %v729, %v728
      %v751 = vpack.c.b16 %v731, %v730
      %v752 = vpack.c.b16 %v733, %v732
      %v753 = vpack.c.b16 %v735, %v734
      %v754 = vpack.c.b16 %v737, %v736
      %v755 = vpack.c.b16 %v739, %v738
      %v788 = vunpack.c.l.b16 %v306
      %v789 = vunpack.c.l.b16 %v307
      %v790 = vunpack.c.l.b16 %v308
      %v791 = vunpack.c.l.b16 %v309
      %v792 = vunpack.c.l.b16 %v310
      %v793 = vunpack.c.l.b16 %v311
      %v794 = vunpack.c.l.b16 %v312
      %v795 = vunpack.c.l.b16 %v313
      %v796 = vunpack.c.l.b16 %v314
      %v797 = vunpack.c.l.b16 %v315
      %v798 = vunpack.c.l.b16 %v316
      %v799 = vunpack.c.l.b16 %v317
      %v800 = vunpack.c.l.b16 %v318
      %v801 = vunpack.c.l.b16 %v319
      %v802 = vunpack.c.l.b16 %v320
      %v803 = vunpack.c.l.b16 %v321
      %v804 = vpack.c.b16 %v789, %v788
      %v805 = vpack.c.b16 %v791, %v790
      %v806 = vpack.c.b16 %v793, %v792
      %v807 = vpack.c.b16 %v795, %v794
      %v808 = vpack.c.b16 %v797, %v796
      %v809 = vpack.c.b16 %v799, %v798
      %v810 = vpack.c.b16 %v801, %v800
      %v811 = vpack.c.b16 %v803, %v802
      %820 = vmatprep.subr.bf16.mxu0 0
      %821 = vmatpush1.bf16.msra.mxu0 %v804
      %822 = vmatprep.subr.bf16.mxu0 0
      %823 = vmatpush1.bf16.msra.mxu0 %v805
      %824 = vmatprep.subr.bf16.mxu0 0
      %825 = vmatpush1.bf16.msra.mxu0 %v806
      %826 = vmatprep.subr.bf16.mxu0 0
      %827 = vmatpush1.bf16.msra.mxu0 %v807
      %828 = vmatprep.subr.bf16.mxu0 0
      %829 = vmatpush1.bf16.msra.mxu0 %v808
      %830 = vmatprep.subr.bf16.mxu0 0
      %831 = vmatpush1.bf16.msra.mxu0 %v809
      %832 = vmatprep.subr.bf16.mxu0 0
      %833 = vmatpush1.bf16.msra.mxu0 %v810
      %834 = vmatprep.subr.bf16.mxu0 0
      %835 = vmatpush1.bf16.msra.mxu0 %v811
      %836 = vmatprep.subr.bf16.mxu0 0
      %837 = vmatpush1.bf16.msra.mxu0 0
      %838 = vmatprep.subr.bf16.mxu0 0
      %839 = vmatpush1.bf16.msra.mxu0 0
      %840 = vmatprep.subr.bf16.mxu0 0
      %841 = vmatpush1.bf16.msra.mxu0 0
      %842 = vmatprep.subr.bf16.mxu0 0
      %843 = vmatpush1.bf16.msra.mxu0 0
      %844 = vmatprep.subr.bf16.mxu0 0
      %845 = vmatpush1.bf16.msra.mxu0 0
      %846 = vmatprep.subr.bf16.mxu0 0
      %847 = vmatpush1.bf16.msra.mxu0 0
      %848 = vmatprep.subr.bf16.mxu0 0
      %849 = vmatpush1.bf16.msra.mxu0 0
      %850 = vmatprep.subr.bf16.mxu0 0
      %851 = vmatpush1.bf16.msra.mxu0 0
      %852 = vmatprep.mubr.bf16.mxu0 0
      %853 = vmatmul.mubr.bf16.gmra.mrb[0].mxu0 %v740
      %v854 = vpop.f32.mrb[0].mxu0
      %v855 = vadd.f32 %v550, %v854
      %v856 = vpop.f32.mrb[0].mxu0
      %v857 = vpop.f32.mrb[0].mxu0
      %v858 = vadd.f32 %v553, %v857
      %v859 = vpop.f32.mrb[0].mxu0
      %860 = vmatprep.mubr.bf16.mxu0 0
      %861 = vmatmul.mubr.bf16.gmra.mrb[0].mxu0 %v741
      %v862 = vpop.f32.mrb[0].mxu0
      %v863 = vadd.f32 %v558, %v862
      %v864 = vpop.f32.mrb[0].mxu0
      %v865 = vpop.f32.mrb[0].mxu0
      %v866 = vadd.f32 %v561, %v865
      %v867 = vpop.f32.mrb[0].mxu0
      %868 = vmatprep.mubr.bf16.mxu0 0
      %869 = vmatmul.mubr.bf16.gmra.mrb[0].mxu0 %v742
      %v870 = vpop.f32.mrb[0].mxu0
      %v871 = vadd.f32 %v566, %v870
      %v872 = vpop.f32.mrb[0].mxu0
      %v873 = vpop.f32.mrb[0].mxu0
      %v874 = vadd.f32 %v569, %v873
      %v875 = vpop.f32.mrb[0].mxu0
      %876 = vmatprep.mubr.bf16.mxu0 0
      %877 = vmatmul.mubr.bf16.gmra.mrb[0].mxu0 %v743
      %v878 = vpop.f32.mrb[0].mxu0
      %v879 = vadd.f32 %v574, %v878
      %v880 = vpop.f32.mrb[0].mxu0
      %v881 = vpop.f32.mrb[0].mxu0
      %v882 = vadd.f32 %v577, %v881
      %v883 = vpop.f32.mrb[0].mxu0
      %884 = vmatprep.mubr.bf16.mxu0 0
      %885 = vmatmul.mubr.bf16.gmra.mrb[0].mxu0 %v744
      %v886 = vpop.f32.mrb[0].mxu0
      %v887 = vadd.f32 %v582, %v886
      %v888 = vpop.f32.mrb[0].mxu0
      %v889 = vpop.f32.mrb[0].mxu0
      %v890 = vadd.f32 %v585, %v889
      %v891 = vpop.f32.mrb[0].mxu0
      %892 = vmatprep.mubr.bf16.mxu0 0
      %893 = vmatmul.mubr.bf16.gmra.mrb[0].mxu0 %v745
      %v894 = vpop.f32.mrb[0].mxu0
      %v895 = vadd.f32 %v590, %v894
      %v896 = vpop.f32.mrb[0].mxu0
      %v897 = vpop.f32.mrb[0].mxu0
      %v898 = vadd.f32 %v593, %v897
      %v899 = vpop.f32.mrb[0].mxu0
      %900 = vmatprep.mubr.bf16.mxu0 0
      %901 = vmatmul.mubr.bf16.gmra.mrb[0].mxu0 %v746
      %v902 = vpop.f32.mrb[0].mxu0
      %v903 = vadd.f32 %v598, %v902
      %v904 = vpop.f32.mrb[0].mxu0
      %v905 = vpop.f32.mrb[0].mxu0
      %v906 = vadd.f32 %v601, %v905
      %v907 = vpop.f32.mrb[0].mxu0
      %908 = vmatprep.mubr.bf16.mxu0 0
      %909 = vmatmul.mubr.bf16.gmra.mrb[0].mxu0 %v747
      %v910 = vpop.f32.mrb[0].mxu0
      %v911 = vadd.f32 %v606, %v910
      %v912 = vpop.f32.mrb[0].mxu0
      %v913 = vpop.f32.mrb[0].mxu0
      %v914 = vadd.f32 %v609, %v913
      %v915 = vpop.f32.mrb[0].mxu0
      %916 = vmatprep.mubr.bf16.mxu0 0
      %917 = vmatmul.mubr.bf16.gmra.mrb[0].mxu0 %v748
      %v918 = vpop.f32.mrb[0].mxu0
      %v919 = vadd.f32 %v614, %v918
      %v920 = vpop.f32.mrb[0].mxu0
      %v921 = vpop.f32.mrb[0].mxu0
      %v922 = vadd.f32 %v617, %v921
      %v923 = vpop.f32.mrb[0].mxu0
      %924 = vmatprep.mubr.bf16.mxu0 0
      %925 = vmatmul.mubr.bf16.gmra.mrb[0].mxu0 %v749
      %v926 = vpop.f32.mrb[0].mxu0
      %v927 = vadd.f32 %v622, %v926
      %v928 = vpop.f32.mrb[0].mxu0
      %v929 = vpop.f32.mrb[0].mxu0
      %v930 = vadd.f32 %v625, %v929
      %v931 = vpop.f32.mrb[0].mxu0
      %932 = vmatprep.mubr.bf16.mxu0 0
      %933 = vmatmul.mubr.bf16.gmra.mrb[0].mxu0 %v750
      %v934 = vpop.f32.mrb[0].mxu0
      %v935 = vadd.f32 %v630, %v934
      %v936 = vpop.f32.mrb[0].mxu0
      %v937 = vpop.f32.mrb[0].mxu0
      %v938 = vadd.f32 %v633, %v937
      %v939 = vpop.f32.mrb[0].mxu0
      %940 = vmatprep.mubr.bf16.mxu0 0
      %941 = vmatmul.mubr.bf16.gmra.mrb[0].mxu0 %v751
      %v942 = vpop.f32.mrb[0].mxu0
      %v943 = vadd.f32 %v638, %v942
      %v944 = vpop.f32.mrb[0].mxu0
      %v945 = vpop.f32.mrb[0].mxu0
      %v946 = vadd.f32 %v641, %v945
      %v947 = vpop.f32.mrb[0].mxu0
      %948 = vmatprep.mubr.bf16.mxu0 0
      %949 = vmatmul.mubr.bf16.gmra.mrb[0].mxu0 %v752
      %v950 = vpop.f32.mrb[0].mxu0
      %v951 = vadd.f32 %v646, %v950
      %v952 = vpop.f32.mrb[0].mxu0
      %v953 = vpop.f32.mrb[0].mxu0
      %v954 = vadd.f32 %v649, %v953
      %v955 = vpop.f32.mrb[0].mxu0
      %956 = vmatprep.mubr.bf16.mxu0 0
      %957 = vmatmul.mubr.bf16.gmra.mrb[0].mxu0 %v753
      %v958 = vpop.f32.mrb[0].mxu0
      %v959 = vadd.f32 %v654, %v958
      %v960 = vpop.f32.mrb[0].mxu0
      %v961 = vpop.f32.mrb[0].mxu0
      %v962 = vadd.f32 %v657, %v961
      %v963 = vpop.f32.mrb[0].mxu0
      %964 = vmatprep.mubr.bf16.mxu0 0
      %965 = vmatmul.mubr.bf16.gmra.mrb[0].mxu0 %v754
      %v966 = vpop.f32.mrb[0].mxu0
      %v967 = vadd.f32 %v662, %v966
      %v968 = vpop.f32.mrb[0].mxu0
      %v969 = vpop.f32.mrb[0].mxu0
      %v970 = vadd.f32 %v665, %v969
      %v971 = vpop.f32.mrb[0].mxu0
      %972 = vmatprep.mubr.bf16.mxu0 0
      %973 = vmatmul.mubr.bf16.gmra.mrb[0].mxu0 %v755
      %v974 = vpop.f32.mrb[0].mxu0
      %v975 = vadd.f32 %v670, %v974
      %v976 = vpop.f32.mrb[0].mxu0
      %v977 = vpop.f32.mrb[0].mxu0
      %v978 = vadd.f32 %v673, %v977
      %v979 = vpop.f32.mrb[0].mxu0
      %980 = vdwg.mxu0
      %v981 = vld [vmem:[%s266 + $0x8] sm:$0xf]
      %v982 = vld [vmem:[%s266 + $0xc] sm:$0xf]
      %v983 = vld [vmem:[%s266 + $0x10] sm:$0xf]
      %v984 = vld [vmem:[%s266 + $0x14] sm:$0xf]
      %v985 = vld [vmem:[%s266 + $0x18] sm:$0xf]
      %v986 = vld [vmem:[%s266 + $0x1c] sm:$0xf]
      %v987 = vld [vmem:[%s266 + $0x20] sm:$0xf]
      %v988 = vld [vmem:[%s266 + $0x24] sm:$0xf]
      %v989 = vld [vmem:[%s266 + $0x28] sm:$0xf]
      %v990 = vld [vmem:[%s266 + $0x2c] sm:$0xf]
      %v991 = vld [vmem:[%s266 + $0x30] sm:$0xf]
      %v992 = vld [vmem:[%s266 + $0x34] sm:$0xf]
      %v993 = vld [vmem:[%s266 + $0x38] sm:$0xf]
      %v994 = vld [vmem:[%s266 + $0x3c] sm:$0xf]
      %v995 = vld [vmem:[%s266 + $0x40] sm:$0xf]
      %v996 = vld [vmem:[%s266 + $0x44] sm:$0xf]
      %v997 = vld [vmem:[%s266 + $0x48] sm:$0xf]
      %v998 = vld [vmem:[%s266 + $0x4c] sm:$0xf]
      %v999 = vld [vmem:[%s266 + $0x50] sm:$0xf]
      %v1000 = vld [vmem:[%s266 + $0x54] sm:$0xf]
      %v1001 = vld [vmem:[%s266 + $0x58] sm:$0xf]
      %v1002 = vld [vmem:[%s266 + $0x5c] sm:$0xf]
      %v1003 = vld [vmem:[%s266 + $0x60] sm:$0xf]
      %v1004 = vld [vmem:[%s266 + $0x64] sm:$0xf]
      %v1005 = vld [vmem:[%s266 + $0x68] sm:$0xf]
      %v1006 = vld [vmem:[%s266 + $0x6c] sm:$0xf]
      %v1007 = vld [vmem:[%s266 + $0x70] sm:$0xf]
      %v1008 = vld [vmem:[%s266 + $0x74] sm:$0xf]
      %v1009 = vld [vmem:[%s266 + $0x78] sm:$0xf]
      %v1010 = vld [vmem:[%s266 + $0x7c] sm:$0xf]
      %v1011 = vld [vmem:[%s266 + $0x80] sm:$0xf]
      %v1012 = vld [vmem:[%s266 + $0x84] sm:$0xf]
      %s1013 = scalar_lea.vmem %s2, 128
      %v1014 = vld [vmem:[%s1013] sm:$0xf]
      %v1015 = vld [vmem:[%s1013 + $0x4] sm:$0xf]
      %v1016 = vld [vmem:[%s1013 + $0x8] sm:$0xf]
      %v1017 = vld [vmem:[%s1013 + $0xc] sm:$0xf]
      %v1018 = vld [vmem:[%s1013 + $0x10] sm:$0xf]
      %v1019 = vld [vmem:[%s1013 + $0x14] sm:$0xf]
      %v1020 = vld [vmem:[%s1013 + $0x18] sm:$0xf]
      %v1021 = vld [vmem:[%s1013 + $0x1c] sm:$0xf]
      %v1022 = vld [vmem:[%s1013 + $0x20] sm:$0xf]
      %v1023 = vld [vmem:[%s1013 + $0x24] sm:$0xf]
      %v1024 = vld [vmem:[%s1013 + $0x28] sm:$0xf]
      %v1025 = vld [vmem:[%s1013 + $0x2c] sm:$0xf]
      %v1026 = vld [vmem:[%s1013 + $0x30] sm:$0xf]
      %v1027 = vld [vmem:[%s1013 + $0x34] sm:$0xf]
      %v1028 = vld [vmem:[%s1013 + $0x38] sm:$0xf]
      %v1029 = vld [vmem:[%s1013 + $0x3c] sm:$0xf]
      %v1062 = vunpack.c.l.b16 %v981
      %v1063 = vunpack.c.l.b16 %v982
      %v1064 = vunpack.c.l.b16 %v983
      %v1065 = vunpack.c.l.b16 %v984
      %v1066 = vunpack.c.l.b16 %v985
      %v1067 = vunpack.c.l.b16 %v986
      %v1068 = vunpack.c.l.b16 %v987
      %v1069 = vunpack.c.l.b16 %v988
      %v1070 = vunpack.c.l.b16 %v989
      %v1071 = vunpack.c.l.b16 %v990
      %v1072 = vunpack.c.l.b16 %v991
      %v1073 = vunpack.c.l.b16 %v992
      %v1074 = vunpack.c.l.b16 %v993
      %v1075 = vunpack.c.l.b16 %v994
      %v1076 = vunpack.c.l.b16 %v995
      %v1077 = vunpack.c.l.b16 %v996
      %v1078 = vunpack.c.l.b16 %v997
      %v1079 = vunpack.c.l.b16 %v998
      %v1080 = vunpack.c.l.b16 %v999
      %v1081 = vunpack.c.l.b16 %v1000
      %v1082 = vunpack.c.l.b16 %v1001
      %v1083 = vunpack.c.l.b16 %v1002
      %v1084 = vunpack.c.l.b16 %v1003
      %v1085 = vunpack.c.l.b16 %v1004
      %v1086 = vunpack.c.l.b16 %v1005
      %v1087 = vunpack.c.l.b16 %v1006
      %v1088 = vunpack.c.l.b16 %v1007
      %v1089 = vunpack.c.l.b16 %v1008
      %v1090 = vunpack.c.l.b16 %v1009
      %v1091 = vunpack.c.l.b16 %v1010
      %v1092 = vunpack.c.l.b16 %v1011
      %v1093 = vunpack.c.l.b16 %v1012
      %v1094 = vpack.c.b16 %v1063, %v1062
      %v1095 = vpack.c.b16 %v1065, %v1064
      %v1096 = vpack.c.b16 %v1067, %v1066
      %v1097 = vpack.c.b16 %v1069, %v1068
      %v1098 = vpack.c.b16 %v1071, %v1070
      %v1099 = vpack.c.b16 %v1073, %v1072
      %v1100 = vpack.c.b16 %v1075, %v1074
      %v1101 = vpack.c.b16 %v1077, %v1076
      %v1102 = vpack.c.b16 %v1079, %v1078
      %v1103 = vpack.c.b16 %v1081, %v1080
      %v1104 = vpack.c.b16 %v1083, %v1082
      %v1105 = vpack.c.b16 %v1085, %v1084
      %v1106 = vpack.c.b16 %v1087, %v1086
      %v1107 = vpack.c.b16 %v1089, %v1088
      %v1108 = vpack.c.b16 %v1091, %v1090
      %v1109 = vpack.c.b16 %v1093, %v1092
      %v1142 = vunpack.c.l.b16 %v1014
      %v1143 = vunpack.c.l.b16 %v1015
      %v1144 = vunpack.c.l.b16 %v1016
      %v1145 = vunpack.c.l.b16 %v1017
      %v1146 = vunpack.c.l.b16 %v1018
      %v1147 = vunpack.c.l.b16 %v1019
      %v1148 = vunpack.c.l.b16 %v1020
      %v1149 = vunpack.c.l.b16 %v1021
      %v1150 = vunpack.c.l.b16 %v1022
      %v1151 = vunpack.c.l.b16 %v1023
      %v1152 = vunpack.c.l.b16 %v1024
      %v1153 = vunpack.c.l.b16 %v1025
      %v1154 = vunpack.c.l.b16 %v1026
      %v1155 = vunpack.c.l.b16 %v1027
      %v1156 = vunpack.c.l.b16 %v1028
      %v1157 = vunpack.c.l.b16 %v1029
      %v1158 = vpack.c.b16 %v1143, %v1142
      %v1159 = vpack.c.b16 %v1145, %v1144
      %v1160 = vpack.c.b16 %v1147, %v1146
      %v1161 = vpack.c.b16 %v1149, %v1148
      %v1162 = vpack.c.b16 %v1151, %v1150
      %v1163 = vpack.c.b16 %v1153, %v1152
      %v1164 = vpack.c.b16 %v1155, %v1154
      %v1165 = vpack.c.b16 %v1157, %v1156
      %1174 = vmatprep.subr.bf16.mxu0 0
      %1175 = vmatpush1.bf16.msra.mxu0 %v1158
      %1176 = vmatprep.subr.bf16.mxu0 0
      %1177 = vmatpush1.bf16.msra.mxu0 %v1159
      %1178 = vmatprep.subr.bf16.mxu0 0
      %1179 = vmatpush1.bf16.msra.mxu0 %v1160
      %1180 = vmatprep.subr.bf16.mxu0 0
      %1181 = vmatpush1.bf16.msra.mxu0 %v1161
      %1182 = vmatprep.subr.bf16.mxu0 0
      %1183 = vmatpush1.bf16.msra.mxu0 %v1162
      %1184 = vmatprep.subr.bf16.mxu0 0
      %1185 = vmatpush1.bf16.msra.mxu0 %v1163
      %1186 = vmatprep.subr.bf16.mxu0 0
      %1187 = vmatpush1.bf16.msra.mxu0 %v1164
      %1188 = vmatprep.subr.bf16.mxu0 0
      %1189 = vmatpush1.bf16.msra.mxu0 %v1165
      %1190 = vmatprep.subr.bf16.mxu0 0
      %1191 = vmatpush1.bf16.msra.mxu0 0
      %1192 = vmatprep.subr.bf16.mxu0 0
      %1193 = vmatpush1.bf16.msra.mxu0 0
      %1194 = vmatprep.subr.bf16.mxu0 0
      %1195 = vmatpush1.bf16.msra.mxu0 0
      %1196 = vmatprep.subr.bf16.mxu0 0
      %1197 = vmatpush1.bf16.msra.mxu0 0
      %1198 = vmatprep.subr.bf16.mxu0 0
      %1199 = vmatpush1.bf16.msra.mxu0 0
      %1200 = vmatprep.subr.bf16.mxu0 0
      %1201 = vmatpush1.bf16.msra.mxu0 0
      %1202 = vmatprep.subr.bf16.mxu0 0
      %1203 = vmatpush1.bf16.msra.mxu0 0
      %1204 = vmatprep.subr.bf16.mxu0 0
      %1205 = vmatpush1.bf16.msra.mxu0 0
      %1206 = vmatprep.mubr.bf16.mxu0 0
      %1207 = vmatmul.mubr.bf16.gmra.mrb[0].mxu0 %v1094
      %v1208 = vpop.f32.mrb[0].mxu0
      %v1209 = vadd.f32 0.0, %v1208
      %v1210 = vpop.f32.mrb[0].mxu0
      %v1211 = vpop.f32.mrb[0].mxu0
      %v1212 = vadd.f32 0.0, %v1211
      %v1213 = vpop.f32.mrb[0].mxu0
      %1214 = vmatprep.mubr.bf16.mxu0 0
      %1215 = vmatmul.mubr.bf16.gmra.mrb[0].mxu0 %v1095
      %v1216 = vpop.f32.mrb[0].mxu0
      %v1217 = vadd.f32 0.0, %v1216
      %v1218 = vpop.f32.mrb[0].mxu0
      %v1219 = vpop.f32.mrb[0].mxu0
      %v1220 = vadd.f32 0.0, %v1219
      %v1221 = vpop.f32.mrb[0].mxu0
      %1222 = vmatprep.mubr.bf16.mxu0 0
      %1223 = vmatmul.mubr.bf16.gmra.mrb[0].mxu0 %v1096
      %v1224 = vpop.f32.mrb[0].mxu0
      %v1225 = vadd.f32 0.0, %v1224
      %v1226 = vpop.f32.mrb[0].mxu0
      %v1227 = vpop.f32.mrb[0].mxu0
      %v1228 = vadd.f32 0.0, %v1227
      %v1229 = vpop.f32.mrb[0].mxu0
      %1230 = vmatprep.mubr.bf16.mxu0 0
      %1231 = vmatmul.mubr.bf16.gmra.mrb[0].mxu0 %v1097
      %v1232 = vpop.f32.mrb[0].mxu0
      %v1233 = vadd.f32 0.0, %v1232
      %v1234 = vpop.f32.mrb[0].mxu0
      %v1235 = vpop.f32.mrb[0].mxu0
      %v1236 = vadd.f32 0.0, %v1235
      %v1237 = vpop.f32.mrb[0].mxu0
      %1238 = vmatprep.mubr.bf16.mxu0 0
      %1239 = vmatmul.mubr.bf16.gmra.mrb[0].mxu0 %v1098
      %v1240 = vpop.f32.mrb[0].mxu0
      %v1241 = vadd.f32 0.0, %v1240
      %v1242 = vpop.f32.mrb[0].mxu0
      %v1243 = vpop.f32.mrb[0].mxu0
      %v1244 = vadd.f32 0.0, %v1243
      %v1245 = vpop.f32.mrb[0].mxu0
      %1246 = vmatprep.mubr.bf16.mxu0 0
      %1247 = vmatmul.mubr.bf16.gmra.mrb[0].mxu0 %v1099
      %v1248 = vpop.f32.mrb[0].mxu0
      %v1249 = vadd.f32 0.0, %v1248
      %v1250 = vpop.f32.mrb[0].mxu0
      %v1251 = vpop.f32.mrb[0].mxu0
      %v1252 = vadd.f32 0.0, %v1251
      %v1253 = vpop.f32.mrb[0].mxu0
      %1254 = vmatprep.mubr.bf16.mxu0 0
      %1255 = vmatmul.mubr.bf16.gmra.mrb[0].mxu0 %v1100
      %v1256 = vpop.f32.mrb[0].mxu0
      %v1257 = vadd.f32 0.0, %v1256
      %v1258 = vpop.f32.mrb[0].mxu0
      %v1259 = vpop.f32.mrb[0].mxu0
      %v1260 = vadd.f32 0.0, %v1259
      %v1261 = vpop.f32.mrb[0].mxu0
      %1262 = vmatprep.mubr.bf16.mxu0 0
      %1263 = vmatmul.mubr.bf16.gmra.mrb[0].mxu0 %v1101
      %v1264 = vpop.f32.mrb[0].mxu0
      %v1265 = vadd.f32 0.0, %v1264
      %v1266 = vpop.f32.mrb[0].mxu0
      %v1267 = vpop.f32.mrb[0].mxu0
      %v1268 = vadd.f32 0.0, %v1267
      %v1269 = vpop.f32.mrb[0].mxu0
      %1270 = vmatprep.mubr.bf16.mxu0 0
      %1271 = vmatmul.mubr.bf16.gmra.mrb[0].mxu0 %v1102
      %v1272 = vpop.f32.mrb[0].mxu0
      %v1273 = vadd.f32 0.0, %v1272
      %v1274 = vpop.f32.mrb[0].mxu0
      %v1275 = vpop.f32.mrb[0].mxu0
      %v1276 = vadd.f32 0.0, %v1275
      %v1277 = vpop.f32.mrb[0].mxu0
      %1278 = vmatprep.mubr.bf16.mxu0 0
      %1279 = vmatmul.mubr.bf16.gmra.mrb[0].mxu0 %v1103
      %v1280 = vpop.f32.mrb[0].mxu0
      %v1281 = vadd.f32 0.0, %v1280
      %v1282 = vpop.f32.mrb[0].mxu0
      %v1283 = vpop.f32.mrb[0].mxu0
      %v1284 = vadd.f32 0.0, %v1283
      %v1285 = vpop.f32.mrb[0].mxu0
      %1286 = vmatprep.mubr.bf16.mxu0 0
      %1287 = vmatmul.mubr.bf16.gmra.mrb[0].mxu0 %v1104
      %v1288 = vpop.f32.mrb[0].mxu0
      %v1289 = vadd.f32 0.0, %v1288
      %v1290 = vpop.f32.mrb[0].mxu0
      %v1291 = vpop.f32.mrb[0].mxu0
      %v1292 = vadd.f32 0.0, %v1291
      %v1293 = vpop.f32.mrb[0].mxu0
      %1294 = vmatprep.mubr.bf16.mxu0 0
      %1295 = vmatmul.mubr.bf16.gmra.mrb[0].mxu0 %v1105
      %v1296 = vpop.f32.mrb[0].mxu0
      %v1297 = vadd.f32 0.0, %v1296
      %v1298 = vpop.f32.mrb[0].mxu0
      %v1299 = vpop.f32.mrb[0].mxu0
      %v1300 = vadd.f32 0.0, %v1299
      %v1301 = vpop.f32.mrb[0].mxu0
      %1302 = vmatprep.mubr.bf16.mxu0 0
      %1303 = vmatmul.mubr.bf16.gmra.mrb[0].mxu0 %v1106
      %v1304 = vpop.f32.mrb[0].mxu0
      %v1305 = vadd.f32 0.0, %v1304
      %v1306 = vpop.f32.mrb[0].mxu0
      %v1307 = vpop.f32.mrb[0].mxu0
      %v1308 = vadd.f32 0.0, %v1307
      %v1309 = vpop.f32.mrb[0].mxu0
      %1310 = vmatprep.mubr.bf16.mxu0 0
      %1311 = vmatmul.mubr.bf16.gmra.mrb[0].mxu0 %v1107
      %v1312 = vpop.f32.mrb[0].mxu0
      %v1313 = vadd.f32 0.0, %v1312
      %v1314 = vpop.f32.mrb[0].mxu0
      %v1315 = vpop.f32.mrb[0].mxu0
      %v1316 = vadd.f32 0.0, %v1315
      %v1317 = vpop.f32.mrb[0].mxu0
      %1318 = vmatprep.mubr.bf16.mxu0 0
      %1319 = vmatmul.mubr.bf16.gmra.mrb[0].mxu0 %v1108
      %v1320 = vpop.f32.mrb[0].mxu0
      %v1321 = vadd.f32 0.0, %v1320
      %v1322 = vpop.f32.mrb[0].mxu0
      %v1323 = vpop.f32.mrb[0].mxu0
      %v1324 = vadd.f32 0.0, %v1323
      %v1325 = vpop.f32.mrb[0].mxu0
      %1326 = vmatprep.mubr.bf16.mxu0 0
      %1327 = vmatmul.mubr.bf16.gmra.mrb[0].mxu0 %v1109
      %v1328 = vpop.f32.mrb[0].mxu0
      %v1329 = vadd.f32 0.0, %v1328
      %v1330 = vpop.f32.mrb[0].mxu0
      %v1331 = vpop.f32.mrb[0].mxu0
      %v1332 = vadd.f32 0.0, %v1331
      %v1333 = vpop.f32.mrb[0].mxu0
      %1334 = vdwg.mxu0
      %v1335 = vadd.f32 %v855, %v1209
      %v1336 = vadd.f32 %v858, %v1212
      %v1337 = vadd.f32 %v863, %v1217
      %v1338 = vadd.f32 %v866, %v1220
      %v1339 = vadd.f32 %v871, %v1225
      %v1340 = vadd.f32 %v874, %v1228
      %v1341 = vadd.f32 %v879, %v1233
      %v1342 = vadd.f32 %v882, %v1236
      %v1343 = vadd.f32 %v887, %v1241
      %v1344 = vadd.f32 %v890, %v1244
      %v1345 = vadd.f32 %v895, %v1249
      %v1346 = vadd.f32 %v898, %v1252
      %v1347 = vadd.f32 %v903, %v1257
      %v1348 = vadd.f32 %v906, %v1260
      %v1349 = vadd.f32 %v911, %v1265
      %v1350 = vadd.f32 %v914, %v1268
      %v1351 = vadd.f32 %v919, %v1273
      %v1352 = vadd.f32 %v922, %v1276
      %v1353 = vadd.f32 %v927, %v1281
      %v1354 = vadd.f32 %v930, %v1284
      %v1355 = vadd.f32 %v935, %v1289
      %v1356 = vadd.f32 %v938, %v1292
      %v1357 = vadd.f32 %v943, %v1297
      %v1358 = vadd.f32 %v946, %v1300
      %v1359 = vadd.f32 %v951, %v1305
      %v1360 = vadd.f32 %v954, %v1308
      %v1361 = vadd.f32 %v959, %v1313
      %v1362 = vadd.f32 %v962, %v1316
      %v1363 = vadd.f32 %v967, %v1321
      %v1364 = vadd.f32 %v970, %v1324
      %v1365 = vadd.f32 %v975, %v1329
      %v1366 = vadd.f32 %v978, %v1332
      %v1367 = vld [vmem:[%s3] sm:$0x1]
      %v1368 = vlaneseq
      %v1369 = vshrl.u32 %v1368, 7
      %v1370 = vsub.s32 0, %v1369
      %v1371 = vrot.slane %v1367, %v1370
      %v1372 = vadd.f32 %v1335, %v1371
      %v1373 = vadd.f32 %v1336, %v1371
      %v1374 = vadd.f32 %v1337, %v1371
      %v1375 = vadd.f32 %v1338, %v1371
      %v1376 = vadd.f32 %v1339, %v1371
      %v1377 = vadd.f32 %v1340, %v1371
      %v1378 = vadd.f32 %v1341, %v1371
      %v1379 = vadd.f32 %v1342, %v1371
      %v1380 = vadd.f32 %v1343, %v1371
      %v1381 = vadd.f32 %v1344, %v1371
      %v1382 = vadd.f32 %v1345, %v1371
      %v1383 = vadd.f32 %v1346, %v1371
      %v1384 = vadd.f32 %v1347, %v1371
      %v1385 = vadd.f32 %v1348, %v1371
      %v1386 = vadd.f32 %v1349, %v1371
      %v1387 = vadd.f32 %v1350, %v1371
      %v1388 = vadd.f32 %v1351, %v1371
      %v1389 = vadd.f32 %v1352, %v1371
      %v1390 = vadd.f32 %v1353, %v1371
      %v1391 = vadd.f32 %v1354, %v1371
      %v1392 = vadd.f32 %v1355, %v1371
      %v1393 = vadd.f32 %v1356, %v1371
      %v1394 = vadd.f32 %v1357, %v1371
      %v1395 = vadd.f32 %v1358, %v1371
      %v1396 = vadd.f32 %v1359, %v1371
      %v1397 = vadd.f32 %v1360, %v1371
      %v1398 = vadd.f32 %v1361, %v1371
      %v1399 = vadd.f32 %v1362, %v1371
      %v1400 = vadd.f32 %v1363, %v1371
      %v1401 = vadd.f32 %v1364, %v1371
      %v1402 = vadd.f32 %v1365, %v1371
      %v1403 = vadd.f32 %v1366, %v1371
      %v1404 = vmax.f32 %v1372, 0.0
      %v1405 = vmax.f32 %v1373, 0.0
      %v1406 = vmax.f32 %v1374, 0.0
      %v1407 = vmax.f32 %v1375, 0.0
      %v1408 = vmax.f32 %v1376, 0.0
      %v1409 = vmax.f32 %v1377, 0.0
      %v1410 = vmax.f32 %v1378, 0.0
      %v1411 = vmax.f32 %v1379, 0.0
      %v1412 = vmax.f32 %v1380, 0.0
      %v1413 = vmax.f32 %v1381, 0.0
      %v1414 = vmax.f32 %v1382, 0.0
      %v1415 = vmax.f32 %v1383, 0.0
      %v1416 = vmax.f32 %v1384, 0.0
      %v1417 = vmax.f32 %v1385, 0.0
      %v1418 = vmax.f32 %v1386, 0.0
      %v1419 = vmax.f32 %v1387, 0.0
      %v1420 = vmax.f32 %v1388, 0.0
      %v1421 = vmax.f32 %v1389, 0.0
      %v1422 = vmax.f32 %v1390, 0.0
      %v1423 = vmax.f32 %v1391, 0.0
      %v1424 = vmax.f32 %v1392, 0.0
      %v1425 = vmax.f32 %v1393, 0.0
      %v1426 = vmax.f32 %v1394, 0.0
      %v1427 = vmax.f32 %v1395, 0.0
      %v1428 = vmax.f32 %v1396, 0.0
      %v1429 = vmax.f32 %v1397, 0.0
      %v1430 = vmax.f32 %v1398, 0.0
      %v1431 = vmax.f32 %v1399, 0.0
      %v1432 = vmax.f32 %v1400, 0.0
      %v1433 = vmax.f32 %v1401, 0.0
      %v1434 = vmax.f32 %v1402, 0.0
      %v1435 = vmax.f32 %v1403, 0.0
      %v1436 = vpack.c.bf16 %v1405, %v1404
      %v1437 = vpack.c.bf16 %v1407, %v1406
      %v1438 = vpack.c.bf16 %v1409, %v1408
      %v1439 = vpack.c.bf16 %v1411, %v1410
      %v1440 = vpack.c.bf16 %v1413, %v1412
      %v1441 = vpack.c.bf16 %v1415, %v1414
      %v1442 = vpack.c.bf16 %v1417, %v1416
      %v1443 = vpack.c.bf16 %v1419, %v1418
      %v1444 = vpack.c.bf16 %v1421, %v1420
      %v1445 = vpack.c.bf16 %v1423, %v1422
      %v1446 = vpack.c.bf16 %v1425, %v1424
      %v1447 = vpack.c.bf16 %v1427, %v1426
      %v1448 = vpack.c.bf16 %v1429, %v1428
      %v1449 = vpack.c.bf16 %v1431, %v1430
      %v1450 = vpack.c.bf16 %v1433, %v1432
      %v1451 = vpack.c.bf16 %v1435, %v1434
      %1452 = vst [vmem:[#allocation3] sm:$0xff] 0
      %1453 = vst [vmem:[#allocation2] sm:$0xff] %v1436
      %1454 = vst [vmem:[#allocation3 + $0x8] sm:$0xff] %v1437
      %1455 = vst [vmem:[#allocation2 + $0x8] sm:$0xff] %v1438
      %1456 = vst [vmem:[#allocation3 + $0x10] sm:$0xff] %v1439
      %1457 = vst [vmem:[#allocation2 + $0x10] sm:$0xff] %v1440
      %1458 = vst [vmem:[#allocation3 + $0x18] sm:$0xff] %v1441
      %1459 = vst [vmem:[#allocation2 + $0x18] sm:$0xff] %v1442
      %1460 = vst [vmem:[#allocation3 + $0x20] sm:$0xff] %v1443
      %1461 = vst [vmem:[#allocation2 + $0x20] sm:$0xff] %v1444
      %1462 = vst [vmem:[#allocation3 + $0x28] sm:$0xff] %v1445
      %1463 = vst [vmem:[#allocation2 + $0x28] sm:$0xff] %v1446
      %1464 = vst [vmem:[#allocation3 + $0x30] sm:$0xff] %v1447
      %1465 = vst [vmem:[#allocation2 + $0x30] sm:$0xff] %v1448
      %1466 = vst [vmem:[#allocation3 + $0x38] sm:$0xff] %v1449
      %1467 = vst [vmem:[#allocation2 + $0x38] sm:$0xff] %v1450
      %1468 = vst [vmem:[#allocation3 + $0x40] sm:$0xff] %v1451
      %v1469 = vld [vmem:[#allocation3] sm:$0xff]
      %v1470 = vld [vmem:[#allocation3 + $0x8] sm:$0xff]
      %v1471 = vld [vmem:[#allocation3 + $0x10] sm:$0xff]
      %v1472 = vld [vmem:[#allocation3 + $0x18] sm:$0xff]
      %v1473 = vld [vmem:[#allocation3 + $0x20] sm:$0xff]
      %v1474 = vld [vmem:[#allocation3 + $0x28] sm:$0xff]
      %v1475 = vld [vmem:[#allocation3 + $0x30] sm:$0xff]
      %v1476 = vld [vmem:[#allocation3 + $0x38] sm:$0xff]
      %s1477 = scalar_lea.vmem %s2, 192
      %v1478 = vld [vmem:[%s1477] sm:$0xf]
      %v1479 = vld [vmem:[%s1477 + $0x4] sm:$0xf]
      %v1480 = vld [vmem:[%s1477 + $0x8] sm:$0xf]
      %v1481 = vld [vmem:[%s1477 + $0xc] sm:$0xf]
      %v1482 = vld [vmem:[%s1477 + $0x10] sm:$0xf]
      %v1483 = vld [vmem:[%s1477 + $0x14] sm:$0xf]
      %v1484 = vld [vmem:[%s1477 + $0x18] sm:$0xf]
      %v1485 = vld [vmem:[%s1477 + $0x1c] sm:$0xf]
      %v1486 = vld [vmem:[%s1477 + $0x20] sm:$0xf]
      %v1487 = vld [vmem:[%s1477 + $0x24] sm:$0xf]
      %v1488 = vld [vmem:[%s1477 + $0x28] sm:$0xf]
      %v1489 = vld [vmem:[%s1477 + $0x2c] sm:$0xf]
      %v1490 = vld [vmem:[%s1477 + $0x30] sm:$0xf]
      %v1491 = vld [vmem:[%s1477 + $0x34] sm:$0xf]
      %v1492 = vld [vmem:[%s1477 + $0x38] sm:$0xf]
      %v1493 = vld [vmem:[%s1477 + $0x3c] sm:$0xf]
      %v1494 = vld [vmem:[#allocation2] sm:$0xff]
      %v1495 = vld [vmem:[#allocation2 + $0x8] sm:$0xff]
      %v1496 = vld [vmem:[#allocation2 + $0x10] sm:$0xff]
      %v1497 = vld [vmem:[#allocation2 + $0x18] sm:$0xff]
      %v1498 = vld [vmem:[#allocation2 + $0x20] sm:$0xff]
      %v1499 = vld [vmem:[#allocation2 + $0x28] sm:$0xff]
      %v1500 = vld [vmem:[#allocation2 + $0x30] sm:$0xff]
      %v1501 = vld [vmem:[#allocation2 + $0x38] sm:$0xff]
      %s1502 = scalar_lea.vmem %s2, 256
      %v1503 = vld [vmem:[%s1502] sm:$0xf]
      %v1504 = vld [vmem:[%s1502 + $0x4] sm:$0xf]
      %v1505 = vld [vmem:[%s1502 + $0x8] sm:$0xf]
      %v1506 = vld [vmem:[%s1502 + $0xc] sm:$0xf]
      %v1507 = vld [vmem:[%s1502 + $0x10] sm:$0xf]
      %v1508 = vld [vmem:[%s1502 + $0x14] sm:$0xf]
      %v1509 = vld [vmem:[%s1502 + $0x18] sm:$0xf]
      %v1510 = vld [vmem:[%s1502 + $0x1c] sm:$0xf]
      %v1511 = vld [vmem:[%s1502 + $0x20] sm:$0xf]
      %v1512 = vld [vmem:[%s1502 + $0x24] sm:$0xf]
      %v1513 = vld [vmem:[%s1502 + $0x28] sm:$0xf]
      %v1514 = vld [vmem:[%s1502 + $0x2c] sm:$0xf]
      %v1515 = vld [vmem:[%s1502 + $0x30] sm:$0xf]
      %v1516 = vld [vmem:[%s1502 + $0x34] sm:$0xf]
      %v1517 = vld [vmem:[%s1502 + $0x38] sm:$0xf]
      %v1518 = vld [vmem:[%s1502 + $0x3c] sm:$0xf]
      %v1535 = vunpack.c.l.b16 %v1503
      %v1536 = vunpack.c.l.b16 %v1504
      %v1537 = vunpack.c.l.b16 %v1505
      %v1538 = vunpack.c.l.b16 %v1506
      %v1539 = vunpack.c.l.b16 %v1507
      %v1540 = vunpack.c.l.b16 %v1508
      %v1541 = vunpack.c.l.b16 %v1509
      %v1542 = vunpack.c.l.b16 %v1510
      %v1543 = vunpack.c.l.b16 %v1511
      %v1544 = vunpack.c.l.b16 %v1512
      %v1545 = vunpack.c.l.b16 %v1513
      %v1546 = vunpack.c.l.b16 %v1514
      %v1547 = vunpack.c.l.b16 %v1515
      %v1548 = vunpack.c.l.b16 %v1516
      %v1549 = vunpack.c.l.b16 %v1517
      %v1550 = vunpack.c.l.b16 %v1518
      %v1551 = vpack.c.b16 %v1536, %v1535
      %v1552 = vpack.c.b16 %v1538, %v1537
      %v1553 = vpack.c.b16 %v1540, %v1539
      %v1554 = vpack.c.b16 %v1542, %v1541
      %v1555 = vpack.c.b16 %v1544, %v1543
      %v1556 = vpack.c.b16 %v1546, %v1545
      %v1557 = vpack.c.b16 %v1548, %v1547
      %v1558 = vpack.c.b16 %v1550, %v1549
      %1567 = vmatprep.subr.bf16.mxu0 0
      %1568 = vmatpush1.bf16.msra.mxu0 %v1551
      %1569 = vmatprep.subr.bf16.mxu0 0
      %1570 = vmatpush1.bf16.msra.mxu0 %v1552
      %1571 = vmatprep.subr.bf16.mxu0 0
      %1572 = vmatpush1.bf16.msra.mxu0 %v1553
      %1573 = vmatprep.subr.bf16.mxu0 0
      %1574 = vmatpush1.bf16.msra.mxu0 %v1554
      %1575 = vmatprep.subr.bf16.mxu0 0
      %1576 = vmatpush1.bf16.msra.mxu0 %v1555
      %1577 = vmatprep.subr.bf16.mxu0 0
      %1578 = vmatpush1.bf16.msra.mxu0 %v1556
      %1579 = vmatprep.subr.bf16.mxu0 0
      %1580 = vmatpush1.bf16.msra.mxu0 %v1557
      %1581 = vmatprep.subr.bf16.mxu0 0
      %1582 = vmatpush1.bf16.msra.mxu0 %v1558
      %1583 = vmatprep.subr.bf16.mxu0 0
      %1584 = vmatpush1.bf16.msra.mxu0 0
      %1585 = vmatprep.subr.bf16.mxu0 0
      %1586 = vmatpush1.bf16.msra.mxu0 0
      %1587 = vmatprep.subr.bf16.mxu0 0
      %1588 = vmatpush1.bf16.msra.mxu0 0
      %1589 = vmatprep.subr.bf16.mxu0 0
      %1590 = vmatpush1.bf16.msra.mxu0 0
      %1591 = vmatprep.subr.bf16.mxu0 0
      %1592 = vmatpush1.bf16.msra.mxu0 0
      %1593 = vmatprep.subr.bf16.mxu0 0
      %1594 = vmatpush1.bf16.msra.mxu0 0
      %1595 = vmatprep.subr.bf16.mxu0 0
      %1596 = vmatpush1.bf16.msra.mxu0 0
      %1597 = vmatprep.subr.bf16.mxu0 0
      %1598 = vmatpush1.bf16.msra.mxu0 0
      %1599 = vmatprep.mubr.bf16.mxu0 0
      %1600 = vmatmul.mubr.bf16.gmra.mrb[0].mxu0 %v1494
      %v1601 = vpop.f32.mrb[0].mxu0
      %v1602 = vadd.f32 0.0, %v1601
      %v1603 = vpop.f32.mrb[0].mxu0
      %v1604 = vpop.f32.mrb[0].mxu0
      %v1605 = vadd.f32 0.0, %v1604
      %v1606 = vpop.f32.mrb[0].mxu0
      %1607 = vmatprep.mubr.bf16.mxu0 0
      %1608 = vmatmul.mubr.bf16.gmra.mrb[0].mxu0 %v1495
      %v1609 = vpop.f32.mrb[0].mxu0
      %v1610 = vadd.f32 0.0, %v1609
      %v1611 = vpop.f32.mrb[0].mxu0
      %v1612 = vpop.f32.mrb[0].mxu0
      %v1613 = vadd.f32 0.0, %v1612
      %v1614 = vpop.f32.mrb[0].mxu0
      %1615 = vmatprep.mubr.bf16.mxu0 0
      %1616 = vmatmul.mubr.bf16.gmra.mrb[0].mxu0 %v1496
      %v1617 = vpop.f32.mrb[0].mxu0
      %v1618 = vadd.f32 0.0, %v1617
      %v1619 = vpop.f32.mrb[0].mxu0
      %v1620 = vpop.f32.mrb[0].mxu0
      %v1621 = vadd.f32 0.0, %v1620
      %v1622 = vpop.f32.mrb[0].mxu0
      %1623 = vmatprep.mubr.bf16.mxu0 0
      %1624 = vmatmul.mubr.bf16.gmra.mrb[0].mxu0 %v1497
      %v1625 = vpop.f32.mrb[0].mxu0
      %v1626 = vadd.f32 0.0, %v1625
      %v1627 = vpop.f32.mrb[0].mxu0
      %v1628 = vpop.f32.mrb[0].mxu0
      %v1629 = vadd.f32 0.0, %v1628
      %v1630 = vpop.f32.mrb[0].mxu0
      %1631 = vmatprep.mubr.bf16.mxu0 0
      %1632 = vmatmul.mubr.bf16.gmra.mrb[0].mxu0 %v1498
      %v1633 = vpop.f32.mrb[0].mxu0
      %v1634 = vadd.f32 0.0, %v1633
      %v1635 = vpop.f32.mrb[0].mxu0
      %v1636 = vpop.f32.mrb[0].mxu0
      %v1637 = vadd.f32 0.0, %v1636
      %v1638 = vpop.f32.mrb[0].mxu0
      %1639 = vmatprep.mubr.bf16.mxu0 0
      %1640 = vmatmul.mubr.bf16.gmra.mrb[0].mxu0 %v1499
      %v1641 = vpop.f32.mrb[0].mxu0
      %v1642 = vadd.f32 0.0, %v1641
      %v1643 = vpop.f32.mrb[0].mxu0
      %v1644 = vpop.f32.mrb[0].mxu0
      %v1645 = vadd.f32 0.0, %v1644
      %v1646 = vpop.f32.mrb[0].mxu0
      %1647 = vmatprep.mubr.bf16.mxu0 0
      %1648 = vmatmul.mubr.bf16.gmra.mrb[0].mxu0 %v1500
      %v1649 = vpop.f32.mrb[0].mxu0
      %v1650 = vadd.f32 0.0, %v1649
      %v1651 = vpop.f32.mrb[0].mxu0
      %v1652 = vpop.f32.mrb[0].mxu0
      %v1653 = vadd.f32 0.0, %v1652
      %v1654 = vpop.f32.mrb[0].mxu0
      %1655 = vmatprep.mubr.bf16.mxu0 0
      %1656 = vmatmul.mubr.bf16.gmra.mrb[0].mxu0 %v1501
      %v1657 = vpop.f32.mrb[0].mxu0
      %v1658 = vadd.f32 0.0, %v1657
      %v1659 = vpop.f32.mrb[0].mxu0
      %v1660 = vpop.f32.mrb[0].mxu0
      %v1661 = vadd.f32 0.0, %v1660
      %v1662 = vpop.f32.mrb[0].mxu0
      %1663 = vdwg.mxu0
      %v1680 = vunpack.c.l.b16 %v1478
      %v1681 = vunpack.c.l.b16 %v1479
      %v1682 = vunpack.c.l.b16 %v1480
      %v1683 = vunpack.c.l.b16 %v1481
      %v1684 = vunpack.c.l.b16 %v1482
      %v1685 = vunpack.c.l.b16 %v1483
      %v1686 = vunpack.c.l.b16 %v1484
      %v1687 = vunpack.c.l.b16 %v1485
      %v1688 = vunpack.c.l.b16 %v1486
      %v1689 = vunpack.c.l.b16 %v1487
      %v1690 = vunpack.c.l.b16 %v1488
      %v1691 = vunpack.c.l.b16 %v1489
      %v1692 = vunpack.c.l.b16 %v1490
      %v1693 = vunpack.c.l.b16 %v1491
      %v1694 = vunpack.c.l.b16 %v1492
      %v1695 = vunpack.c.l.b16 %v1493
      %v1696 = vpack.c.b16 %v1681, %v1680
      %v1697 = vpack.c.b16 %v1683, %v1682
      %v1698 = vpack.c.b16 %v1685, %v1684
      %v1699 = vpack.c.b16 %v1687, %v1686
      %v1700 = vpack.c.b16 %v1689, %v1688
      %v1701 = vpack.c.b16 %v1691, %v1690
      %v1702 = vpack.c.b16 %v1693, %v1692
      %v1703 = vpack.c.b16 %v1695, %v1694
      %1712 = vmatprep.subr.bf16.mxu0 0
      %1713 = vmatpush1.bf16.msra.mxu0 %v1696
      %1714 = vmatprep.subr.bf16.mxu0 0
      %1715 = vmatpush1.bf16.msra.mxu0 %v1697
      %1716 = vmatprep.subr.bf16.mxu0 0
      %1717 = vmatpush1.bf16.msra.mxu0 %v1698
      %1718 = vmatprep.subr.bf16.mxu0 0
      %1719 = vmatpush1.bf16.msra.mxu0 %v1699
      %1720 = vmatprep.subr.bf16.mxu0 0
      %1721 = vmatpush1.bf16.msra.mxu0 %v1700
      %1722 = vmatprep.subr.bf16.mxu0 0
      %1723 = vmatpush1.bf16.msra.mxu0 %v1701
      %1724 = vmatprep.subr.bf16.mxu0 0
      %1725 = vmatpush1.bf16.msra.mxu0 %v1702
      %1726 = vmatprep.subr.bf16.mxu0 0
      %1727 = vmatpush1.bf16.msra.mxu0 %v1703
      %1728 = vmatprep.subr.bf16.mxu0 0
      %1729 = vmatpush1.bf16.msra.mxu0 0
      %1730 = vmatprep.subr.bf16.mxu0 0
      %1731 = vmatpush1.bf16.msra.mxu0 0
      %1732 = vmatprep.subr.bf16.mxu0 0
      %1733 = vmatpush1.bf16.msra.mxu0 0
      %1734 = vmatprep.subr.bf16.mxu0 0
      %1735 = vmatpush1.bf16.msra.mxu0 0
      %1736 = vmatprep.subr.bf16.mxu0 0
      %1737 = vmatpush1.bf16.msra.mxu0 0
      %1738 = vmatprep.subr.bf16.mxu0 0
      %1739 = vmatpush1.bf16.msra.mxu0 0
      %1740 = vmatprep.subr.bf16.mxu0 0
      %1741 = vmatpush1.bf16.msra.mxu0 0
      %1742 = vmatprep.subr.bf16.mxu0 0
      %1743 = vmatpush1.bf16.msra.mxu0 0
      %1744 = vmatprep.mubr.bf16.mxu0 0
      %1745 = vmatmul.mubr.bf16.gmra.mrb[0].mxu0 %v1469
      %v1746 = vpop.f32.mrb[0].mxu0
      %v1747 = vadd.f32 %v1602, %v1746
      %v1748 = vpop.f32.mrb[0].mxu0
      %v1749 = vpop.f32.mrb[0].mxu0
      %v1750 = vadd.f32 %v1605, %v1749
      %v1751 = vpop.f32.mrb[0].mxu0
      %1752 = vmatprep.mubr.bf16.mxu0 0
      %1753 = vmatmul.mubr.bf16.gmra.mrb[0].mxu0 %v1470
      %v1754 = vpop.f32.mrb[0].mxu0
      %v1755 = vadd.f32 %v1610, %v1754
      %v1756 = vpop.f32.mrb[0].mxu0
      %v1757 = vpop.f32.mrb[0].mxu0
      %v1758 = vadd.f32 %v1613, %v1757
      %v1759 = vpop.f32.mrb[0].mxu0
      %1760 = vmatprep.mubr.bf16.mxu0 0
      %1761 = vmatmul.mubr.bf16.gmra.mrb[0].mxu0 %v1471
      %v1762 = vpop.f32.mrb[0].mxu0
      %v1763 = vadd.f32 %v1618, %v1762
      %v1764 = vpop.f32.mrb[0].mxu0
      %v1765 = vpop.f32.mrb[0].mxu0
      %v1766 = vadd.f32 %v1621, %v1765
      %v1767 = vpop.f32.mrb[0].mxu0
      %1768 = vmatprep.mubr.bf16.mxu0 0
      %1769 = vmatmul.mubr.bf16.gmra.mrb[0].mxu0 %v1472
      %v1770 = vpop.f32.mrb[0].mxu0
      %v1771 = vadd.f32 %v1626, %v1770
      %v1772 = vpop.f32.mrb[0].mxu0
      %v1773 = vpop.f32.mrb[0].mxu0
      %v1774 = vadd.f32 %v1629, %v1773
      %v1775 = vpop.f32.mrb[0].mxu0
      %1776 = vmatprep.mubr.bf16.mxu0 0
      %1777 = vmatmul.mubr.bf16.gmra.mrb[0].mxu0 %v1473
      %v1778 = vpop.f32.mrb[0].mxu0
      %v1779 = vadd.f32 %v1634, %v1778
      %v1780 = vpop.f32.mrb[0].mxu0
      %v1781 = vpop.f32.mrb[0].mxu0
      %v1782 = vadd.f32 %v1637, %v1781
      %v1783 = vpop.f32.mrb[0].mxu0
      %1784 = vmatprep.mubr.bf16.mxu0 0
      %1785 = vmatmul.mubr.bf16.gmra.mrb[0].mxu0 %v1474
      %v1786 = vpop.f32.mrb[0].mxu0
      %v1787 = vadd.f32 %v1642, %v1786
      %v1788 = vpop.f32.mrb[0].mxu0
      %v1789 = vpop.f32.mrb[0].mxu0
      %v1790 = vadd.f32 %v1645, %v1789
      %v1791 = vpop.f32.mrb[0].mxu0
      %1792 = vmatprep.mubr.bf16.mxu0 0
      %1793 = vmatmul.mubr.bf16.gmra.mrb[0].mxu0 %v1475
      %v1794 = vpop.f32.mrb[0].mxu0
      %v1795 = vadd.f32 %v1650, %v1794
      %v1796 = vpop.f32.mrb[0].mxu0
      %v1797 = vpop.f32.mrb[0].mxu0
      %v1798 = vadd.f32 %v1653, %v1797
      %v1799 = vpop.f32.mrb[0].mxu0
      %1800 = vmatprep.mubr.bf16.mxu0 0
      %1801 = vmatmul.mubr.bf16.gmra.mrb[0].mxu0 %v1476
      %v1802 = vpop.f32.mrb[0].mxu0
      %v1803 = vadd.f32 %v1658, %v1802
      %v1804 = vpop.f32.mrb[0].mxu0
      %v1805 = vpop.f32.mrb[0].mxu0
      %v1806 = vadd.f32 %v1661, %v1805
      %v1807 = vpop.f32.mrb[0].mxu0
      %1808 = vdwg.mxu0
      %v1809 = vld [vmem:[#allocation3 + $0x8] sm:$0xff]
      %v1810 = vld [vmem:[#allocation3 + $0x10] sm:$0xff]
      %v1811 = vld [vmem:[#allocation3 + $0x18] sm:$0xff]
      %v1812 = vld [vmem:[#allocation3 + $0x20] sm:$0xff]
      %v1813 = vld [vmem:[#allocation3 + $0x28] sm:$0xff]
      %v1814 = vld [vmem:[#allocation3 + $0x30] sm:$0xff]
      %v1815 = vld [vmem:[#allocation3 + $0x38] sm:$0xff]
      %v1816 = vld [vmem:[#allocation3 + $0x40] sm:$0xff]
      %s1817 = scalar_lea.vmem %s2, 320
      %v1818 = vld [vmem:[%s1817] sm:$0xf]
      %v1819 = vld [vmem:[%s1817 + $0x4] sm:$0xf]
      %v1820 = vld [vmem:[%s1817 + $0x8] sm:$0xf]
      %v1821 = vld [vmem:[%s1817 + $0xc] sm:$0xf]
      %v1822 = vld [vmem:[%s1817 + $0x10] sm:$0xf]
      %v1823 = vld [vmem:[%s1817 + $0x14] sm:$0xf]
      %v1824 = vld [vmem:[%s1817 + $0x18] sm:$0xf]
      %v1825 = vld [vmem:[%s1817 + $0x1c] sm:$0xf]
      %v1826 = vld [vmem:[%s1817 + $0x20] sm:$0xf]
      %v1827 = vld [vmem:[%s1817 + $0x24] sm:$0xf]
      %v1828 = vld [vmem:[%s1817 + $0x28] sm:$0xf]
      %v1829 = vld [vmem:[%s1817 + $0x2c] sm:$0xf]
      %v1830 = vld [vmem:[%s1817 + $0x30] sm:$0xf]
      %v1831 = vld [vmem:[%s1817 + $0x34] sm:$0xf]
      %v1832 = vld [vmem:[%s1817 + $0x38] sm:$0xf]
      %v1833 = vld [vmem:[%s1817 + $0x3c] sm:$0xf]
      %v1850 = vunpack.c.l.b16 %v1818
      %v1851 = vunpack.c.l.b16 %v1819
      %v1852 = vunpack.c.l.b16 %v1820
      %v1853 = vunpack.c.l.b16 %v1821
      %v1854 = vunpack.c.l.b16 %v1822
      %v1855 = vunpack.c.l.b16 %v1823
      %v1856 = vunpack.c.l.b16 %v1824
      %v1857 = vunpack.c.l.b16 %v1825
      %v1858 = vunpack.c.l.b16 %v1826
      %v1859 = vunpack.c.l.b16 %v1827
      %v1860 = vunpack.c.l.b16 %v1828
      %v1861 = vunpack.c.l.b16 %v1829
      %v1862 = vunpack.c.l.b16 %v1830
      %v1863 = vunpack.c.l.b16 %v1831
      %v1864 = vunpack.c.l.b16 %v1832
      %v1865 = vunpack.c.l.b16 %v1833
      %v1866 = vpack.c.b16 %v1851, %v1850
      %v1867 = vpack.c.b16 %v1853, %v1852
      %v1868 = vpack.c.b16 %v1855, %v1854
      %v1869 = vpack.c.b16 %v1857, %v1856
      %v1870 = vpack.c.b16 %v1859, %v1858
      %v1871 = vpack.c.b16 %v1861, %v1860
      %v1872 = vpack.c.b16 %v1863, %v1862
      %v1873 = vpack.c.b16 %v1865, %v1864
      %1882 = vmatprep.subr.bf16.mxu0 0
      %1883 = vmatpush1.bf16.msra.mxu0 %v1866
      %1884 = vmatprep.subr.bf16.mxu0 0
      %1885 = vmatpush1.bf16.msra.mxu0 %v1867
      %1886 = vmatprep.subr.bf16.mxu0 0
      %1887 = vmatpush1.bf16.msra.mxu0 %v1868
      %1888 = vmatprep.subr.bf16.mxu0 0
      %1889 = vmatpush1.bf16.msra.mxu0 %v1869
      %1890 = vmatprep.subr.bf16.mxu0 0
      %1891 = vmatpush1.bf16.msra.mxu0 %v1870
      %1892 = vmatprep.subr.bf16.mxu0 0
      %1893 = vmatpush1.bf16.msra.mxu0 %v1871
      %1894 = vmatprep.subr.bf16.mxu0 0
      %1895 = vmatpush1.bf16.msra.mxu0 %v1872
      %1896 = vmatprep.subr.bf16.mxu0 0
      %1897 = vmatpush1.bf16.msra.mxu0 %v1873
      %1898 = vmatprep.subr.bf16.mxu0 0
      %1899 = vmatpush1.bf16.msra.mxu0 0
      %1900 = vmatprep.subr.bf16.mxu0 0
      %1901 = vmatpush1.bf16.msra.mxu0 0
      %1902 = vmatprep.subr.bf16.mxu0 0
      %1903 = vmatpush1.bf16.msra.mxu0 0
      %1904 = vmatprep.subr.bf16.mxu0 0
      %1905 = vmatpush1.bf16.msra.mxu0 0
      %1906 = vmatprep.subr.bf16.mxu0 0
      %1907 = vmatpush1.bf16.msra.mxu0 0
      %1908 = vmatprep.subr.bf16.mxu0 0
      %1909 = vmatpush1.bf16.msra.mxu0 0
      %1910 = vmatprep.subr.bf16.mxu0 0
      %1911 = vmatpush1.bf16.msra.mxu0 0
      %1912 = vmatprep.subr.bf16.mxu0 0
      %1913 = vmatpush1.bf16.msra.mxu0 0
      %1914 = vmatprep.mubr.bf16.mxu0 0
      %1915 = vmatmul.mubr.bf16.gmra.mrb[0].mxu0 %v1809
      %v1916 = vpop.f32.mrb[0].mxu0
      %v1917 = vadd.f32 0.0, %v1916
      %v1918 = vpop.f32.mrb[0].mxu0
      %v1919 = vpop.f32.mrb[0].mxu0
      %v1920 = vadd.f32 0.0, %v1919
      %v1921 = vpop.f32.mrb[0].mxu0
      %1922 = vmatprep.mubr.bf16.mxu0 0
      %1923 = vmatmul.mubr.bf16.gmra.mrb[0].mxu0 %v1810
      %v1924 = vpop.f32.mrb[0].mxu0
      %v1925 = vadd.f32 0.0, %v1924
      %v1926 = vpop.f32.mrb[0].mxu0
      %v1927 = vpop.f32.mrb[0].mxu0
      %v1928 = vadd.f32 0.0, %v1927
      %v1929 = vpop.f32.mrb[0].mxu0
      %1930 = vmatprep.mubr.bf16.mxu0 0
      %1931 = vmatmul.mubr.bf16.gmra.mrb[0].mxu0 %v1811
      %v1932 = vpop.f32.mrb[0].mxu0
      %v1933 = vadd.f32 0.0, %v1932
      %v1934 = vpop.f32.mrb[0].mxu0
      %v1935 = vpop.f32.mrb[0].mxu0
      %v1936 = vadd.f32 0.0, %v1935
      %v1937 = vpop.f32.mrb[0].mxu0
      %1938 = vmatprep.mubr.bf16.mxu0 0
      %1939 = vmatmul.mubr.bf16.gmra.mrb[0].mxu0 %v1812
      %v1940 = vpop.f32.mrb[0].mxu0
      %v1941 = vadd.f32 0.0, %v1940
      %v1942 = vpop.f32.mrb[0].mxu0
      %v1943 = vpop.f32.mrb[0].mxu0
      %v1944 = vadd.f32 0.0, %v1943
      %v1945 = vpop.f32.mrb[0].mxu0
      %1946 = vmatprep.mubr.bf16.mxu0 0
      %1947 = vmatmul.mubr.bf16.gmra.mrb[0].mxu0 %v1813
      %v1948 = vpop.f32.mrb[0].mxu0
      %v1949 = vadd.f32 0.0, %v1948
      %v1950 = vpop.f32.mrb[0].mxu0
      %v1951 = vpop.f32.mrb[0].mxu0
      %v1952 = vadd.f32 0.0, %v1951
      %v1953 = vpop.f32.mrb[0].mxu0
      %1954 = vmatprep.mubr.bf16.mxu0 0
      %1955 = vmatmul.mubr.bf16.gmra.mrb[0].mxu0 %v1814
      %v1956 = vpop.f32.mrb[0].mxu0
      %v1957 = vadd.f32 0.0, %v1956
      %v1958 = vpop.f32.mrb[0].mxu0
      %v1959 = vpop.f32.mrb[0].mxu0
      %v1960 = vadd.f32 0.0, %v1959
      %v1961 = vpop.f32.mrb[0].mxu0
      %1962 = vmatprep.mubr.bf16.mxu0 0
      %1963 = vmatmul.mubr.bf16.gmra.mrb[0].mxu0 %v1815
      %v1964 = vpop.f32.mrb[0].mxu0
      %v1965 = vadd.f32 0.0, %v1964
      %v1966 = vpop.f32.mrb[0].mxu0
      %v1967 = vpop.f32.mrb[0].mxu0
      %v1968 = vadd.f32 0.0, %v1967
      %v1969 = vpop.f32.mrb[0].mxu0
      %1970 = vmatprep.mubr.bf16.mxu0 0
      %1971 = vmatmul.mubr.bf16.gmra.mrb[0].mxu0 %v1816
      %v1972 = vpop.f32.mrb[0].mxu0
      %v1973 = vadd.f32 0.0, %v1972
      %v1974 = vpop.f32.mrb[0].mxu0
      %v1975 = vpop.f32.mrb[0].mxu0
      %v1976 = vadd.f32 0.0, %v1975
      %v1977 = vpop.f32.mrb[0].mxu0
      %1978 = vdwg.mxu0
      %v1979 = vadd.f32 %v1747, %v1917
      %v1980 = vadd.f32 %v1750, %v1920
      %v1981 = vadd.f32 %v1755, %v1925
      %v1982 = vadd.f32 %v1758, %v1928
      %v1983 = vadd.f32 %v1763, %v1933
      %v1984 = vadd.f32 %v1766, %v1936
      %v1985 = vadd.f32 %v1771, %v1941
      %v1986 = vadd.f32 %v1774, %v1944
      %v1987 = vadd.f32 %v1779, %v1949
      %v1988 = vadd.f32 %v1782, %v1952
      %v1989 = vadd.f32 %v1787, %v1957
      %v1990 = vadd.f32 %v1790, %v1960
      %v1991 = vadd.f32 %v1795, %v1965
      %v1992 = vadd.f32 %v1798, %v1968
      %v1993 = vadd.f32 %v1803, %v1973
      %v1994 = vadd.f32 %v1806, %v1976
      %v1995 = vld [vmem:[%s3 + $0x1] sm:$0x1]
      %v1996 = vlaneseq
      %v1997 = vshrl.u32 %v1996, 7
      %v1998 = vsub.s32 0, %v1997
      %v1999 = vrot.slane %v1995, %v1998
      %v2000 = vadd.f32 %v1979, %v1999
      %v2001 = vadd.f32 %v1980, %v1999
      %v2002 = vadd.f32 %v1981, %v1999
      %v2003 = vadd.f32 %v1982, %v1999
      %v2004 = vadd.f32 %v1983, %v1999
      %v2005 = vadd.f32 %v1984, %v1999
      %v2006 = vadd.f32 %v1985, %v1999
      %v2007 = vadd.f32 %v1986, %v1999
      %v2008 = vadd.f32 %v1987, %v1999
      %v2009 = vadd.f32 %v1988, %v1999
      %v2010 = vadd.f32 %v1989, %v1999
      %v2011 = vadd.f32 %v1990, %v1999
      %v2012 = vadd.f32 %v1991, %v1999
      %v2013 = vadd.f32 %v1992, %v1999
      %v2014 = vadd.f32 %v1993, %v1999
      %v2015 = vadd.f32 %v1994, %v1999
      %v2016 = vmax.f32 %v2000, 0.0
      %v2017 = vmax.f32 %v2001, 0.0
      %v2018 = vmax.f32 %v2002, 0.0
      %v2019 = vmax.f32 %v2003, 0.0
      %v2020 = vmax.f32 %v2004, 0.0
      %v2021 = vmax.f32 %v2005, 0.0
      %v2022 = vmax.f32 %v2006, 0.0
      %v2023 = vmax.f32 %v2007, 0.0
      %v2024 = vmax.f32 %v2008, 0.0
      %v2025 = vmax.f32 %v2009, 0.0
      %v2026 = vmax.f32 %v2010, 0.0
      %v2027 = vmax.f32 %v2011, 0.0
      %v2028 = vmax.f32 %v2012, 0.0
      %v2029 = vmax.f32 %v2013, 0.0
      %v2030 = vmax.f32 %v2014, 0.0
      %v2031 = vmax.f32 %v2015, 0.0
      %v2032 = vadd.f32 %v2016, %v2018
      %v2033 = vadd.f32 %v2017, %v2019
      %v2034 = vadd.f32 %v2032, %v2020
      %v2035 = vadd.f32 %v2033, %v2021
      %v2036 = vadd.f32 %v2034, %v2022
      %v2037 = vadd.f32 %v2035, %v2023
      %v2038 = vadd.f32 %v2036, %v2024
      %v2039 = vadd.f32 %v2037, %v2025
      %v2040 = vadd.f32 %v2038, %v2026
      %v2041 = vadd.f32 %v2039, %v2027
      %v2042 = vadd.f32 %v2040, %v2028
      %v2043 = vadd.f32 %v2041, %v2029
      %v2044 = vadd.f32 %v2042, %v2030
      %v2045 = vadd.f32 %v2043, %v2031
      %v2046 = vpack.c.bf16 %v2045, %v2044
      %v2047 = vld [vmem:[%s4] sm:$0xf]
      %v2048 = vld [vmem:[%s4 + $0x4] sm:$0xf]
      %v2049 = vld [vmem:[%s4 + $0x8] sm:$0xf]
      %v2050 = vld [vmem:[%s4 + $0xc] sm:$0xf]
      %v2051 = vld [vmem:[%s4 + $0x10] sm:$0xf]
      %v2052 = vld [vmem:[%s4 + $0x14] sm:$0xf]
      %v2053 = vld [vmem:[%s4 + $0x18] sm:$0xf]
      %v2054 = vld [vmem:[%s4 + $0x1c] sm:$0xf]
      %v2055 = vld [vmem:[%s4 + $0x20] sm:$0xf]
      %v2056 = vld [vmem:[%s4 + $0x24] sm:$0xf]
      %v2057 = vld [vmem:[%s4 + $0x28] sm:$0xf]
      %v2058 = vld [vmem:[%s4 + $0x2c] sm:$0xf]
      %v2059 = vld [vmem:[%s4 + $0x30] sm:$0xf]
      %v2060 = vld [vmem:[%s4 + $0x34] sm:$0xf]
      %v2061 = vld [vmem:[%s4 + $0x38] sm:$0xf]
      %v2062 = vld [vmem:[%s4 + $0x3c] sm:$0xf]
      %v2079 = vunpack.c.l.b16 %v2047
      %v2080 = vunpack.c.l.b16 %v2048
      %v2081 = vunpack.c.l.b16 %v2049
      %v2082 = vunpack.c.l.b16 %v2050
      %v2083 = vunpack.c.l.b16 %v2051
      %v2084 = vunpack.c.l.b16 %v2052
      %v2085 = vunpack.c.l.b16 %v2053
      %v2086 = vunpack.c.l.b16 %v2054
      %v2087 = vunpack.c.l.b16 %v2055
      %v2088 = vunpack.c.l.b16 %v2056
      %v2089 = vunpack.c.l.b16 %v2057
      %v2090 = vunpack.c.l.b16 %v2058
      %v2091 = vunpack.c.l.b16 %v2059
      %v2092 = vunpack.c.l.b16 %v2060
      %v2093 = vunpack.c.l.b16 %v2061
      %v2094 = vunpack.c.l.b16 %v2062
      %v2095 = vpack.c.b16 %v2080, %v2079
      %v2096 = vpack.c.b16 %v2082, %v2081
      %v2097 = vpack.c.b16 %v2084, %v2083
      %v2098 = vpack.c.b16 %v2086, %v2085
      %v2099 = vpack.c.b16 %v2088, %v2087
      %v2100 = vpack.c.b16 %v2090, %v2089
      %v2101 = vpack.c.b16 %v2092, %v2091
      %v2102 = vpack.c.b16 %v2094, %v2093
      %2111 = vmatprep.subr.bf16.mxu0 0
      %2112 = vmatpush1.bf16.msra.mxu0 %v2095
      %2113 = vmatprep.subr.bf16.mxu0 0
      %2114 = vmatpush1.bf16.msra.mxu0 %v2096
      %2115 = vmatprep.subr.bf16.mxu0 0
      %2116 = vmatpush1.bf16.msra.mxu0 %v2097
      %2117 = vmatprep.subr.bf16.mxu0 0
      %2118 = vmatpush1.bf16.msra.mxu0 %v2098
      %2119 = vmatprep.subr.bf16.mxu0 0
      %2120 = vmatpush1.bf16.msra.mxu0 %v2099
      %2121 = vmatprep.subr.bf16.mxu0 0
      %2122 = vmatpush1.bf16.msra.mxu0 %v2100
      %2123 = vmatprep.subr.bf16.mxu0 0
      %2124 = vmatpush1.bf16.msra.mxu0 %v2101
      %2125 = vmatprep.subr.bf16.mxu0 0
      %2126 = vmatpush1.bf16.msra.mxu0 %v2102
      %2127 = vmatprep.subr.bf16.mxu0 0
      %2128 = vmatpush1.bf16.msra.mxu0 0
      %2129 = vmatprep.subr.bf16.mxu0 0
      %2130 = vmatpush1.bf16.msra.mxu0 0
      %2131 = vmatprep.subr.bf16.mxu0 0
      %2132 = vmatpush1.bf16.msra.mxu0 0
      %2133 = vmatprep.subr.bf16.mxu0 0
      %2134 = vmatpush1.bf16.msra.mxu0 0
      %2135 = vmatprep.subr.bf16.mxu0 0
      %2136 = vmatpush1.bf16.msra.mxu0 0
      %2137 = vmatprep.subr.bf16.mxu0 0
      %2138 = vmatpush1.bf16.msra.mxu0 0
      %2139 = vmatprep.subr.bf16.mxu0 0
      %2140 = vmatpush1.bf16.msra.mxu0 0
      %2141 = vmatprep.subr.bf16.mxu0 0
      %2142 = vmatpush1.bf16.msra.mxu0 0
      %2143 = vmatprep.mubr.bf16.mxu0 0
      %2144 = vmatmul.mubr.bf16.gmra.mrb[0].mxu0 %v2046
      %v2145 = vpop.f32.mrb[0].mxu0
      %v2146 = vadd.f32 0.0, %v2145
      %v2147 = vpop.f32.mrb[0].mxu0
      %v2148 = vpop.f32.mrb[0].mxu0
      %v2149 = vadd.f32 0.0, %v2148
      %v2150 = vpop.f32.mrb[0].mxu0
      %2151 = vdwg.mxu0
      %v2153 = vlaneseq
      %v2154 = vshrl.u32 %v2153, 7
      %v2155 = vsub.s32 0, %v2154
      %v2156 = vrot.slane %v273, %v2155
      %v2158 = vadd.f32 %v2156, %v2146
      %v2159 = vadd.f32 %v2156, %v2149
      %v2160 = vpack.c.bf16 %v2017, %v2016
      %v2161 = vpack.c.bf16 %v2019, %v2018
      %v2162 = vpack.c.bf16 %v2021, %v2020
      %v2163 = vpack.c.bf16 %v2023, %v2022
      %v2164 = vpack.c.bf16 %v2025, %v2024
      %v2165 = vpack.c.bf16 %v2027, %v2026
      %v2166 = vpack.c.bf16 %v2029, %v2028
      %v2167 = vpack.c.bf16 %v2031, %v2030
      %2168 = vst [vmem:[#allocation5] sm:$0xff] 0
      %2169 = vst [vmem:[#allocation4] sm:$0xff] %v2160
      %2170 = vst [vmem:[#allocation5 + $0x8] sm:$0xff] %v2161
      %2171 = vst [vmem:[#allocation4 + $0x8] sm:$0xff] %v2162
      %2172 = vst [vmem:[#allocation5 + $0x10] sm:$0xff] %v2163
      %2173 = vst [vmem:[#allocation4 + $0x10] sm:$0xff] %v2164
      %2174 = vst [vmem:[#allocation5 + $0x18] sm:$0xff] %v2165
      %2175 = vst [vmem:[#allocation4 + $0x18] sm:$0xff] %v2166
      %2176 = vst [vmem:[#allocation5 + $0x20] sm:$0xff] %v2167
      %v2177 = vld [vmem:[#allocation5] sm:$0xff]
      %v2178 = vld [vmem:[#allocation5 + $0x8] sm:$0xff]
      %v2179 = vld [vmem:[#allocation5 + $0x10] sm:$0xff]
      %v2180 = vld [vmem:[#allocation5 + $0x18] sm:$0xff]
      %s2181 = scalar_lea.vmem %s2, 384
      %v2182 = vld [vmem:[%s2181] sm:$0xf]
      %v2183 = vld [vmem:[%s2181 + $0x4] sm:$0xf]
      %v2184 = vld [vmem:[%s2181 + $0x8] sm:$0xf]
      %v2185 = vld [vmem:[%s2181 + $0xc] sm:$0xf]
      %v2186 = vld [vmem:[%s2181 + $0x10] sm:$0xf]
      %v2187 = vld [vmem:[%s2181 + $0x14] sm:$0xf]
      %v2188 = vld [vmem:[%s2181 + $0x18] sm:$0xf]
      %v2189 = vld [vmem:[%s2181 + $0x1c] sm:$0xf]
      %v2190 = vld [vmem:[%s2181 + $0x20] sm:$0xf]
      %v2191 = vld [vmem:[%s2181 + $0x24] sm:$0xf]
      %v2192 = vld [vmem:[%s2181 + $0x28] sm:$0xf]
      %v2193 = vld [vmem:[%s2181 + $0x2c] sm:$0xf]
      %v2194 = vld [vmem:[%s2181 + $0x30] sm:$0xf]
      %v2195 = vld [vmem:[%s2181 + $0x34] sm:$0xf]
      %v2196 = vld [vmem:[%s2181 + $0x38] sm:$0xf]
      %v2197 = vld [vmem:[%s2181 + $0x3c] sm:$0xf]
      %v2198 = vld [vmem:[#allocation4] sm:$0xff]
      %v2199 = vld [vmem:[#allocation4 + $0x8] sm:$0xff]
      %v2200 = vld [vmem:[#allocation4 + $0x10] sm:$0xff]
      %v2201 = vld [vmem:[#allocation4 + $0x18] sm:$0xff]
      %s2202 = scalar_lea.vmem %s2, 448
      %v2203 = vld [vmem:[%s2202] sm:$0xf]
      %v2204 = vld [vmem:[%s2202 + $0x4] sm:$0xf]
      %v2205 = vld [vmem:[%s2202 + $0x8] sm:$0xf]
      %v2206 = vld [vmem:[%s2202 + $0xc] sm:$0xf]
      %v2207 = vld [vmem:[%s2202 + $0x10] sm:$0xf]
      %v2208 = vld [vmem:[%s2202 + $0x14] sm:$0xf]
      %v2209 = vld [vmem:[%s2202 + $0x18] sm:$0xf]
      %v2210 = vld [vmem:[%s2202 + $0x1c] sm:$0xf]
      %v2211 = vld [vmem:[%s2202 + $0x20] sm:$0xf]
      %v2212 = vld [vmem:[%s2202 + $0x24] sm:$0xf]
      %v2213 = vld [vmem:[%s2202 + $0x28] sm:$0xf]
      %v2214 = vld [vmem:[%s2202 + $0x2c] sm:$0xf]
      %v2215 = vld [vmem:[%s2202 + $0x30] sm:$0xf]
      %v2216 = vld [vmem:[%s2202 + $0x34] sm:$0xf]
      %v2217 = vld [vmem:[%s2202 + $0x38] sm:$0xf]
      %v2218 = vld [vmem:[%s2202 + $0x3c] sm:$0xf]
      %v2235 = vunpack.c.l.b16 %v2203
      %v2236 = vunpack.c.l.b16 %v2204
      %v2237 = vunpack.c.l.b16 %v2205
      %v2238 = vunpack.c.l.b16 %v2206
      %v2239 = vunpack.c.l.b16 %v2207
      %v2240 = vunpack.c.l.b16 %v2208
      %v2241 = vunpack.c.l.b16 %v2209
      %v2242 = vunpack.c.l.b16 %v2210
      %v2243 = vunpack.c.l.b16 %v2211
      %v2244 = vunpack.c.l.b16 %v2212
      %v2245 = vunpack.c.l.b16 %v2213
      %v2246 = vunpack.c.l.b16 %v2214
      %v2247 = vunpack.c.l.b16 %v2215
      %v2248 = vunpack.c.l.b16 %v2216
      %v2249 = vunpack.c.l.b16 %v2217
      %v2250 = vunpack.c.l.b16 %v2218
      %v2251 = vpack.c.b16 %v2236, %v2235
      %v2252 = vpack.c.b16 %v2238, %v2237
      %v2253 = vpack.c.b16 %v2240, %v2239
      %v2254 = vpack.c.b16 %v2242, %v2241
      %v2255 = vpack.c.b16 %v2244, %v2243
      %v2256 = vpack.c.b16 %v2246, %v2245
      %v2257 = vpack.c.b16 %v2248, %v2247
      %v2258 = vpack.c.b16 %v2250, %v2249
      %2267 = vmatprep.subr.bf16.mxu0 0
      %2268 = vmatpush1.bf16.msra.mxu0 %v2251
      %2269 = vmatprep.subr.bf16.mxu0 0
      %2270 = vmatpush1.bf16.msra.mxu0 %v2252
      %2271 = vmatprep.subr.bf16.mxu0 0
      %2272 = vmatpush1.bf16.msra.mxu0 %v2253
      %2273 = vmatprep.subr.bf16.mxu0 0
      %2274 = vmatpush1.bf16.msra.mxu0 %v2254
      %2275 = vmatprep.subr.bf16.mxu0 0
      %2276 = vmatpush1.bf16.msra.mxu0 %v2255
      %2277 = vmatprep.subr.bf16.mxu0 0
      %2278 = vmatpush1.bf16.msra.mxu0 %v2256
      %2279 = vmatprep.subr.bf16.mxu0 0
      %2280 = vmatpush1.bf16.msra.mxu0 %v2257
      %2281 = vmatprep.subr.bf16.mxu0 0
      %2282 = vmatpush1.bf16.msra.mxu0 %v2258
      %2283 = vmatprep.subr.bf16.mxu0 0
      %2284 = vmatpush1.bf16.msra.mxu0 0
      %2285 = vmatprep.subr.bf16.mxu0 0
      %2286 = vmatpush1.bf16.msra.mxu0 0
      %2287 = vmatprep.subr.bf16.mxu0 0
      %2288 = vmatpush1.bf16.msra.mxu0 0
      %2289 = vmatprep.subr.bf16.mxu0 0
      %2290 = vmatpush1.bf16.msra.mxu0 0
      %2291 = vmatprep.subr.bf16.mxu0 0
      %2292 = vmatpush1.bf16.msra.mxu0 0
      %2293 = vmatprep.subr.bf16.mxu0 0
      %2294 = vmatpush1.bf16.msra.mxu0 0
      %2295 = vmatprep.subr.bf16.mxu0 0
      %2296 = vmatpush1.bf16.msra.mxu0 0
      %2297 = vmatprep.subr.bf16.mxu0 0
      %2298 = vmatpush1.bf16.msra.mxu0 0
      %2299 = vmatprep.mubr.bf16.mxu0 0
      %2300 = vmatmul.mubr.bf16.gmra.mrb[0].mxu0 %v2198
      %v2301 = vpop.f32.mrb[0].mxu0
      %v2302 = vadd.f32 0.0, %v2301
      %v2303 = vpop.f32.mrb[0].mxu0
      %v2304 = vpop.f32.mrb[0].mxu0
      %v2305 = vadd.f32 0.0, %v2304
      %v2306 = vpop.f32.mrb[0].mxu0
      %2307 = vmatprep.mubr.bf16.mxu0 0
      %2308 = vmatmul.mubr.bf16.gmra.mrb[0].mxu0 %v2199
      %v2309 = vpop.f32.mrb[0].mxu0
      %v2310 = vadd.f32 0.0, %v2309
      %v2311 = vpop.f32.mrb[0].mxu0
      %v2312 = vpop.f32.mrb[0].mxu0
      %v2313 = vadd.f32 0.0, %v2312
      %v2314 = vpop.f32.mrb[0].mxu0
      %2315 = vmatprep.mubr.bf16.mxu0 0
      %2316 = vmatmul.mubr.bf16.gmra.mrb[0].mxu0 %v2200
      %v2317 = vpop.f32.mrb[0].mxu0
      %v2318 = vadd.f32 0.0, %v2317
      %v2319 = vpop.f32.mrb[0].mxu0
      %v2320 = vpop.f32.mrb[0].mxu0
      %v2321 = vadd.f32 0.0, %v2320
      %v2322 = vpop.f32.mrb[0].mxu0
      %2323 = vmatprep.mubr.bf16.mxu0 0
      %2324 = vmatmul.mubr.bf16.gmra.mrb[0].mxu0 %v2201
      %v2325 = vpop.f32.mrb[0].mxu0
      %v2326 = vadd.f32 0.0, %v2325
      %v2327 = vpop.f32.mrb[0].mxu0
      %v2328 = vpop.f32.mrb[0].mxu0
      %v2329 = vadd.f32 0.0, %v2328
      %v2330 = vpop.f32.mrb[0].mxu0
      %2331 = vdwg.mxu0
      %v2348 = vunpack.c.l.b16 %v2182
      %v2349 = vunpack.c.l.b16 %v2183
      %v2350 = vunpack.c.l.b16 %v2184
      %v2351 = vunpack.c.l.b16 %v2185
      %v2352 = vunpack.c.l.b16 %v2186
      %v2353 = vunpack.c.l.b16 %v2187
      %v2354 = vunpack.c.l.b16 %v2188
      %v2355 = vunpack.c.l.b16 %v2189
      %v2356 = vunpack.c.l.b16 %v2190
      %v2357 = vunpack.c.l.b16 %v2191
      %v2358 = vunpack.c.l.b16 %v2192
      %v2359 = vunpack.c.l.b16 %v2193
      %v2360 = vunpack.c.l.b16 %v2194
      %v2361 = vunpack.c.l.b16 %v2195
      %v2362 = vunpack.c.l.b16 %v2196
      %v2363 = vunpack.c.l.b16 %v2197
      %v2364 = vpack.c.b16 %v2349, %v2348
      %v2365 = vpack.c.b16 %v2351, %v2350
      %v2366 = vpack.c.b16 %v2353, %v2352
      %v2367 = vpack.c.b16 %v2355, %v2354
      %v2368 = vpack.c.b16 %v2357, %v2356
      %v2369 = vpack.c.b16 %v2359, %v2358
      %v2370 = vpack.c.b16 %v2361, %v2360
      %v2371 = vpack.c.b16 %v2363, %v2362
      %2380 = vmatprep.subr.bf16.mxu0 0
      %2381 = vmatpush1.bf16.msra.mxu0 %v2364
      %2382 = vmatprep.subr.bf16.mxu0 0
      %2383 = vmatpush1.bf16.msra.mxu0 %v2365
      %2384 = vmatprep.subr.bf16.mxu0 0
      %2385 = vmatpush1.bf16.msra.mxu0 %v2366
      %2386 = vmatprep.subr.bf16.mxu0 0
      %2387 = vmatpush1.bf16.msra.mxu0 %v2367
      %2388 = vmatprep.subr.bf16.mxu0 0
      %2389 = vmatpush1.bf16.msra.mxu0 %v2368
      %2390 = vmatprep.subr.bf16.mxu0 0
      %2391 = vmatpush1.bf16.msra.mxu0 %v2369
      %2392 = vmatprep.subr.bf16.mxu0 0
      %2393 = vmatpush1.bf16.msra.mxu0 %v2370
      %2394 = vmatprep.subr.bf16.mxu0 0
      %2395 = vmatpush1.bf16.msra.mxu0 %v2371
      %2396 = vmatprep.subr.bf16.mxu0 0
      %2397 = vmatpush1.bf16.msra.mxu0 0
      %2398 = vmatprep.subr.bf16.mxu0 0
      %2399 = vmatpush1.bf16.msra.mxu0 0
      %2400 = vmatprep.subr.bf16.mxu0 0
      %2401 = vmatpush1.bf16.msra.mxu0 0
      %2402 = vmatprep.subr.bf16.mxu0 0
      %2403 = vmatpush1.bf16.msra.mxu0 0
      %2404 = vmatprep.subr.bf16.mxu0 0
      %2405 = vmatpush1.bf16.msra.mxu0 0
      %2406 = vmatprep.subr.bf16.mxu0 0
      %2407 = vmatpush1.bf16.msra.mxu0 0
      %2408 = vmatprep.subr.bf16.mxu0 0
      %2409 = vmatpush1.bf16.msra.mxu0 0
      %2410 = vmatprep.subr.bf16.mxu0 0
      %2411 = vmatpush1.bf16.msra.mxu0 0
      %2412 = vmatprep.mubr.bf16.mxu0 0
      %2413 = vmatmul.mubr.bf16.gmra.mrb[0].mxu0 %v2177
      %v2414 = vpop.f32.mrb[0].mxu0
      %v2415 = vadd.f32 %v2302, %v2414
      %v2416 = vpop.f32.mrb[0].mxu0
      %v2417 = vpop.f32.mrb[0].mxu0
      %v2418 = vadd.f32 %v2305, %v2417
      %v2419 = vpop.f32.mrb[0].mxu0
      %2420 = vmatprep.mubr.bf16.mxu0 0
      %2421 = vmatmul.mubr.bf16.gmra.mrb[0].mxu0 %v2178
      %v2422 = vpop.f32.mrb[0].mxu0
      %v2423 = vadd.f32 %v2310, %v2422
      %v2424 = vpop.f32.mrb[0].mxu0
      %v2425 = vpop.f32.mrb[0].mxu0
      %v2426 = vadd.f32 %v2313, %v2425
      %v2427 = vpop.f32.mrb[0].mxu0
      %2428 = vmatprep.mubr.bf16.mxu0 0
      %2429 = vmatmul.mubr.bf16.gmra.mrb[0].mxu0 %v2179
      %v2430 = vpop.f32.mrb[0].mxu0
      %v2431 = vadd.f32 %v2318, %v2430
      %v2432 = vpop.f32.mrb[0].mxu0
      %v2433 = vpop.f32.mrb[0].mxu0
      %v2434 = vadd.f32 %v2321, %v2433
      %v2435 = vpop.f32.mrb[0].mxu0
      %2436 = vmatprep.mubr.bf16.mxu0 0
      %2437 = vmatmul.mubr.bf16.gmra.mrb[0].mxu0 %v2180
      %v2438 = vpop.f32.mrb[0].mxu0
      %v2439 = vadd.f32 %v2326, %v2438
      %v2440 = vpop.f32.mrb[0].mxu0
      %v2441 = vpop.f32.mrb[0].mxu0
      %v2442 = vadd.f32 %v2329, %v2441
      %v2443 = vpop.f32.mrb[0].mxu0
      %2444 = vdwg.mxu0
      %v2445 = vld [vmem:[#allocation5 + $0x8] sm:$0xff]
      %v2446 = vld [vmem:[#allocation5 + $0x10] sm:$0xff]
      %v2447 = vld [vmem:[#allocation5 + $0x18] sm:$0xff]
      %v2448 = vld [vmem:[#allocation5 + $0x20] sm:$0xff]
      %s2449 = scalar_lea.vmem %s2, 512
      %v2450 = vld [vmem:[%s2449] sm:$0xf]
      %v2451 = vld [vmem:[%s2449 + $0x4] sm:$0xf]
      %v2452 = vld [vmem:[%s2449 + $0x8] sm:$0xf]
      %v2453 = vld [vmem:[%s2449 + $0xc] sm:$0xf]
      %v2454 = vld [vmem:[%s2449 + $0x10] sm:$0xf]
      %v2455 = vld [vmem:[%s2449 + $0x14] sm:$0xf]
      %v2456 = vld [vmem:[%s2449 + $0x18] sm:$0xf]
      %v2457 = vld [vmem:[%s2449 + $0x1c] sm:$0xf]
      %v2458 = vld [vmem:[%s2449 + $0x20] sm:$0xf]
      %v2459 = vld [vmem:[%s2449 + $0x24] sm:$0xf]
      %v2460 = vld [vmem:[%s2449 + $0x28] sm:$0xf]
      %v2461 = vld [vmem:[%s2449 + $0x2c] sm:$0xf]
      %v2462 = vld [vmem:[%s2449 + $0x30] sm:$0xf]
      %v2463 = vld [vmem:[%s2449 + $0x34] sm:$0xf]
      %v2464 = vld [vmem:[%s2449 + $0x38] sm:$0xf]
      %v2465 = vld [vmem:[%s2449 + $0x3c] sm:$0xf]
      %v2482 = vunpack.c.l.b16 %v2450
      %v2483 = vunpack.c.l.b16 %v2451
      %v2484 = vunpack.c.l.b16 %v2452
      %v2485 = vunpack.c.l.b16 %v2453
      %v2486 = vunpack.c.l.b16 %v2454
      %v2487 = vunpack.c.l.b16 %v2455
      %v2488 = vunpack.c.l.b16 %v2456
      %v2489 = vunpack.c.l.b16 %v2457
      %v2490 = vunpack.c.l.b16 %v2458
      %v2491 = vunpack.c.l.b16 %v2459
      %v2492 = vunpack.c.l.b16 %v2460
      %v2493 = vunpack.c.l.b16 %v2461
      %v2494 = vunpack.c.l.b16 %v2462
      %v2495 = vunpack.c.l.b16 %v2463
      %v2496 = vunpack.c.l.b16 %v2464
      %v2497 = vunpack.c.l.b16 %v2465
      %v2498 = vpack.c.b16 %v2483, %v2482
      %v2499 = vpack.c.b16 %v2485, %v2484
      %v2500 = vpack.c.b16 %v2487, %v2486
      %v2501 = vpack.c.b16 %v2489, %v2488
      %v2502 = vpack.c.b16 %v2491, %v2490
      %v2503 = vpack.c.b16 %v2493, %v2492
      %v2504 = vpack.c.b16 %v2495, %v2494
      %v2505 = vpack.c.b16 %v2497, %v2496
      %2514 = vmatprep.subr.bf16.mxu0 0
      %2515 = vmatpush1.bf16.msra.mxu0 %v2498
      %2516 = vmatprep.subr.bf16.mxu0 0
      %2517 = vmatpush1.bf16.msra.mxu0 %v2499
      %2518 = vmatprep.subr.bf16.mxu0 0
      %2519 = vmatpush1.bf16.msra.mxu0 %v2500
      %2520 = vmatprep.subr.bf16.mxu0 0
      %2521 = vmatpush1.bf16.msra.mxu0 %v2501
      %2522 = vmatprep.subr.bf16.mxu0 0
      %2523 = vmatpush1.bf16.msra.mxu0 %v2502
      %2524 = vmatprep.subr.bf16.mxu0 0
      %2525 = vmatpush1.bf16.msra.mxu0 %v2503
      %2526 = vmatprep.subr.bf16.mxu0 0
      %2527 = vmatpush1.bf16.msra.mxu0 %v2504
      %2528 = vmatprep.subr.bf16.mxu0 0
      %2529 = vmatpush1.bf16.msra.mxu0 %v2505
      %2530 = vmatprep.subr.bf16.mxu0 0
      %2531 = vmatpush1.bf16.msra.mxu0 0
      %2532 = vmatprep.subr.bf16.mxu0 0
      %2533 = vmatpush1.bf16.msra.mxu0 0
      %2534 = vmatprep.subr.bf16.mxu0 0
      %2535 = vmatpush1.bf16.msra.mxu0 0
      %2536 = vmatprep.subr.bf16.mxu0 0
      %2537 = vmatpush1.bf16.msra.mxu0 0
      %2538 = vmatprep.subr.bf16.mxu0 0
      %2539 = vmatpush1.bf16.msra.mxu0 0
      %2540 = vmatprep.subr.bf16.mxu0 0
      %2541 = vmatpush1.bf16.msra.mxu0 0
      %2542 = vmatprep.subr.bf16.mxu0 0
      %2543 = vmatpush1.bf16.msra.mxu0 0
      %2544 = vmatprep.subr.bf16.mxu0 0
      %2545 = vmatpush1.bf16.msra.mxu0 0
      %2546 = vmatprep.mubr.bf16.mxu0 0
      %2547 = vmatmul.mubr.bf16.gmra.mrb[0].mxu0 %v2445
      %v2548 = vpop.f32.mrb[0].mxu0
      %v2549 = vadd.f32 0.0, %v2548
      %v2550 = vpop.f32.mrb[0].mxu0
      %v2551 = vpop.f32.mrb[0].mxu0
      %v2552 = vadd.f32 0.0, %v2551
      %v2553 = vpop.f32.mrb[0].mxu0
      %2554 = vmatprep.mubr.bf16.mxu0 0
      %2555 = vmatmul.mubr.bf16.gmra.mrb[0].mxu0 %v2446
      %v2556 = vpop.f32.mrb[0].mxu0
      %v2557 = vadd.f32 0.0, %v2556
      %v2558 = vpop.f32.mrb[0].mxu0
      %v2559 = vpop.f32.mrb[0].mxu0
      %v2560 = vadd.f32 0.0, %v2559
      %v2561 = vpop.f32.mrb[0].mxu0
      %2562 = vmatprep.mubr.bf16.mxu0 0
      %2563 = vmatmul.mubr.bf16.gmra.mrb[0].mxu0 %v2447
      %v2564 = vpop.f32.mrb[0].mxu0
      %v2565 = vadd.f32 0.0, %v2564
      %v2566 = vpop.f32.mrb[0].mxu0
      %v2567 = vpop.f32.mrb[0].mxu0
      %v2568 = vadd.f32 0.0, %v2567
      %v2569 = vpop.f32.mrb[0].mxu0
      %2570 = vmatprep.mubr.bf16.mxu0 0
      %2571 = vmatmul.mubr.bf16.gmra.mrb[0].mxu0 %v2448
      %v2572 = vpop.f32.mrb[0].mxu0
      %v2573 = vadd.f32 0.0, %v2572
      %v2574 = vpop.f32.mrb[0].mxu0
      %v2575 = vpop.f32.mrb[0].mxu0
      %v2576 = vadd.f32 0.0, %v2575
      %v2577 = vpop.f32.mrb[0].mxu0
      %2578 = vdwg.mxu0
      %v2579 = vadd.f32 %v2415, %v2549
      %v2580 = vadd.f32 %v2418, %v2552
      %v2581 = vadd.f32 %v2423, %v2557
      %v2582 = vadd.f32 %v2426, %v2560
      %v2583 = vadd.f32 %v2431, %v2565
      %v2584 = vadd.f32 %v2434, %v2568
      %v2585 = vadd.f32 %v2439, %v2573
      %v2586 = vadd.f32 %v2442, %v2576
      %v2587 = vld [vmem:[%s3 + $0x2] sm:$0x1]
      %v2588 = vlaneseq
      %v2589 = vshrl.u32 %v2588, 7
      %v2590 = vsub.s32 0, %v2589
      %v2591 = vrot.slane %v2587, %v2590
      %v2592 = vadd.f32 %v2579, %v2591
      %v2593 = vadd.f32 %v2580, %v2591
      %v2594 = vadd.f32 %v2581, %v2591
      %v2595 = vadd.f32 %v2582, %v2591
      %v2596 = vadd.f32 %v2583, %v2591
      %v2597 = vadd.f32 %v2584, %v2591
      %v2598 = vadd.f32 %v2585, %v2591
      %v2599 = vadd.f32 %v2586, %v2591
      %v2600 = vmax.f32 %v2592, 0.0
      %v2601 = vmax.f32 %v2593, 0.0
      %v2602 = vmax.f32 %v2594, 0.0
      %v2603 = vmax.f32 %v2595, 0.0
      %v2604 = vmax.f32 %v2596, 0.0
      %v2605 = vmax.f32 %v2597, 0.0
      %v2606 = vmax.f32 %v2598, 0.0
      %v2607 = vmax.f32 %v2599, 0.0
      %v2608 = vadd.f32 %v2600, %v2602
      %v2609 = vadd.f32 %v2601, %v2603
      %v2610 = vadd.f32 %v2608, %v2604
      %v2611 = vadd.f32 %v2609, %v2605
      %v2612 = vadd.f32 %v2610, %v2606
      %v2613 = vadd.f32 %v2611, %v2607
      %v2614 = vpack.c.bf16 %v2613, %v2612
      %s2615 = scalar_lea.vmem %s4, 64
      %v2616 = vld [vmem:[%s2615] sm:$0xf]
      %v2617 = vld [vmem:[%s2615 + $0x4] sm:$0xf]
      %v2618 = vld [vmem:[%s2615 + $0x8] sm:$0xf]
      %v2619 = vld [vmem:[%s2615 + $0xc] sm:$0xf]
      %v2620 = vld [vmem:[%s2615 + $0x10] sm:$0xf]
      %v2621 = vld [vmem:[%s2615 + $0x14] sm:$0xf]
      %v2622 = vld [vmem:[%s2615 + $0x18] sm:$0xf]
      %v2623 = vld [vmem:[%s2615 + $0x1c] sm:$0xf]
      %v2624 = vld [vmem:[%s2615 + $0x20] sm:$0xf]
      %v2625 = vld [vmem:[%s2615 + $0x24] sm:$0xf]
      %v2626 = vld [vmem:[%s2615 + $0x28] sm:$0xf]
      %v2627 = vld [vmem:[%s2615 + $0x2c] sm:$0xf]
      %v2628 = vld [vmem:[%s2615 + $0x30] sm:$0xf]
      %v2629 = vld [vmem:[%s2615 + $0x34] sm:$0xf]
      %v2630 = vld [vmem:[%s2615 + $0x38] sm:$0xf]
      %v2631 = vld [vmem:[%s2615 + $0x3c] sm:$0xf]
      %v2648 = vunpack.c.l.b16 %v2616
      %v2649 = vunpack.c.l.b16 %v2617
      %v2650 = vunpack.c.l.b16 %v2618
      %v2651 = vunpack.c.l.b16 %v2619
      %v2652 = vunpack.c.l.b16 %v2620
      %v2653 = vunpack.c.l.b16 %v2621
      %v2654 = vunpack.c.l.b16 %v2622
      %v2655 = vunpack.c.l.b16 %v2623
      %v2656 = vunpack.c.l.b16 %v2624
      %v2657 = vunpack.c.l.b16 %v2625
      %v2658 = vunpack.c.l.b16 %v2626
      %v2659 = vunpack.c.l.b16 %v2627
      %v2660 = vunpack.c.l.b16 %v2628
      %v2661 = vunpack.c.l.b16 %v2629
      %v2662 = vunpack.c.l.b16 %v2630
      %v2663 = vunpack.c.l.b16 %v2631
      %v2664 = vpack.c.b16 %v2649, %v2648
      %v2665 = vpack.c.b16 %v2651, %v2650
      %v2666 = vpack.c.b16 %v2653, %v2652
      %v2667 = vpack.c.b16 %v2655, %v2654
      %v2668 = vpack.c.b16 %v2657, %v2656
      %v2669 = vpack.c.b16 %v2659, %v2658
      %v2670 = vpack.c.b16 %v2661, %v2660
      %v2671 = vpack.c.b16 %v2663, %v2662
      %2680 = vmatprep.subr.bf16.mxu0 0
      %2681 = vmatpush1.bf16.msra.mxu0 %v2664
      %2682 = vmatprep.subr.bf16.mxu0 0
      %2683 = vmatpush1.bf16.msra.mxu0 %v2665
      %2684 = vmatprep.subr.bf16.mxu0 0
      %2685 = vmatpush1.bf16.msra.mxu0 %v2666
      %2686 = vmatprep.subr.bf16.mxu0 0
      %2687 = vmatpush1.bf16.msra.mxu0 %v2667
      %2688 = vmatprep.subr.bf16.mxu0 0
      %2689 = vmatpush1.bf16.msra.mxu0 %v2668
      %2690 = vmatprep.subr.bf16.mxu0 0
      %2691 = vmatpush1.bf16.msra.mxu0 %v2669
      %2692 = vmatprep.subr.bf16.mxu0 0
      %2693 = vmatpush1.bf16.msra.mxu0 %v2670
      %2694 = vmatprep.subr.bf16.mxu0 0
      %2695 = vmatpush1.bf16.msra.mxu0 %v2671
      %2696 = vmatprep.subr.bf16.mxu0 0
      %2697 = vmatpush1.bf16.msra.mxu0 0
      %2698 = vmatprep.subr.bf16.mxu0 0
      %2699 = vmatpush1.bf16.msra.mxu0 0
      %2700 = vmatprep.subr.bf16.mxu0 0
      %2701 = vmatpush1.bf16.msra.mxu0 0
      %2702 = vmatprep.subr.bf16.mxu0 0
      %2703 = vmatpush1.bf16.msra.mxu0 0
      %2704 = vmatprep.subr.bf16.mxu0 0
      %2705 = vmatpush1.bf16.msra.mxu0 0
      %2706 = vmatprep.subr.bf16.mxu0 0
      %2707 = vmatpush1.bf16.msra.mxu0 0
      %2708 = vmatprep.subr.bf16.mxu0 0
      %2709 = vmatpush1.bf16.msra.mxu0 0
      %2710 = vmatprep.subr.bf16.mxu0 0
      %2711 = vmatpush1.bf16.msra.mxu0 0
      %2712 = vmatprep.mubr.bf16.mxu0 0
      %2713 = vmatmul.mubr.bf16.gmra.mrb[0].mxu0 %v2614
      %v2714 = vpop.f32.mrb[0].mxu0
      %v2715 = vadd.f32 0.0, %v2714
      %v2716 = vpop.f32.mrb[0].mxu0
      %v2717 = vpop.f32.mrb[0].mxu0
      %v2718 = vadd.f32 0.0, %v2717
      %v2719 = vpop.f32.mrb[0].mxu0
      %2720 = vdwg.mxu0
      %v2721 = vadd.f32 %v2158, %v2715
      %v2722 = vadd.f32 %v2159, %v2718
      %v2723 = vpack.c.bf16 %v2601, %v2600
      %v2724 = vpack.c.bf16 %v2603, %v2602
      %v2725 = vpack.c.bf16 %v2605, %v2604
      %v2726 = vpack.c.bf16 %v2607, %v2606
      %2727 = vst [vmem:[#allocation7] sm:$0xff] 0
      %2728 = vst [vmem:[#allocation6] sm:$0xff] %v2723
      %2729 = vst [vmem:[#allocation7 + $0x8] sm:$0xff] %v2724
      %2730 = vst [vmem:[#allocation6 + $0x8] sm:$0xff] %v2725
      %2731 = vst [vmem:[#allocation7 + $0x10] sm:$0xff] %v2726
      %v2732 = vld [vmem:[#allocation7] sm:$0xff]
      %v2733 = vld [vmem:[#allocation7 + $0x8] sm:$0xff]
      %s2734 = scalar_lea.vmem %s2, 576
      %v2735 = vld [vmem:[%s2734] sm:$0xf]
      %v2736 = vld [vmem:[%s2734 + $0x4] sm:$0xf]
      %v2737 = vld [vmem:[%s2734 + $0x8] sm:$0xf]
      %v2738 = vld [vmem:[%s2734 + $0xc] sm:$0xf]
      %v2739 = vld [vmem:[%s2734 + $0x10] sm:$0xf]
      %v2740 = vld [vmem:[%s2734 + $0x14] sm:$0xf]
      %v2741 = vld [vmem:[%s2734 + $0x18] sm:$0xf]
      %v2742 = vld [vmem:[%s2734 + $0x1c] sm:$0xf]
      %v2743 = vld [vmem:[%s2734 + $0x20] sm:$0xf]
      %v2744 = vld [vmem:[%s2734 + $0x24] sm:$0xf]
      %v2745 = vld [vmem:[%s2734 + $0x28] sm:$0xf]
      %v2746 = vld [vmem:[%s2734 + $0x2c] sm:$0xf]
      %v2747 = vld [vmem:[%s2734 + $0x30] sm:$0xf]
      %v2748 = vld [vmem:[%s2734 + $0x34] sm:$0xf]
      %v2749 = vld [vmem:[%s2734 + $0x38] sm:$0xf]
      %v2750 = vld [vmem:[%s2734 + $0x3c] sm:$0xf]
      %v2751 = vld [vmem:[#allocation6] sm:$0xff]
      %v2752 = vld [vmem:[#allocation6 + $0x8] sm:$0xff]
      %s2753 = scalar_lea.vmem %s2, 640
      %v2754 = vld [vmem:[%s2753] sm:$0xf]
      %v2755 = vld [vmem:[%s2753 + $0x4] sm:$0xf]
      %v2756 = vld [vmem:[%s2753 + $0x8] sm:$0xf]
      %v2757 = vld [vmem:[%s2753 + $0xc] sm:$0xf]
      %v2758 = vld [vmem:[%s2753 + $0x10] sm:$0xf]
      %v2759 = vld [vmem:[%s2753 + $0x14] sm:$0xf]
      %v2760 = vld [vmem:[%s2753 + $0x18] sm:$0xf]
      %v2761 = vld [vmem:[%s2753 + $0x1c] sm:$0xf]
      %v2762 = vld [vmem:[%s2753 + $0x20] sm:$0xf]
      %v2763 = vld [vmem:[%s2753 + $0x24] sm:$0xf]
      %v2764 = vld [vmem:[%s2753 + $0x28] sm:$0xf]
      %v2765 = vld [vmem:[%s2753 + $0x2c] sm:$0xf]
      %v2766 = vld [vmem:[%s2753 + $0x30] sm:$0xf]
      %v2767 = vld [vmem:[%s2753 + $0x34] sm:$0xf]
      %v2768 = vld [vmem:[%s2753 + $0x38] sm:$0xf]
      %v2769 = vld [vmem:[%s2753 + $0x3c] sm:$0xf]
      %v2786 = vunpack.c.l.b16 %v2754
      %v2787 = vunpack.c.l.b16 %v2755
      %v2788 = vunpack.c.l.b16 %v2756
      %v2789 = vunpack.c.l.b16 %v2757
      %v2790 = vunpack.c.l.b16 %v2758
      %v2791 = vunpack.c.l.b16 %v2759
      %v2792 = vunpack.c.l.b16 %v2760
      %v2793 = vunpack.c.l.b16 %v2761
      %v2794 = vunpack.c.l.b16 %v2762
      %v2795 = vunpack.c.l.b16 %v2763
      %v2796 = vunpack.c.l.b16 %v2764
      %v2797 = vunpack.c.l.b16 %v2765
      %v2798 = vunpack.c.l.b16 %v2766
      %v2799 = vunpack.c.l.b16 %v2767
      %v2800 = vunpack.c.l.b16 %v2768
      %v2801 = vunpack.c.l.b16 %v2769
      %v2802 = vpack.c.b16 %v2787, %v2786
      %v2803 = vpack.c.b16 %v2789, %v2788
      %v2804 = vpack.c.b16 %v2791, %v2790
      %v2805 = vpack.c.b16 %v2793, %v2792
      %v2806 = vpack.c.b16 %v2795, %v2794
      %v2807 = vpack.c.b16 %v2797, %v2796
      %v2808 = vpack.c.b16 %v2799, %v2798
      %v2809 = vpack.c.b16 %v2801, %v2800
      %2818 = vmatprep.subr.bf16.mxu0 0
      %2819 = vmatpush1.bf16.msra.mxu0 %v2802
      %2820 = vmatprep.subr.bf16.mxu0 0
      %2821 = vmatpush1.bf16.msra.mxu0 %v2803
      %2822 = vmatprep.subr.bf16.mxu0 0
      %2823 = vmatpush1.bf16.msra.mxu0 %v2804
      %2824 = vmatprep.subr.bf16.mxu0 0
      %2825 = vmatpush1.bf16.msra.mxu0 %v2805
      %2826 = vmatprep.subr.bf16.mxu0 0
      %2827 = vmatpush1.bf16.msra.mxu0 %v2806
      %2828 = vmatprep.subr.bf16.mxu0 0
      %2829 = vmatpush1.bf16.msra.mxu0 %v2807
      %2830 = vmatprep.subr.bf16.mxu0 0
      %2831 = vmatpush1.bf16.msra.mxu0 %v2808
      %2832 = vmatprep.subr.bf16.mxu0 0
      %2833 = vmatpush1.bf16.msra.mxu0 %v2809
      %2834 = vmatprep.subr.bf16.mxu0 0
      %2835 = vmatpush1.bf16.msra.mxu0 0
      %2836 = vmatprep.subr.bf16.mxu0 0
      %2837 = vmatpush1.bf16.msra.mxu0 0
      %2838 = vmatprep.subr.bf16.mxu0 0
      %2839 = vmatpush1.bf16.msra.mxu0 0
      %2840 = vmatprep.subr.bf16.mxu0 0
      %2841 = vmatpush1.bf16.msra.mxu0 0
      %2842 = vmatprep.subr.bf16.mxu0 0
      %2843 = vmatpush1.bf16.msra.mxu0 0
      %2844 = vmatprep.subr.bf16.mxu0 0
      %2845 = vmatpush1.bf16.msra.mxu0 0
      %2846 = vmatprep.subr.bf16.mxu0 0
      %2847 = vmatpush1.bf16.msra.mxu0 0
      %2848 = vmatprep.subr.bf16.mxu0 0
      %2849 = vmatpush1.bf16.msra.mxu0 0
      %2850 = vmatprep.mubr.bf16.mxu0 0
      %2851 = vmatmul.mubr.bf16.gmra.mrb[0].mxu0 %v2751
      %v2852 = vpop.f32.mrb[0].mxu0
      %v2853 = vadd.f32 0.0, %v2852
      %v2854 = vpop.f32.mrb[0].mxu0
      %v2855 = vpop.f32.mrb[0].mxu0
      %v2856 = vadd.f32 0.0, %v2855
      %v2857 = vpop.f32.mrb[0].mxu0
      %2858 = vmatprep.mubr.bf16.mxu0 0
      %2859 = vmatmul.mubr.bf16.gmra.mrb[0].mxu0 %v2752
      %v2860 = vpop.f32.mrb[0].mxu0
      %v2861 = vadd.f32 0.0, %v2860
      %v2862 = vpop.f32.mrb[0].mxu0
      %v2863 = vpop.f32.mrb[0].mxu0
      %v2864 = vadd.f32 0.0, %v2863
      %v2865 = vpop.f32.mrb[0].mxu0
      %2866 = vdwg.mxu0
      %v2883 = vunpack.c.l.b16 %v2735
      %v2884 = vunpack.c.l.b16 %v2736
      %v2885 = vunpack.c.l.b16 %v2737
      %v2886 = vunpack.c.l.b16 %v2738
      %v2887 = vunpack.c.l.b16 %v2739
      %v2888 = vunpack.c.l.b16 %v2740
      %v2889 = vunpack.c.l.b16 %v2741
      %v2890 = vunpack.c.l.b16 %v2742
      %v2891 = vunpack.c.l.b16 %v2743
      %v2892 = vunpack.c.l.b16 %v2744
      %v2893 = vunpack.c.l.b16 %v2745
      %v2894 = vunpack.c.l.b16 %v2746
      %v2895 = vunpack.c.l.b16 %v2747
      %v2896 = vunpack.c.l.b16 %v2748
      %v2897 = vunpack.c.l.b16 %v2749
      %v2898 = vunpack.c.l.b16 %v2750
      %v2899 = vpack.c.b16 %v2884, %v2883
      %v2900 = vpack.c.b16 %v2886, %v2885
      %v2901 = vpack.c.b16 %v2888, %v2887
      %v2902 = vpack.c.b16 %v2890, %v2889
      %v2903 = vpack.c.b16 %v2892, %v2891
      %v2904 = vpack.c.b16 %v2894, %v2893
      %v2905 = vpack.c.b16 %v2896, %v2895
      %v2906 = vpack.c.b16 %v2898, %v2897
      %2915 = vmatprep.subr.bf16.mxu0 0
      %2916 = vmatpush1.bf16.msra.mxu0 %v2899
      %2917 = vmatprep.subr.bf16.mxu0 0
      %2918 = vmatpush1.bf16.msra.mxu0 %v2900
      %2919 = vmatprep.subr.bf16.mxu0 0
      %2920 = vmatpush1.bf16.msra.mxu0 %v2901
      %2921 = vmatprep.subr.bf16.mxu0 0
      %2922 = vmatpush1.bf16.msra.mxu0 %v2902
      %2923 = vmatprep.subr.bf16.mxu0 0
      %2924 = vmatpush1.bf16.msra.mxu0 %v2903
      %2925 = vmatprep.subr.bf16.mxu0 0
      %2926 = vmatpush1.bf16.msra.mxu0 %v2904
      %2927 = vmatprep.subr.bf16.mxu0 0
      %2928 = vmatpush1.bf16.msra.mxu0 %v2905
      %2929 = vmatprep.subr.bf16.mxu0 0
      %2930 = vmatpush1.bf16.msra.mxu0 %v2906
      %2931 = vmatprep.subr.bf16.mxu0 0
      %2932 = vmatpush1.bf16.msra.mxu0 0
      %2933 = vmatprep.subr.bf16.mxu0 0
      %2934 = vmatpush1.bf16.msra.mxu0 0
      %2935 = vmatprep.subr.bf16.mxu0 0
      %2936 = vmatpush1.bf16.msra.mxu0 0
      %2937 = vmatprep.subr.bf16.mxu0 0
      %2938 = vmatpush1.bf16.msra.mxu0 0
      %2939 = vmatprep.subr.bf16.mxu0 0
      %2940 = vmatpush1.bf16.msra.mxu0 0
      %2941 = vmatprep.subr.bf16.mxu0 0
      %2942 = vmatpush1.bf16.msra.mxu0 0
      %2943 = vmatprep.subr.bf16.mxu0 0
      %2944 = vmatpush1.bf16.msra.mxu0 0
      %2945 = vmatprep.subr.bf16.mxu0 0
      %2946 = vmatpush1.bf16.msra.mxu0 0
      %2947 = vmatprep.mubr.bf16.mxu0 0
      %2948 = vmatmul.mubr.bf16.gmra.mrb[0].mxu0 %v2732
      %v2949 = vpop.f32.mrb[0].mxu0
      %v2950 = vadd.f32 %v2853, %v2949
      %v2951 = vpop.f32.mrb[0].mxu0
      %v2952 = vpop.f32.mrb[0].mxu0
      %v2953 = vadd.f32 %v2856, %v2952
      %v2954 = vpop.f32.mrb[0].mxu0
      %2955 = vmatprep.mubr.bf16.mxu0 0
      %2956 = vmatmul.mubr.bf16.gmra.mrb[0].mxu0 %v2733
      %v2957 = vpop.f32.mrb[0].mxu0
      %v2958 = vadd.f32 %v2861, %v2957
      %v2959 = vpop.f32.mrb[0].mxu0
      %v2960 = vpop.f32.mrb[0].mxu0
      %v2961 = vadd.f32 %v2864, %v2960
      %v2962 = vpop.f32.mrb[0].mxu0
      %2963 = vdwg.mxu0
      %v2964 = vld [vmem:[#allocation7 + $0x8] sm:$0xff]
      %v2965 = vld [vmem:[#allocation7 + $0x10] sm:$0xff]
      %s2966 = scalar_lea.vmem %s2, 704
      %v2967 = vld [vmem:[%s2966] sm:$0xf]
      %v2968 = vld [vmem:[%s2966 + $0x4] sm:$0xf]
      %v2969 = vld [vmem:[%s2966 + $0x8] sm:$0xf]
      %v2970 = vld [vmem:[%s2966 + $0xc] sm:$0xf]
      %v2971 = vld [vmem:[%s2966 + $0x10] sm:$0xf]
      %v2972 = vld [vmem:[%s2966 + $0x14] sm:$0xf]
      %v2973 = vld [vmem:[%s2966 + $0x18] sm:$0xf]
      %v2974 = vld [vmem:[%s2966 + $0x1c] sm:$0xf]
      %v2975 = vld [vmem:[%s2966 + $0x20] sm:$0xf]
      %v2976 = vld [vmem:[%s2966 + $0x24] sm:$0xf]
      %v2977 = vld [vmem:[%s2966 + $0x28] sm:$0xf]
      %v2978 = vld [vmem:[%s2966 + $0x2c] sm:$0xf]
      %v2979 = vld [vmem:[%s2966 + $0x30] sm:$0xf]
      %v2980 = vld [vmem:[%s2966 + $0x34] sm:$0xf]
      %v2981 = vld [vmem:[%s2966 + $0x38] sm:$0xf]
      %v2982 = vld [vmem:[%s2966 + $0x3c] sm:$0xf]
      %v2999 = vunpack.c.l.b16 %v2967
      %v3000 = vunpack.c.l.b16 %v2968
      %v3001 = vunpack.c.l.b16 %v2969
      %v3002 = vunpack.c.l.b16 %v2970
      %v3003 = vunpack.c.l.b16 %v2971
      %v3004 = vunpack.c.l.b16 %v2972
      %v3005 = vunpack.c.l.b16 %v2973
      %v3006 = vunpack.c.l.b16 %v2974
      %v3007 = vunpack.c.l.b16 %v2975
      %v3008 = vunpack.c.l.b16 %v2976
      %v3009 = vunpack.c.l.b16 %v2977
      %v3010 = vunpack.c.l.b16 %v2978
      %v3011 = vunpack.c.l.b16 %v2979
      %v3012 = vunpack.c.l.b16 %v2980
      %v3013 = vunpack.c.l.b16 %v2981
      %v3014 = vunpack.c.l.b16 %v2982
      %v3015 = vpack.c.b16 %v3000, %v2999
      %v3016 = vpack.c.b16 %v3002, %v3001
      %v3017 = vpack.c.b16 %v3004, %v3003
      %v3018 = vpack.c.b16 %v3006, %v3005
      %v3019 = vpack.c.b16 %v3008, %v3007
      %v3020 = vpack.c.b16 %v3010, %v3009
      %v3021 = vpack.c.b16 %v3012, %v3011
      %v3022 = vpack.c.b16 %v3014, %v3013
      %3031 = vmatprep.subr.bf16.mxu0 0
      %3032 = vmatpush1.bf16.msra.mxu0 %v3015
      %3033 = vmatprep.subr.bf16.mxu0 0
      %3034 = vmatpush1.bf16.msra.mxu0 %v3016
      %3035 = vmatprep.subr.bf16.mxu0 0
      %3036 = vmatpush1.bf16.msra.mxu0 %v3017
      %3037 = vmatprep.subr.bf16.mxu0 0
      %3038 = vmatpush1.bf16.msra.mxu0 %v3018
      %3039 = vmatprep.subr.bf16.mxu0 0
      %3040 = vmatpush1.bf16.msra.mxu0 %v3019
      %3041 = vmatprep.subr.bf16.mxu0 0
      %3042 = vmatpush1.bf16.msra.mxu0 %v3020
      %3043 = vmatprep.subr.bf16.mxu0 0
      %3044 = vmatpush1.bf16.msra.mxu0 %v3021
      %3045 = vmatprep.subr.bf16.mxu0 0
      %3046 = vmatpush1.bf16.msra.mxu0 %v3022
      %3047 = vmatprep.subr.bf16.mxu0 0
      %3048 = vmatpush1.bf16.msra.mxu0 0
      %3049 = vmatprep.subr.bf16.mxu0 0
      %3050 = vmatpush1.bf16.msra.mxu0 0
      %3051 = vmatprep.subr.bf16.mxu0 0
      %3052 = vmatpush1.bf16.msra.mxu0 0
      %3053 = vmatprep.subr.bf16.mxu0 0
      %3054 = vmatpush1.bf16.msra.mxu0 0
      %3055 = vmatprep.subr.bf16.mxu0 0
      %3056 = vmatpush1.bf16.msra.mxu0 0
      %3057 = vmatprep.subr.bf16.mxu0 0
      %3058 = vmatpush1.bf16.msra.mxu0 0
      %3059 = vmatprep.subr.bf16.mxu0 0
      %3060 = vmatpush1.bf16.msra.mxu0 0
      %3061 = vmatprep.subr.bf16.mxu0 0
      %3062 = vmatpush1.bf16.msra.mxu0 0
      %3063 = vmatprep.mubr.bf16.mxu0 0
      %3064 = vmatmul.mubr.bf16.gmra.mrb[0].mxu0 %v2964
      %v3065 = vpop.f32.mrb[0].mxu0
      %v3066 = vadd.f32 0.0, %v3065
      %v3067 = vpop.f32.mrb[0].mxu0
      %v3068 = vpop.f32.mrb[0].mxu0
      %v3069 = vadd.f32 0.0, %v3068
      %v3070 = vpop.f32.mrb[0].mxu0
      %3071 = vmatprep.mubr.bf16.mxu0 0
      %3072 = vmatmul.mubr.bf16.gmra.mrb[0].mxu0 %v2965
      %v3073 = vpop.f32.mrb[0].mxu0
      %v3074 = vadd.f32 0.0, %v3073
      %v3075 = vpop.f32.mrb[0].mxu0
      %v3076 = vpop.f32.mrb[0].mxu0
      %v3077 = vadd.f32 0.0, %v3076
      %v3078 = vpop.f32.mrb[0].mxu0
      %3079 = vdwg.mxu0
      %v3080 = vadd.f32 %v2950, %v3066
      %v3081 = vadd.f32 %v2953, %v3069
      %v3082 = vadd.f32 %v2958, %v3074
      %v3083 = vadd.f32 %v2961, %v3077
      %v3084 = vld [vmem:[%s3 + $0x3] sm:$0x1]
      %v3085 = vlaneseq
      %v3086 = vshrl.u32 %v3085, 7
      %v3087 = vsub.s32 0, %v3086
      %v3088 = vrot.slane %v3084, %v3087
      %v3089 = vadd.f32 %v3080, %v3088
      %v3090 = vadd.f32 %v3081, %v3088
      %v3091 = vadd.f32 %v3082, %v3088
      %v3092 = vadd.f32 %v3083, %v3088
      %v3093 = vmax.f32 %v3089, 0.0
      %v3094 = vmax.f32 %v3090, 0.0
      %v3095 = vmax.f32 %v3091, 0.0
      %v3096 = vmax.f32 %v3092, 0.0
      %v3097 = vadd.f32 %v3093, %v3095
      %v3098 = vadd.f32 %v3094, %v3096
      %v3099 = vpack.c.bf16 %v3098, %v3097
      %s3100 = scalar_lea.vmem %s4, 128
      %v3101 = vld [vmem:[%s3100] sm:$0xf]
      %v3102 = vld [vmem:[%s3100 + $0x4] sm:$0xf]
      %v3103 = vld [vmem:[%s3100 + $0x8] sm:$0xf]
      %v3104 = vld [vmem:[%s3100 + $0xc] sm:$0xf]
      %v3105 = vld [vmem:[%s3100 + $0x10] sm:$0xf]
      %v3106 = vld [vmem:[%s3100 + $0x14] sm:$0xf]
      %v3107 = vld [vmem:[%s3100 + $0x18] sm:$0xf]
      %v3108 = vld [vmem:[%s3100 + $0x1c] sm:$0xf]
      %v3109 = vld [vmem:[%s3100 + $0x20] sm:$0xf]
      %v3110 = vld [vmem:[%s3100 + $0x24] sm:$0xf]
      %v3111 = vld [vmem:[%s3100 + $0x28] sm:$0xf]
      %v3112 = vld [vmem:[%s3100 + $0x2c] sm:$0xf]
      %v3113 = vld [vmem:[%s3100 + $0x30] sm:$0xf]
      %v3114 = vld [vmem:[%s3100 + $0x34] sm:$0xf]
      %v3115 = vld [vmem:[%s3100 + $0x38] sm:$0xf]
      %v3116 = vld [vmem:[%s3100 + $0x3c] sm:$0xf]
      %v3133 = vunpack.c.l.b16 %v3101
      %v3134 = vunpack.c.l.b16 %v3102
      %v3135 = vunpack.c.l.b16 %v3103
      %v3136 = vunpack.c.l.b16 %v3104
      %v3137 = vunpack.c.l.b16 %v3105
      %v3138 = vunpack.c.l.b16 %v3106
      %v3139 = vunpack.c.l.b16 %v3107
      %v3140 = vunpack.c.l.b16 %v3108
      %v3141 = vunpack.c.l.b16 %v3109
      %v3142 = vunpack.c.l.b16 %v3110
      %v3143 = vunpack.c.l.b16 %v3111
      %v3144 = vunpack.c.l.b16 %v3112
      %v3145 = vunpack.c.l.b16 %v3113
      %v3146 = vunpack.c.l.b16 %v3114
      %v3147 = vunpack.c.l.b16 %v3115
      %v3148 = vunpack.c.l.b16 %v3116
      %v3149 = vpack.c.b16 %v3134, %v3133
      %v3150 = vpack.c.b16 %v3136, %v3135
      %v3151 = vpack.c.b16 %v3138, %v3137
      %v3152 = vpack.c.b16 %v3140, %v3139
      %v3153 = vpack.c.b16 %v3142, %v3141
      %v3154 = vpack.c.b16 %v3144, %v3143
      %v3155 = vpack.c.b16 %v3146, %v3145
      %v3156 = vpack.c.b16 %v3148, %v3147
      %3165 = vmatprep.subr.bf16.mxu0 0
      %3166 = vmatpush1.bf16.msra.mxu0 %v3149
      %3167 = vmatprep.subr.bf16.mxu0 0
      %3168 = vmatpush1.bf16.msra.mxu0 %v3150
      %3169 = vmatprep.subr.bf16.mxu0 0
      %3170 = vmatpush1.bf16.msra.mxu0 %v3151
      %3171 = vmatprep.subr.bf16.mxu0 0
      %3172 = vmatpush1.bf16.msra.mxu0 %v3152
      %3173 = vmatprep.subr.bf16.mxu0 0
      %3174 = vmatpush1.bf16.msra.mxu0 %v3153
      %3175 = vmatprep.subr.bf16.mxu0 0
      %3176 = vmatpush1.bf16.msra.mxu0 %v3154
      %3177 = vmatprep.subr.bf16.mxu0 0
      %3178 = vmatpush1.bf16.msra.mxu0 %v3155
      %3179 = vmatprep.subr.bf16.mxu0 0
      %3180 = vmatpush1.bf16.msra.mxu0 %v3156
      %3181 = vmatprep.subr.bf16.mxu0 0
      %3182 = vmatpush1.bf16.msra.mxu0 0
      %3183 = vmatprep.subr.bf16.mxu0 0
      %3184 = vmatpush1.bf16.msra.mxu0 0
      %3185 = vmatprep.subr.bf16.mxu0 0
      %3186 = vmatpush1.bf16.msra.mxu0 0
      %3187 = vmatprep.subr.bf16.mxu0 0
      %3188 = vmatpush1.bf16.msra.mxu0 0
      %3189 = vmatprep.subr.bf16.mxu0 0
      %3190 = vmatpush1.bf16.msra.mxu0 0
      %3191 = vmatprep.subr.bf16.mxu0 0
      %3192 = vmatpush1.bf16.msra.mxu0 0
      %3193 = vmatprep.subr.bf16.mxu0 0
      %3194 = vmatpush1.bf16.msra.mxu0 0
      %3195 = vmatprep.subr.bf16.mxu0 0
      %3196 = vmatpush1.bf16.msra.mxu0 0
      %3197 = vmatprep.mubr.bf16.mxu0 0
      %3198 = vmatmul.mubr.bf16.gmra.mrb[0].mxu0 %v3099
      %v3199 = vpop.f32.mrb[0].mxu0
      %v3200 = vadd.f32 0.0, %v3199
      %v3201 = vpop.f32.mrb[0].mxu0
      %v3202 = vpop.f32.mrb[0].mxu0
      %v3203 = vadd.f32 0.0, %v3202
      %v3204 = vpop.f32.mrb[0].mxu0
      %3205 = vdwg.mxu0
      %v3206 = vadd.f32 %v2721, %v3200
      %v3207 = vadd.f32 %v2722, %v3203
      %3208 = vst [vmem:[%s271] sm:$0xff] %v3206
      %3209 = vst [vmem:[%s271 + $0x8] sm:$0xff] %v3207
      %p3210 = scmp.lt.s32.totalorder %s17, 1
      %s3211 = scalar_select %p3210, %s17, 1
      %s3212 = smul.addr %s3211, 2
      %s3213 = smul.addr %s3212, 8
      %s3214 = scalar_lea.vmem %s6, %s3213
      // Predicated region
      $region45: #{model_forward.1} parent=43 // pred_check
        %p3215 = pneg %p171
      $region46: #{model_forward.1} parent=43 // pred_check_branch
        %3217 = sbr.rel (%p3215) target = $region48
      $region47: #{model_forward.1} parent=43 // pred_region
        _
      $region48: #{model_forward.1} parent=43 // pred_fallthru
        _
    $region44: #{model_forward.1} parent=5 // pred_fallthru
      _
    %p3218 = scmp.le.s32.totalorder 2, %s12
    // Predicated region
    $region49: #{model_forward.1} parent=5 // pred_check
      %p3219 = pneg %p3218
    $region50: #{model_forward.1} parent=5 // pred_check_branch
      %3221 = sbr.rel (%p3219) target = $region52
    $region51: #{model_forward.1} parent=5 // pred_region
      %s3222 = ssub.s32 %s12, 2
      // Predicated region
      $region53: #{model_forward.1} parent=51 // pred_check
        %p3223 = pneg %p177
      $region54: #{model_forward.1} parent=51 // pred_check_branch
        %3225 = sbr.rel (%p3223) target = $region56
      $region55: #{model_forward.1} parent=51 // pred_region
        %p3226 = scmp.lt.s32.totalorder %s18, 1
        %s3227 = scalar_select %p3226, %s18, 1
        %s3228 = smul.addr %s3227, 2
        %s3229 = smul.addr %s3228, 8
        %s3230 = scalar_lea.vmem %s6, %s3229
      $region56: #{model_forward.1} parent=51 // pred_fallthru
        _
    $region52: #{model_forward.1} parent=5 // pred_fallthru
      _
  $region6: #{model_forward.1} parent=0 // loop_footer
    %s16 = sadd.s32 1, %s12
  $region7: #{model_forward.1} parent=0 // loop_footer_branch
    %11 = sbr.rel target = $region3
  $region8: #{model_forward.1} parent=0 // loop_exit
    _

</llo_original>
